<compile_context>
chip_gen: v7x
topology: tpu7x:2x2x1
jax: 0.10.0
libtpu: 0.0.40
codegen_flags: <defaults>
</compile_context>

<pallas_src>
import functools

import jax
import jax.numpy as jnp
from jax import lax
from jax.experimental import pallas as pl
from jax.experimental.pallas import tpu as pltpu


# ----------------------------- math helpers ---------------------------------

def _mish_f32(y):
    # mish(y) = y * tanh(softplus(y)) = y * u / (u + 2),  u = t*(t+2), t = e^y.
    # One EUP exp + one approximate EUP reciprocal (cheaper than exp+log1p+tanh).
    t = jnp.exp(jnp.minimum(y, 20.0))
    u = t * (t + 2.0)
    m = y * u * pl.reciprocal(u + 2.0, approx=True)
    return jnp.where(y > 20.0, y, m)        # mish(y) ~= y for large y


def _fold_bn(w_taps, b, gamma, beta, mean, var, eps=1e-5):
    """Fold conv bias + eval-mode BatchNorm into the weights / a single shift.

    w_taps: (k*k, Cin, Cout) f32.  Returns (scaled weights, (1, Cout) shift).
    """
    scale = gamma / jnp.sqrt(var + eps)                  # (Cout,)
    shift = (b - mean) * scale + beta                    # (Cout,)
    return w_taps * scale, shift.reshape(1, -1)


# ----------------------------- Pallas kernel ---------------------------------

def _conv_stage_kernel(x_ref, w_ref, shift_ref, *rest, k, Ho, Wo):
    """Fused stride-1 kxk conv (input pre-padded) + folded-BN + Mish
    (+ optional residual add).  The k*k tap reduction is an unrolled loop of
    MXU matmuls accumulating in f32; the epilogue runs in f32 on the VPU/EUP."""
    if len(rest) == 2:
        res_ref, o_ref = rest
    else:
        (o_ref,) = rest

    nb = x_ref.shape[0]
    cin = x_ref.shape[3]
    cout = w_ref.shape[2]
    rows = nb * Ho * Wo

    xv = x_ref[...]                                       # (nb, Hp, Wp, Cin)
    acc = jnp.zeros((rows, cout), jnp.float32)
    for kh in range(k):                                   # unrolled tap loop
        for kw in range(k):
            win = xv[:, kh:kh + Ho, kw:kw + Wo, :]        # static offsets only
            lhs = win.reshape(rows, cin)
            acc = acc + jnp.dot(lhs, w_ref[kh * k + kw],
                                preferred_element_type=jnp.float32)

    out = _mish_f32(acc + shift_ref[...])                 # f32 epilogue
    if len(rest) == 2:
        out = out + res_ref[...].astype(jnp.float32)
    o_ref[...] = out.astype(o_ref.dtype)


def _conv_stage(x_pad, w_taps, shift, residual=None, *, k, Ho, Wo, nb,
                out_dtype=jnp.float32):
    """One fused ConvBlock stage as a pallas_call.

    x_pad   : (N, Ho+k-1, Wo+k-1, Cin) NHWC, spatially pre-padded, MXU dtype.
    w_taps  : (k*k, Cin, Cout)          BN-folded weights, MXU dtype.
    shift   : (1, Cout)                 f32 per-channel shift.
    residual: optional (N*Ho*Wo, Cout)  f32, added after Mish.
    Returns : (N*Ho*Wo, Cout) in out_dtype, rows ordered (n, ho, wo).
    """
    N, Hp, Wp, cin = x_pad.shape
    kk, cin2, cout = w_taps.shape
    assert kk == k * k and cin2 == cin
    assert Hp == Ho + k - 1 and Wp == Wo + k - 1
    assert N % nb == 0
    grid = (N // nb,)
    rows_blk = nb * Ho * Wo
    rows = N * Ho * Wo

    in_specs = [
        pl.BlockSpec((nb, Hp, Wp, cin), lambda i: (i, 0, 0, 0)),  # input tile
        pl.BlockSpec((kk, cin, cout), lambda i: (0, 0, 0)),       # weights (resident)
        pl.BlockSpec((1, cout), lambda i: (0, 0)),                # folded shift
    ]
    args = [x_pad, w_taps, shift]
    if residual is not None:
        in_specs.append(pl.BlockSpec((rows_blk, cout), lambda i: (i, 0)))
        args.append(residual)

    itemsize = jnp.dtype(x_pad.dtype).itemsize
    cost = pl.CostEstimate(
        flops=int(2 * rows * kk * cin * cout),
        transcendentals=int(2 * rows * cout),             # exp + approx recip
        bytes_accessed=int(x_pad.size * itemsize
                           + w_taps.size * itemsize
                           + rows * cout * jnp.dtype(out_dtype).itemsize
                           + (rows * cout * 4 if residual is not None else 0)),
    )

    # NOTE: for very large channel counts, additionally block Cout with a
    # second ("parallel") grid axis so the resident weight slab stays small
    # on v7x's 64 MiB VMEM.  Not needed at these sizes.
    return pl.pallas_call(
        functools.partial(_conv_stage_kernel, k=k, Ho=Ho, Wo=Wo),
        out_shape=jax.ShapeDtypeStruct((rows, cout), out_dtype),
        grid=grid,
        in_specs=in_specs,
        out_specs=pl.BlockSpec((rows_blk, cout), lambda i: (i, 0)),
        compiler_params=pltpu.CompilerParams(
            dimension_semantics=("parallel",),            # megacore on v7x
            vmem_limit_bytes=48 * 1024 * 1024),           # v5e default is 16 MiB
        cost_estimate=cost,
    )(*args)


# --------------------------- batch-tile selection ----------------------------

def _pick_batch_tile(N, Ho, Wo, target_rows=1024):
    """Largest divisor of N with nb*Ho*Wo rows within a VMEM/MXU-friendly
    budget; keep >= 2 grid steps when possible so v7x can use both cores."""
    divisors = [d for d in range(1, N + 1) if N % d == 0]
    fit = [d for d in divisors if d * Ho * Wo <= max(target_rows, Ho * Wo)]
    nb = max(fit)
    if N // nb < 2:
        smaller = [d for d in fit if N // d >= 2]
        if smaller:
            nb = max(smaller)
    return nb


# ------------------------- ResDownConvBlock forward --------------------------

def res_down_conv_block(x_nchw, p, *, compute_dtype=jnp.bfloat16, nb=None):
    """Pallas implementation of ResDownConvBlock.forward (inference).
    Input/output are NCHW (PyTorch convention)."""
    x = jnp.transpose(x_nchw, (0, 2, 3, 1))               # -> NHWC
    N, H, W, c1 = x.shape
    Ho, Wo = H // 2, W // 2
    c2 = p["w2"].shape[-1]
    cd = compute_dtype
    if nb is None:
        nb = _pick_batch_tile(N, Ho, Wo)

    # space-to-depth(2): channel index = (dy*2 + dx)*c1 + ci.
    xs = (x.reshape(N, Ho, 2, Wo, 2, c1)
           .transpose(0, 1, 3, 2, 4, 5)
           .reshape(N, Ho, Wo, 4 * c1))

    # --- shortcut: AvgPool2d(2) -> ConvBlock(k=1)  ==  1x1 conv on xs (w/4) ---
    ws_eff = jnp.tile(p["ws"].reshape(c1, c2), (4, 1)) / 4.0       # (4*c1, c2)
    ws_taps, shift_s = _fold_bn(ws_eff.reshape(1, 4 * c1, c2),
                                p["bs"], p["gs"], p["bs_bn"], p["ms"], p["vs"])

    # --- main[0]: ConvBlock(c1, c2, k=4, s=2, pad=1) == 3x3/s1/pad1 on xs ----
    # Original tap kh reads row 2*ho + kh - 1 = 2*(ho + gh - 1) + dy with
    #   kh -> (gh, dy): 0->(0,1), 1->(1,0), 2->(1,1), 3->(2,0)  (same for kw).
    tapmap = ((0, 1), (1, 0), (1, 1), (2, 0))
    w1_eq = jnp.zeros((3, 3, 4 * c1, c2), jnp.float32)
    for kh in range(4):
        gh, dy = tapmap[kh]
        for kw in range(4):
            gw, dx = tapmap[kw]
            c0 = (dy * 2 + dx) * c1
            w1_eq = w1_eq.at[gh, gw, c0:c0 + c1, :].set(p["w1"][kh, kw])
    w1_taps, shift_1 = _fold_bn(w1_eq.reshape(9, 4 * c1, c2),
                                p["b1"], p["g1"], p["b1_bn"], p["m1"], p["v1"])

    # --- main[1]: ConvBlock(c2, c2, k=3, s=1, pad=1) --------------------------
    w2_taps, shift_2 = _fold_bn(p["w2"].reshape(9, c2, c2),
                                p["b2"], p["g2"], p["b2_bn"], p["m2"], p["v2"])

    xs_c = xs.astype(cd)
    xs_pad_c = jnp.pad(xs_c, ((0, 0), (1, 1), (1, 1), (0, 0)))

    short = _conv_stage(xs_c, ws_taps.astype(cd), shift_s,
                        k=1, Ho=Ho, Wo=Wo, nb=nb, out_dtype=jnp.float32)
    out1 = _conv_stage(xs_pad_c, w1_taps.astype(cd), shift_1,
                       k=3, Ho=Ho, Wo=Wo, nb=nb, out_dtype=cd)
    out1_pad = jnp.pad(out1.reshape(N, Ho, Wo, c2),
                       ((0, 0), (1, 1), (1, 1), (0, 0)))
    out = _conv_stage(out1_pad, w2_taps.astype(cd), shift_2, residual=short,
                      k=3, Ho=Ho, Wo=Wo, nb=nb, out_dtype=jnp.float32)

    out = out.reshape(N, Ho, Wo, c2)
    return jnp.transpose(out, (0, 3, 1, 2))               # -> NCHW


# ------------------------------ pure-JAX reference ---------------------------

def _mish_ref(y):
    sp = jnp.where(y > 20.0, y, jnp.log1p(jnp.exp(jnp.minimum(y, 20.0))))
    return y * jnp.tanh(sp)


def _conv_block_ref(x, w, b, gamma, beta, mean, var, s, pad, eps=1e-5):
    scale = gamma / jnp.sqrt(var + eps)
    shift = beta - mean * scale
    y = lax.conv_general_dilated(
        x, w, (s, s), [(pad, pad), (pad, pad)],
        dimension_numbers=("NHWC", "HWIO", "NHWC"),
        precision=lax.Precision.HIGHEST)
    y = y + b.reshape(1, 1, 1, -1)
    y = y * scale.reshape(1, 1, 1, -1) + shift.reshape(1, 1, 1, -1)
    return _mish_ref(y)


def res_down_conv_block_ref(x_nchw, p):
    x = jnp.transpose(x_nchw, (0, 2, 3, 1))
    m = _conv_block_ref(x, p["w1"], p["b1"], p["g1"], p["b1_bn"],
                        p["m1"], p["v1"], 2, 1)
    m = _conv_block_ref(m, p["w2"], p["b2"], p["g2"], p["b2_bn"],
                        p["m2"], p["v2"], 1, 1)
    N, H, W, C = x.shape
    s = x.reshape(N, H // 2, 2, W // 2, 2, C).mean(axis=(2, 4))
    s = _conv_block_ref(s, p["ws"], p["bs"], p["gs"], p["bs_bn"],
                        p["ms"], p["vs"], 1, 0)
    return jnp.transpose(m + s, (0, 3, 1, 2))


# --------------------------------- main --------------------------------------

def make_params(key, nc1, nc2):
    ks = jax.random.split(key, 16)
    it = iter(ks)
    nrm = lambda shape, s=0.1: s * jax.random.normal(next(it), shape, jnp.float32)
    params = {
        # conv weights in HWIO layout
        "w1": nrm((4, 4, nc1, nc2)), "b1": nrm((nc2,)),
        "g1": 1.0 + nrm((nc2,)), "b1_bn": nrm((nc2,)),
        "m1": nrm((nc2,)), "v1": 1.0 + jnp.abs(nrm((nc2,))),

        "w2": nrm((3, 3, nc2, nc2)), "b2": nrm((nc2,)),
        "g2": 1.0 + nrm((nc2,)), "b2_bn": nrm((nc2,)),
        "m2": nrm((nc2,)), "v2": 1.0 + jnp.abs(nrm((nc2,))),

        "ws": nrm((1, 1, nc1, nc2)), "bs": nrm((nc2,)),
        "gs": 1.0 + nrm((nc2,)), "bs_bn": nrm((nc2,)),
    }
    params["ms"] = 0.0 * params["bs"]
    params["vs"] = 1.0 + 0.0 * params["bs"]
    return params


if __name__ == "__main__":
    key = jax.random.PRNGKey(0)
    k_x, k_p = jax.random.split(key)

    # Small demo shapes: NCHW input [2, 4, 16, 16].  nc2=128 keeps the Pallas
    # outputs and weight columns lane-dense (Cout is a multiple of 128).
    N, nc1, nc2, H, W = 2, 4, 128, 16, 16
    x = jax.random.normal(k_x, (N, nc1, H, W), jnp.float32)   # NCHW like PyTorch
    params = make_params(k_p, nc1, nc2)

    fwd = jax.jit(functools.partial(res_down_conv_block, p=params,
                                    compute_dtype=jnp.bfloat16))
    out = jax.block_until_ready(fwd(x))

    ref = res_down_conv_block_ref(x, params)
    assert out.shape == (N, nc2, H // 2, W // 2), out.shape

    max_err = float(jnp.max(jnp.abs(out - ref)))
    mean_err = float(jnp.mean(jnp.abs(out - ref)))
    # bf16 MXU operands + approx-reciprocal Mish vs. an exact f32 XLA reference:
    # expect ~1e-2 scale differences; structural bugs would be O(1).
    assert jnp.allclose(out, ref, atol=1e-1, rtol=1e-1), (max_err, mean_err)
    assert mean_err < 3e-2, (max_err, mean_err)

    print("KERNEL_OK")
</pallas_src>

<mosaic_0001>
module attributes {stable_mosaic.version = 11 : i64} {
  func.func @_conv_stage_kernel(%arg0: i32, %arg1: memref<1x8x8x16xbf16, #tpu.memory_space<vmem>>, %arg2: memref<1x16x128xbf16, #tpu.memory_space<vmem>>, %arg3: memref<1x128xf32, #tpu.memory_space<vmem>>, %arg4: memref<64x128xf32, #tpu.memory_space<vmem>>) attributes {dimension_semantics = [#tpu.dimension_semantics<parallel>], iteration_bounds = array<i64: 2>, scalar_prefetch = 0 : i64, scratch_operands = 0 : i64, tpu.core_type = #tpu.core_type<tc>, window_params = [{transform_indices = @transform_0, window_bounds = array<i64: 1, 8, 8, 16>}, {pipeline_mode = #tpu.pipeline_mode<synchronous>, transform_indices = @transform_1, window_bounds = array<i64: 1, 16, 128>}, {pipeline_mode = #tpu.pipeline_mode<synchronous>, transform_indices = @transform_2, window_bounds = array<i64: 1, 128>}, {transform_indices = @transform_3, window_bounds = array<i64: 64, 128>}]} {
    %c0 = arith.constant 0 : index
    %c0_0 = arith.constant 0 : index
    %c0_1 = arith.constant 0 : index
    %c0_2 = arith.constant 0 : index
    %0 = vector.load %arg1[%c0, %c0_0, %c0_1, %c0_2] : memref<1x8x8x16xbf16, #tpu.memory_space<vmem>>, vector<1x8x8x16xbf16>
    %cst = arith.constant 0.000000e+00 : f32
    %1 = vector.broadcast %cst : f32 to vector<64x128xf32>
    %2 = vector.shape_cast %0 : vector<1x8x8x16xbf16> to vector<64x16xbf16>
    %c0_3 = arith.constant 0 : index
    %c0_4 = arith.constant 0 : index
    %c0_5 = arith.constant 0 : index
    %3 = vector.load %arg2[%c0_3, %c0_4, %c0_5] : memref<1x16x128xbf16, #tpu.memory_space<vmem>>, vector<1x16x128xbf16>
    %4 = vector.shape_cast %3 : vector<1x16x128xbf16> to vector<16x128xbf16>
    %cst_6 = arith.constant dense<0.000000e+00> : vector<64x128xf32>
    %5 = tpu.matmul %2, %4, %cst_6 {dimension_numbers = #tpu.dot_dimension_numbers<[1], [0], [0], [1], [0, 0, 1, 1], [], []>} : vector<64x16xbf16>, vector<16x128xbf16>, vector<64x128xf32> -> vector<64x128xf32>
    %6 = arith.addf %1, %5 : vector<64x128xf32>
    %c0_7 = arith.constant 0 : index
    %c0_8 = arith.constant 0 : index
    %7 = vector.load %arg3[%c0_7, %c0_8] : memref<1x128xf32, #tpu.memory_space<vmem>>, vector<1x128xf32>
    %8 = vector.broadcast %7 : vector<1x128xf32> to vector<64x128xf32>
    %9 = arith.addf %6, %8 : vector<64x128xf32>
    %cst_9 = arith.constant 2.000000e+01 : f32
    %10 = vector.broadcast %cst_9 : f32 to vector<64x128xf32>
    %11 = arith.minimumf %9, %10 : vector<64x128xf32>
    %12 = math.exp %11 : vector<64x128xf32>
    %cst_10 = arith.constant 2.000000e+00 : f32
    %13 = vector.broadcast %cst_10 : f32 to vector<64x128xf32>
    %14 = arith.addf %12, %13 : vector<64x128xf32>
    %15 = arith.mulf %12, %14 : vector<64x128xf32>
    %16 = arith.mulf %9, %15 : vector<64x128xf32>
    %cst_11 = arith.constant 2.000000e+00 : f32
    %17 = vector.broadcast %cst_11 : f32 to vector<64x128xf32>
    %18 = arith.addf %15, %17 : vector<64x128xf32>
    %19 = tpu.reciprocal %18 {approx = true} : vector<64x128xf32> -> vector<64x128xf32>
    %20 = arith.mulf %16, %19 : vector<64x128xf32>
    %cst_12 = arith.constant 2.000000e+01 : f32
    %21 = vector.broadcast %cst_12 : f32 to vector<64x128xf32>
    %22 = arith.cmpf ogt, %9, %21 : vector<64x128xf32>
    %23 = arith.select %22, %9, %20 : vector<64x128xi1>, vector<64x128xf32>
    %c0_13 = arith.constant 0 : index
    %c0_14 = arith.constant 0 : index
    %24 = vector.load %arg4[%c0_13, %c0_14] : memref<64x128xf32, #tpu.memory_space<vmem>>, vector<64x128xf32>
    tpu.vector_store %arg4[%c0_13, %c0_14], %23 {strides = array<i32>} : memref<64x128xf32, #tpu.memory_space<vmem>>, vector<64x128xf32>,
    return
  }
  func.func @transform_0(%arg0: i32) -> (i32, i32, i32, i32) {
    %c0_i32 = arith.constant 0 : i32
    %c0_i32_0 = arith.constant 0 : i32
    %c0_i32_1 = arith.constant 0 : i32
    %c0_i32_2 = arith.constant 0 : i32
    return %arg0, %c0_i32, %c0_i32_0, %c0_i32_1 : i32, i32, i32, i32
  }
  func.func @transform_1(%arg0: i32) -> (i32, i32, i32) {
    %c0_i32 = arith.constant 0 : i32
    %c0_i32_0 = arith.constant 0 : i32
    %c0_i32_1 = arith.constant 0 : i32
    %c0_i32_2 = arith.constant 0 : i32
    return %c0_i32, %c0_i32_0, %c0_i32_1 : i32, i32, i32
  }
  func.func @transform_2(%arg0: i32) -> (i32, i32) {
    %c0_i32 = arith.constant 0 : i32
    %c0_i32_0 = arith.constant 0 : i32
    %c0_i32_1 = arith.constant 0 : i32
    return %c0_i32, %c0_i32_0 : i32, i32
  }
  func.func @transform_3(%arg0: i32) -> (i32, i32) {
    %c0_i32 = arith.constant 0 : i32
    %c0_i32_0 = arith.constant 0 : i32
    return %arg0, %c0_i32 : i32, i32
  }
}

module attributes {stable_mosaic.version = 11 : i64} {
  func.func @_conv_stage_kernel(%arg0: i32, %arg1: memref<1x10x10x16xbf16, #tpu.memory_space<vmem>>, %arg2: memref<9x16x128xbf16, #tpu.memory_space<vmem>>, %arg3: memref<1x128xf32, #tpu.memory_space<vmem>>, %arg4: memref<64x128xbf16, #tpu.memory_space<vmem>>) attributes {dimension_semantics = [#tpu.dimension_semantics<parallel>], iteration_bounds = array<i64: 2>, scalar_prefetch = 0 : i64, scratch_operands = 0 : i64, tpu.core_type = #tpu.core_type<tc>, window_params = [{transform_indices = @transform_0, window_bounds = array<i64: 1, 10, 10, 16>}, {pipeline_mode = #tpu.pipeline_mode<synchronous>, transform_indices = @transform_1, window_bounds = array<i64: 9, 16, 128>}, {pipeline_mode = #tpu.pipeline_mode<synchronous>, transform_indices = @transform_2, window_bounds = array<i64: 1, 128>}, {transform_indices = @transform_3, window_bounds = array<i64: 64, 128>}]} {
    %c0 = arith.constant 0 : index
    %c0_0 = arith.constant 0 : index
    %c0_1 = arith.constant 0 : index
    %c0_2 = arith.constant 0 : index
    %0 = vector.load %arg1[%c0, %c0_0, %c0_1, %c0_2] : memref<1x10x10x16xbf16, #tpu.memory_space<vmem>>, vector<1x10x10x16xbf16>
    %cst = arith.constant 0.000000e+00 : f32
    %1 = vector.broadcast %cst : f32 to vector<64x128xf32>
    %2 = vector.extract_strided_slice %0 {offsets = [0, 0, 0, 0], sizes = [1, 8, 8, 16], strides = [1, 1, 1, 1]} : vector<1x10x10x16xbf16> to vector<1x8x8x16xbf16>
    %3 = vector.shape_cast %2 : vector<1x8x8x16xbf16> to vector<64x16xbf16>
    %c0_3 = arith.constant 0 : index
    %c0_4 = arith.constant 0 : index
    %c0_5 = arith.constant 0 : index
    %4 = vector.load %arg2[%c0_3, %c0_4, %c0_5] : memref<9x16x128xbf16, #tpu.memory_space<vmem>>, vector<1x16x128xbf16>
    %5 = vector.shape_cast %4 : vector<1x16x128xbf16> to vector<16x128xbf16>
    %cst_6 = arith.constant dense<0.000000e+00> : vector<64x128xf32>
    %6 = tpu.matmul %3, %5, %cst_6 {dimension_numbers = #tpu.dot_dimension_numbers<[1], [0], [0], [1], [0, 0, 1, 1], [], []>} : vector<64x16xbf16>, vector<16x128xbf16>, vector<64x128xf32> -> vector<64x128xf32>
    %7 = arith.addf %1, %6 : vector<64x128xf32>
    %8 = vector.extract_strided_slice %0 {offsets = [0, 0, 1, 0], sizes = [1, 8, 8, 16], strides = [1, 1, 1, 1]} : vector<1x10x10x16xbf16> to vector<1x8x8x16xbf16>
    %9 = vector.shape_cast %8 : vector<1x8x8x16xbf16> to vector<64x16xbf16>
    %c1 = arith.constant 1 : index
    %c0_7 = arith.constant 0 : index
    %c0_8 = arith.constant 0 : index
    %10 = vector.load %arg2[%c1, %c0_7, %c0_8] : memref<9x16x128xbf16, #tpu.memory_space<vmem>>, vector<1x16x128xbf16>
    %11 = vector.shape_cast %10 : vector<1x16x128xbf16> to vector<16x128xbf16>
    %cst_9 = arith.constant dense<0.000000e+00> : vector<64x128xf32>
    %12 = tpu.matmul %9, %11, %cst_9 {dimension_numbers = #tpu.dot_dimension_numbers<[1], [0], [0], [1], [0, 0, 1, 1], [], []>} : vector<64x16xbf16>, vector<16x128xbf16>, vector<64x128xf32> -> vector<64x128xf32>
    %13 = arith.addf %7, %12 : vector<64x128xf32>
    %14 = vector.extract_strided_slice %0 {offsets = [0, 0, 2, 0], sizes = [1, 8, 8, 16], strides = [1, 1, 1, 1]} : vector<1x10x10x16xbf16> to vector<1x8x8x16xbf16>
    %15 = vector.shape_cast %14 : vector<1x8x8x16xbf16> to vector<64x16xbf16>
    %c2 = arith.constant 2 : index
    %c0_10 = arith.constant 0 : index
    %c0_11 = arith.constant 0 : index
    %16 = vector.load %arg2[%c2, %c0_10, %c0_11] : memref<9x16x128xbf16, #tpu.memory_space<vmem>>, vector<1x16x128xbf16>
    %17 = vector.shape_cast %16 : vector<1x16x128xbf16> to vector<16x128xbf16>
    %cst_12 = arith.constant dense<0.000000e+00> : vector<64x128xf32>
    %18 = tpu.matmul %15, %17, %cst_12 {dimension_numbers = #tpu.dot_dimension_numbers<[1], [0], [0], [1], [0, 0, 1, 1], [], []>} : vector<64x16xbf16>, vector<16x128xbf16>, vector<64x128xf32> -> vector<64x128xf32>
    %19 = arith.addf %13, %18 : vector<64x128xf32>
    %20 = vector.extract_strided_slice %0 {offsets = [0, 1, 0, 0], sizes = [1, 8, 8, 16], strides = [1, 1, 1, 1]} : vector<1x10x10x16xbf16> to vector<1x8x8x16xbf16>
    %21 = vector.shape_cast %20 : vector<1x8x8x16xbf16> to vector<64x16xbf16>
    %c3 = arith.constant 3 : index
    %c0_13 = arith.constant 0 : index
    %c0_14 = arith.constant 0 : index
    %22 = vector.load %arg2[%c3, %c0_13, %c0_14] : memref<9x16x128xbf16, #tpu.memory_space<vmem>>, vector<1x16x128xbf16>
    %23 = vector.shape_cast %22 : vector<1x16x128xbf16> to vector<16x128xbf16>
    %cst_15 = arith.constant dense<0.000000e+00> : vector<64x128xf32>
    %24 = tpu.matmul %21, %23, %cst_15 {dimension_numbers = #tpu.dot_dimension_numbers<[1], [0], [0], [1], [0, 0, 1, 1], [], []>} : vector<64x16xbf16>, vector<16x128xbf16>, vector<64x128xf32> -> vector<64x128xf32>
    %25 = arith.addf %19, %24 : vector<64x128xf32>
    %26 = vector.extract_strided_slice %0 {offsets = [0, 1, 1, 0], sizes = [1, 8, 8, 16], strides = [1, 1, 1, 1]} : vector<1x10x10x16xbf16> to vector<1x8x8x16xbf16>
    %27 = vector.shape_cast %26 : vector<1x8x8x16xbf16> to vector<64x16xbf16>
    %c4 = arith.constant 4 : index
    %c0_16 = arith.constant 0 : index
    %c0_17 = arith.constant 0 : index
    %28 = vector.load %arg2[%c4, %c0_16, %c0_17] : memref<9x16x128xbf16, #tpu.memory_space<vmem>>, vector<1x16x128xbf16>
    %29 = vector.shape_cast %28 : vector<1x16x128xbf16> to vector<16x128xbf16>
    %cst_18 = arith.constant dense<0.000000e+00> : vector<64x128xf32>
    %30 = tpu.matmul %27, %29, %cst_18 {dimension_numbers = #tpu.dot_dimension_numbers<[1], [0], [0], [1], [0, 0, 1, 1], [], []>} : vector<64x16xbf16>, vector<16x128xbf16>, vector<64x128xf32> -> vector<64x128xf32>
    %31 = arith.addf %25, %30 : vector<64x128xf32>
    %32 = vector.extract_strided_slice %0 {offsets = [0, 1, 2, 0], sizes = [1, 8, 8, 16], strides = [1, 1, 1, 1]} : vector<1x10x10x16xbf16> to vector<1x8x8x16xbf16>
    %33 = vector.shape_cast %32 : vector<1x8x8x16xbf16> to vector<64x16xbf16>
    %c5 = arith.constant 5 : index
    %c0_19 = arith.constant 0 : index
    %c0_20 = arith.constant 0 : index
    %34 = vector.load %arg2[%c5, %c0_19, %c0_20] : memref<9x16x128xbf16, #tpu.memory_space<vmem>>, vector<1x16x128xbf16>
    %35 = vector.shape_cast %34 : vector<1x16x128xbf16> to vector<16x128xbf16>
    %cst_21 = arith.constant dense<0.000000e+00> : vector<64x128xf32>
    %36 = tpu.matmul %33, %35, %cst_21 {dimension_numbers = #tpu.dot_dimension_numbers<[1], [0], [0], [1], [0, 0, 1, 1], [], []>} : vector<64x16xbf16>, vector<16x128xbf16>, vector<64x128xf32> -> vector<64x128xf32>
    %37 = arith.addf %31, %36 : vector<64x128xf32>
    %38 = vector.extract_strided_slice %0 {offsets = [0, 2, 0, 0], sizes = [1, 8, 8, 16], strides = [1, 1, 1, 1]} : vector<1x10x10x16xbf16> to vector<1x8x8x16xbf16>
    %39 = vector.shape_cast %38 : vector<1x8x8x16xbf16> to vector<64x16xbf16>
    %c6 = arith.constant 6 : index
    %c0_22 = arith.constant 0 : index
    %c0_23 = arith.constant 0 : index
    %40 = vector.load %arg2[%c6, %c0_22, %c0_23] : memref<9x16x128xbf16, #tpu.memory_space<vmem>>, vector<1x16x128xbf16>
    %41 = vector.shape_cast %40 : vector<1x16x128xbf16> to vector<16x128xbf16>
    %cst_24 = arith.constant dense<0.000000e+00> : vector<64x128xf32>
    %42 = tpu.matmul %39, %41, %cst_24 {dimension_numbers = #tpu.dot_dimension_numbers<[1], [0], [0], [1], [0, 0, 1, 1], [], []>} : vector<64x16xbf16>, vector<16x128xbf16>, vector<64x128xf32> -> vector<64x128xf32>
    %43 = arith.addf %37, %42 : vector<64x128xf32>
    %44 = vector.extract_strided_slice %0 {offsets = [0, 2, 1, 0], sizes = [1, 8, 8, 16], strides = [1, 1, 1, 1]} : vector<1x10x10x16xbf16> to vector<1x8x8x16xbf16>
    %45 = vector.shape_cast %44 : vector<1x8x8x16xbf16> to vector<64x16xbf16>
    %c7 = arith.constant 7 : index
    %c0_25 = arith.constant 0 : index
    %c0_26 = arith.constant 0 : index
    %46 = vector.load %arg2[%c7, %c0_25, %c0_26] : memref<9x16x128xbf16, #tpu.memory_space<vmem>>, vector<1x16x128xbf16>
    %47 = vector.shape_cast %46 : vector<1x16x128xbf16> to vector<16x128xbf16>
    %cst_27 = arith.constant dense<0.000000e+00> : vector<64x128xf32>
    %48 = tpu.matmul %45, %47, %cst_27 {dimension_numbers = #tpu.dot_dimension_numbers<[1], [0], [0], [1], [0, 0, 1, 1], [], []>} : vector<64x16xbf16>, vector<16x128xbf16>, vector<64x128xf32> -> vector<64x128xf32>
    %49 = arith.addf %43, %48 : vector<64x128xf32>
    %50 = vector.extract_strided_slice %0 {offsets = [0, 2, 2, 0], sizes = [1, 8, 8, 16], strides = [1, 1, 1, 1]} : vector<1x10x10x16xbf16> to vector<1x8x8x16xbf16>
    %51 = vector.shape_cast %50 : vector<1x8x8x16xbf16> to vector<64x16xbf16>
    %c8 = arith.constant 8 : index
    %c0_28 = arith.constant 0 : index
    %c0_29 = arith.constant 0 : index
    %52 = vector.load %arg2[%c8, %c0_28, %c0_29] : memref<9x16x128xbf16, #tpu.memory_space<vmem>>, vector<1x16x128xbf16>
    %53 = vector.shape_cast %52 : vector<1x16x128xbf16> to vector<16x128xbf16>
    %cst_30 = arith.constant dense<0.000000e+00> : vector<64x128xf32>
    %54 = tpu.matmul %51, %53, %cst_30 {dimension_numbers = #tpu.dot_dimension_numbers<[1], [0], [0], [1], [0, 0, 1, 1], [], []>} : vector<64x16xbf16>, vector<16x128xbf16>, vector<64x128xf32> -> vector<64x128xf32>
    %55 = arith.addf %49, %54 : vector<64x128xf32>
    %c0_31 = arith.constant 0 : index
    %c0_32 = arith.constant 0 : index
    %56 = vector.load %arg3[%c0_31, %c0_32] : memref<1x128xf32, #tpu.memory_space<vmem>>, vector<1x128xf32>
    %57 = vector.broadcast %56 : vector<1x128xf32> to vector<64x128xf32>
    %58 = arith.addf %55, %57 : vector<64x128xf32>
    %cst_33 = arith.constant 2.000000e+01 : f32
    %59 = vector.broadcast %cst_33 : f32 to vector<64x128xf32>
    %60 = arith.minimumf %58, %59 : vector<64x128xf32>
    %61 = math.exp %60 : vector<64x128xf32>
    %cst_34 = arith.constant 2.000000e+00 : f32
    %62 = vector.broadcast %cst_34 : f32 to vector<64x128xf32>
    %63 = arith.addf %61, %62 : vector<64x128xf32>
    %64 = arith.mulf %61, %63 : vector<64x128xf32>
    %65 = arith.mulf %58, %64 : vector<64x128xf32>
    %cst_35 = arith.constant 2.000000e+00 : f32
    %66 = vector.broadcast %cst_35 : f32 to vector<64x128xf32>
    %67 = arith.addf %64, %66 : vector<64x128xf32>
    %68 = tpu.reciprocal %67 {approx = true} : vector<64x128xf32> -> vector<64x128xf32>
    %69 = arith.mulf %65, %68 : vector<64x128xf32>
    %cst_36 = arith.constant 2.000000e+01 : f32
    %70 = vector.broadcast %cst_36 : f32 to vector<64x128xf32>
    %71 = arith.cmpf ogt, %58, %70 : vector<64x128xf32>
    %72 = arith.select %71, %58, %69 : vector<64x128xi1>, vector<64x128xf32>
    %73 = arith.truncf %72 : vector<64x128xf32> to vector<64x128xbf16>
    %c0_37 = arith.constant 0 : index
    %c0_38 = arith.constant 0 : index
    %74 = vector.load %arg4[%c0_37, %c0_38] : memref<64x128xbf16, #tpu.memory_space<vmem>>, vector<64x128xbf16>
    tpu.vector_store %arg4[%c0_37, %c0_38], %73 {strides = array<i32>} : memref<64x128xbf16, #tpu.memory_space<vmem>>, vector<64x128xbf16>,
    return
  }
  func.func @transform_0(%arg0: i32) -> (i32, i32, i32, i32) {
    %c0_i32 = arith.constant 0 : i32
    %c0_i32_0 = arith.constant 0 : i32
    %c0_i32_1 = arith.constant 0 : i32
    %c0_i32_2 = arith.constant 0 : i32
    return %arg0, %c0_i32, %c0_i32_0, %c0_i32_1 : i32, i32, i32, i32
  }
  func.func @transform_1(%arg0: i32) -> (i32, i32, i32) {
    %c0_i32 = arith.constant 0 : i32
    %c0_i32_0 = arith.constant 0 : i32
    %c0_i32_1 = arith.constant 0 : i32
    %c0_i32_2 = arith.constant 0 : i32
    return %c0_i32, %c0_i32_0, %c0_i32_1 : i32, i32, i32
  }
  func.func @transform_2(%arg0: i32) -> (i32, i32) {
    %c0_i32 = arith.constant 0 : i32
    %c0_i32_0 = arith.constant 0 : i32
    %c0_i32_1 = arith.constant 0 : i32
    return %c0_i32, %c0_i32_0 : i32, i32
  }
  func.func @transform_3(%arg0: i32) -> (i32, i32) {
    %c0_i32 = arith.constant 0 : i32
    %c0_i32_0 = arith.constant 0 : i32
    return %arg0, %c0_i32 : i32, i32
  }
}

module attributes {stable_mosaic.version = 11 : i64} {
  func.func @_conv_stage_kernel(%arg0: i32, %arg1: memref<1x10x10x128xbf16, #tpu.memory_space<vmem>>, %arg2: memref<9x128x128xbf16, #tpu.memory_space<vmem>>, %arg3: memref<1x128xf32, #tpu.memory_space<vmem>>, %arg4: memref<64x128xf32, #tpu.memory_space<vmem>>, %arg5: memref<64x128xf32, #tpu.memory_space<vmem>>) attributes {dimension_semantics = [#tpu.dimension_semantics<parallel>], iteration_bounds = array<i64: 2>, scalar_prefetch = 0 : i64, scratch_operands = 0 : i64, tpu.core_type = #tpu.core_type<tc>, window_params = [{transform_indices = @transform_0, window_bounds = array<i64: 1, 10, 10, 128>}, {pipeline_mode = #tpu.pipeline_mode<synchronous>, transform_indices = @transform_1, window_bounds = array<i64: 9, 128, 128>}, {pipeline_mode = #tpu.pipeline_mode<synchronous>, transform_indices = @transform_2, window_bounds = array<i64: 1, 128>}, {transform_indices = @transform_3, window_bounds = array<i64: 64, 128>}, {transform_indices = @transform_4, window_bounds = array<i64: 64, 128>}]} {
    %c0 = arith.constant 0 : index
    %c0_0 = arith.constant 0 : index
    %c0_1 = arith.constant 0 : index
    %c0_2 = arith.constant 0 : index
    %0 = vector.load %arg1[%c0, %c0_0, %c0_1, %c0_2] : memref<1x10x10x128xbf16, #tpu.memory_space<vmem>>, vector<1x10x10x128xbf16>
    %cst = arith.constant 0.000000e+00 : f32
    %1 = vector.broadcast %cst : f32 to vector<64x128xf32>
    %2 = vector.extract_strided_slice %0 {offsets = [0, 0, 0, 0], sizes = [1, 8, 8, 128], strides = [1, 1, 1, 1]} : vector<1x10x10x128xbf16> to vector<1x8x8x128xbf16>
    %3 = vector.shape_cast %2 : vector<1x8x8x128xbf16> to vector<64x128xbf16>
    %c0_3 = arith.constant 0 : index
    %c0_4 = arith.constant 0 : index
    %c0_5 = arith.constant 0 : index
    %4 = vector.load %arg2[%c0_3, %c0_4, %c0_5] : memref<9x128x128xbf16, #tpu.memory_space<vmem>>, vector<1x128x128xbf16>
    %5 = vector.shape_cast %4 : vector<1x128x128xbf16> to vector<128x128xbf16>
    %cst_6 = arith.constant dense<0.000000e+00> : vector<64x128xf32>
    %6 = tpu.matmul %3, %5, %cst_6 {dimension_numbers = #tpu.dot_dimension_numbers<[1], [0], [0], [1], [0, 0, 1, 1], [], []>} : vector<64x128xbf16>, vector<128x128xbf16>, vector<64x128xf32> -> vector<64x128xf32>
    %7 = arith.addf %1, %6 : vector<64x128xf32>
    %8 = vector.extract_strided_slice %0 {offsets = [0, 0, 1, 0], sizes = [1, 8, 8, 128], strides = [1, 1, 1, 1]} : vector<1x10x10x128xbf16> to vector<1x8x8x128xbf16>
    %9 = vector.shape_cast %8 : vector<1x8x8x128xbf16> to vector<64x128xbf16>
    %c1 = arith.constant 1 : index
    %c0_7 = arith.constant 0 : index
    %c0_8 = arith.constant 0 : index
    %10 = vector.load %arg2[%c1, %c0_7, %c0_8] : memref<9x128x128xbf16, #tpu.memory_space<vmem>>, vector<1x128x128xbf16>
    %11 = vector.shape_cast %10 : vector<1x128x128xbf16> to vector<128x128xbf16>
    %cst_9 = arith.constant dense<0.000000e+00> : vector<64x128xf32>
    %12 = tpu.matmul %9, %11, %cst_9 {dimension_numbers = #tpu.dot_dimension_numbers<[1], [0], [0], [1], [0, 0, 1, 1], [], []>} : vector<64x128xbf16>, vector<128x128xbf16>, vector<64x128xf32> -> vector<64x128xf32>
    %13 = arith.addf %7, %12 : vector<64x128xf32>
    %14 = vector.extract_strided_slice %0 {offsets = [0, 0, 2, 0], sizes = [1, 8, 8, 128], strides = [1, 1, 1, 1]} : vector<1x10x10x128xbf16> to vector<1x8x8x128xbf16>
    %15 = vector.shape_cast %14 : vector<1x8x8x128xbf16> to vector<64x128xbf16>
    %c2 = arith.constant 2 : index
    %c0_10 = arith.constant 0 : index
    %c0_11 = arith.constant 0 : index
    %16 = vector.load %arg2[%c2, %c0_10, %c0_11] : memref<9x128x128xbf16, #tpu.memory_space<vmem>>, vector<1x128x128xbf16>
    %17 = vector.shape_cast %16 : vector<1x128x128xbf16> to vector<128x128xbf16>
    %cst_12 = arith.constant dense<0.000000e+00> : vector<64x128xf32>
    %18 = tpu.matmul %15, %17, %cst_12 {dimension_numbers = #tpu.dot_dimension_numbers<[1], [0], [0], [1], [0, 0, 1, 1], [], []>} : vector<64x128xbf16>, vector<128x128xbf16>, vector<64x128xf32> -> vector<64x128xf32>
    %19 = arith.addf %13, %18 : vector<64x128xf32>
    %20 = vector.extract_strided_slice %0 {offsets = [0, 1, 0, 0], sizes = [1, 8, 8, 128], strides = [1, 1, 1, 1]} : vector<1x10x10x128xbf16> to vector<1x8x8x128xbf16>
    %21 = vector.shape_cast %20 : vector<1x8x8x128xbf16> to vector<64x128xbf16>
    %c3 = arith.constant 3 : index
    %c0_13 = arith.constant 0 : index
    %c0_14 = arith.constant 0 : index
    %22 = vector.load %arg2[%c3, %c0_13, %c0_14] : memref<9x128x128xbf16, #tpu.memory_space<vmem>>, vector<1x128x128xbf16>
    %23 = vector.shape_cast %22 : vector<1x128x128xbf16> to vector<128x128xbf16>
    %cst_15 = arith.constant dense<0.000000e+00> : vector<64x128xf32>
    %24 = tpu.matmul %21, %23, %cst_15 {dimension_numbers = #tpu.dot_dimension_numbers<[1], [0], [0], [1], [0, 0, 1, 1], [], []>} : vector<64x128xbf16>, vector<128x128xbf16>, vector<64x128xf32> -> vector<64x128xf32>
    %25 = arith.addf %19, %24 : vector<64x128xf32>
    %26 = vector.extract_strided_slice %0 {offsets = [0, 1, 1, 0], sizes = [1, 8, 8, 128], strides = [1, 1, 1, 1]} : vector<1x10x10x128xbf16> to vector<1x8x8x128xbf16>
    %27 = vector.shape_cast %26 : vector<1x8x8x128xbf16> to vector<64x128xbf16>
    %c4 = arith.constant 4 : index
    %c0_16 = arith.constant 0 : index
    %c0_17 = arith.constant 0 : index
    %28 = vector.load %arg2[%c4, %c0_16, %c0_17] : memref<9x128x128xbf16, #tpu.memory_space<vmem>>, vector<1x128x128xbf16>
    %29 = vector.shape_cast %28 : vector<1x128x128xbf16> to vector<128x128xbf16>
    %cst_18 = arith.constant dense<0.000000e+00> : vector<64x128xf32>
    %30 = tpu.matmul %27, %29, %cst_18 {dimension_numbers = #tpu.dot_dimension_numbers<[1], [0], [0], [1], [0, 0, 1, 1], [], []>} : vector<64x128xbf16>, vector<128x128xbf16>, vector<64x128xf32> -> vector<64x128xf32>
    %31 = arith.addf %25, %30 : vector<64x128xf32>
    %32 = vector.extract_strided_slice %0 {offsets = [0, 1, 2, 0], sizes = [1, 8, 8, 128], strides = [1, 1, 1, 1]} : vector<1x10x10x128xbf16> to vector<1x8x8x128xbf16>
    %33 = vector.shape_cast %32 : vector<1x8x8x128xbf16> to vector<64x128xbf16>
    %c5 = arith.constant 5 : index
    %c0_19 = arith.constant 0 : index
    %c0_20 = arith.constant 0 : index
    %34 = vector.load %arg2[%c5, %c0_19, %c0_20] : memref<9x128x128xbf16, #tpu.memory_space<vmem>>, vector<1x128x128xbf16>
    %35 = vector.shape_cast %34 : vector<1x128x128xbf16> to vector<128x128xbf16>
    %cst_21 = arith.constant dense<0.000000e+00> : vector<64x128xf32>
    %36 = tpu.matmul %33, %35, %cst_21 {dimension_numbers = #tpu.dot_dimension_numbers<[1], [0], [0], [1], [0, 0, 1, 1], [], []>} : vector<64x128xbf16>, vector<128x128xbf16>, vector<64x128xf32> -> vector<64x128xf32>
    %37 = arith.addf %31, %36 : vector<64x128xf32>
    %38 = vector.extract_strided_slice %0 {offsets = [0, 2, 0, 0], sizes = [1, 8, 8, 128], strides = [1, 1, 1, 1]} : vector<1x10x10x128xbf16> to vector<1x8x8x128xbf16>
    %39 = vector.shape_cast %38 : vector<1x8x8x128xbf16> to vector<64x128xbf16>
    %c6 = arith.constant 6 : index
    %c0_22 = arith.constant 0 : index
    %c0_23 = arith.constant 0 : index
    %40 = vector.load %arg2[%c6, %c0_22, %c0_23] : memref<9x128x128xbf16, #tpu.memory_space<vmem>>, vector<1x128x128xbf16>
    %41 = vector.shape_cast %40 : vector<1x128x128xbf16> to vector<128x128xbf16>
    %cst_24 = arith.constant dense<0.000000e+00> : vector<64x128xf32>
    %42 = tpu.matmul %39, %41, %cst_24 {dimension_numbers = #tpu.dot_dimension_numbers<[1], [0], [0], [1], [0, 0, 1, 1], [], []>} : vector<64x128xbf16>, vector<128x128xbf16>, vector<64x128xf32> -> vector<64x128xf32>
    %43 = arith.addf %37, %42 : vector<64x128xf32>
    %44 = vector.extract_strided_slice %0 {offsets = [0, 2, 1, 0], sizes = [1, 8, 8, 128], strides = [1, 1, 1, 1]} : vector<1x10x10x128xbf16> to vector<1x8x8x128xbf16>
    %45 = vector.shape_cast %44 : vector<1x8x8x128xbf16> to vector<64x128xbf16>
    %c7 = arith.constant 7 : index
    %c0_25 = arith.constant 0 : index
    %c0_26 = arith.constant 0 : index
    %46 = vector.load %arg2[%c7, %c0_25, %c0_26] : memref<9x128x128xbf16, #tpu.memory_space<vmem>>, vector<1x128x128xbf16>
    %47 = vector.shape_cast %46 : vector<1x128x128xbf16> to vector<128x128xbf16>
    %cst_27 = arith.constant dense<0.000000e+00> : vector<64x128xf32>
    %48 = tpu.matmul %45, %47, %cst_27 {dimension_numbers = #tpu.dot_dimension_numbers<[1], [0], [0], [1], [0, 0, 1, 1], [], []>} : vector<64x128xbf16>, vector<128x128xbf16>, vector<64x128xf32> -> vector<64x128xf32>
    %49 = arith.addf %43, %48 : vector<64x128xf32>
    %50 = vector.extract_strided_slice %0 {offsets = [0, 2, 2, 0], sizes = [1, 8, 8, 128], strides = [1, 1, 1, 1]} : vector<1x10x10x128xbf16> to vector<1x8x8x128xbf16>
    %51 = vector.shape_cast %50 : vector<1x8x8x128xbf16> to vector<64x128xbf16>
    %c8 = arith.constant 8 : index
    %c0_28 = arith.constant 0 : index
    %c0_29 = arith.constant 0 : index
    %52 = vector.load %arg2[%c8, %c0_28, %c0_29] : memref<9x128x128xbf16, #tpu.memory_space<vmem>>, vector<1x128x128xbf16>
    %53 = vector.shape_cast %52 : vector<1x128x128xbf16> to vector<128x128xbf16>
    %cst_30 = arith.constant dense<0.000000e+00> : vector<64x128xf32>
    %54 = tpu.matmul %51, %53, %cst_30 {dimension_numbers = #tpu.dot_dimension_numbers<[1], [0], [0], [1], [0, 0, 1, 1], [], []>} : vector<64x128xbf16>, vector<128x128xbf16>, vector<64x128xf32> -> vector<64x128xf32>
    %55 = arith.addf %49, %54 : vector<64x128xf32>
    %c0_31 = arith.constant 0 : index
    %c0_32 = arith.constant 0 : index
    %56 = vector.load %arg3[%c0_31, %c0_32] : memref<1x128xf32, #tpu.memory_space<vmem>>, vector<1x128xf32>
    %57 = vector.broadcast %56 : vector<1x128xf32> to vector<64x128xf32>
    %58 = arith.addf %55, %57 : vector<64x128xf32>
    %cst_33 = arith.constant 2.000000e+01 : f32
    %59 = vector.broadcast %cst_33 : f32 to vector<64x128xf32>
    %60 = arith.minimumf %58, %59 : vector<64x128xf32>
    %61 = math.exp %60 : vector<64x128xf32>
    %cst_34 = arith.constant 2.000000e+00 : f32
    %62 = vector.broadcast %cst_34 : f32 to vector<64x128xf32>
    %63 = arith.addf %61, %62 : vector<64x128xf32>
    %64 = arith.mulf %61, %63 : vector<64x128xf32>
    %65 = arith.mulf %58, %64 : vector<64x128xf32>
    %cst_35 = arith.constant 2.000000e+00 : f32
    %66 = vector.broadcast %cst_35 : f32 to vector<64x128xf32>
    %67 = arith.addf %64, %66 : vector<64x128xf32>
    %68 = tpu.reciprocal %67 {approx = true} : vector<64x128xf32> -> vector<64x128xf32>
    %69 = arith.mulf %65, %68 : vector<64x128xf32>
    %cst_36 = arith.constant 2.000000e+01 : f32
    %70 = vector.broadcast %cst_36 : f32 to vector<64x128xf32>
    %71 = arith.cmpf ogt, %58, %70 : vector<64x128xf32>
    %72 = arith.select %71, %58, %69 : vector<64x128xi1>, vector<64x128xf32>
    %c0_37 = arith.constant 0 : index
    %c0_38 = arith.constant 0 : index
    %73 = vector.load %arg4[%c0_37, %c0_38] : memref<64x128xf32, #tpu.memory_space<vmem>>, vector<64x128xf32>
    %74 = arith.addf %72, %73 : vector<64x128xf32>
    %c0_39 = arith.constant 0 : index
    %c0_40 = arith.constant 0 : index
    %75 = vector.load %arg5[%c0_39, %c0_40] : memref<64x128xf32, #tpu.memory_space<vmem>>, vector<64x128xf32>
    tpu.vector_store %arg5[%c0_39, %c0_40], %74 {strides = array<i32>} : memref<64x128xf32, #tpu.memory_space<vmem>>, vector<64x128xf32>,
    return
  }
  func.func @transform_0(%arg0: i32) -> (i32, i32, i32, i32) {
    %c0_i32 = arith.constant 0 : i32
    %c0_i32_0 = arith.constant 0 : i32
    %c0_i32_1 = arith.constant 0 : i32
    %c0_i32_2 = arith.constant 0 : i32
    return %arg0, %c0_i32, %c0_i32_0, %c0_i32_1 : i32, i32, i32, i32
  }
  func.func @transform_1(%arg0: i32) -> (i32, i32, i32) {
    %c0_i32 = arith.constant 0 : i32
    %c0_i32_0 = arith.constant 0 : i32
    %c0_i32_1 = arith.constant 0 : i32
    %c0_i32_2 = arith.constant 0 : i32
    return %c0_i32, %c0_i32_0, %c0_i32_1 : i32, i32, i32
  }
  func.func @transform_2(%arg0: i32) -> (i32, i32) {
    %c0_i32 = arith.constant 0 : i32
    %c0_i32_0 = arith.constant 0 : i32
    %c0_i32_1 = arith.constant 0 : i32
    return %c0_i32, %c0_i32_0 : i32, i32
  }
  func.func @transform_3(%arg0: i32) -> (i32, i32) {
    %c0_i32 = arith.constant 0 : i32
    %c0_i32_0 = arith.constant 0 : i32
    return %arg0, %c0_i32 : i32, i32
  }
  func.func @transform_4(%arg0: i32) -> (i32, i32) {
    %c0_i32 = arith.constant 0 : i32
    %c0_i32_0 = arith.constant 0 : i32
    return %arg0, %c0_i32 : i32, i32
  }
}

</mosaic_0001>

<llo_original>
// kernel: res_down_conv_block.3
$region0: #{res_down_conv_block.3}
  #allocation0 [shape = 'u32[]', space=smem, size = 0x4, offset = 0x4, fixed_abs, tag = 'smem constant byte address 0x4 - core index']
  #allocation1 [shape = 'u32[144,128]{1,0:T(1,128)}', space=vmem, size = 0x12000, scoped, tag = 'internal scratch']
  %s0 = inlined_call_operand.vmem [shape: bf16[2,8,8,16], index: 0, kind: input, shape index: {}]
  %s1 = inlined_call_operand.vmem [shape: bf16[1,16,128], index: 1, kind: input, shape index: {}]
  %s2 = inlined_call_operand.vmem [shape: f32[1,128], index: 2, kind: input, shape index: {}]
  %s3 = inlined_call_operand.vmem [shape: f32[128,128], index: 3, kind: output, shape index: {}]
  %s4 = sld [smem:[#allocation0]]
  $region45: #{res_down_conv_block.3} parent=0
    _
  %s6 = ssub.s32 1, %s4
  %s7 = scalar_select 0, %s6, %s4
  loop: start=0, step=1, limit=4
  $region2: #{res_down_conv_block.3} parent=0 // loop_pre_header
    _
  $region3: #{res_down_conv_block.3} parent=0 // loop_header
    %s9 = sphi 0, %s13
    %p10 = scmp.ge.s32.totalorder %s9, 4
    %s19 = sphi 0, %s21
    %s22 = sphi 0, %s19
    %s23 = sphi 0, %s22
    %s39 = sphi 0, %s23
    %s43 = sphi 0, %s43
    %s45 = sphi 0, %s43
    %s46 = sphi 0, %s45
    %s60 = sphi 0, %s46
    %s64 = sphi 0, %s64
    %s66 = sphi 0, %s64
    %s67 = sphi 0, %s66
    %s81 = sphi 0, %s67
    %s87 = sphi 0, %s89
    %s90 = sphi 0, %s87
    %s91 = sphi 0, %s90
    %s107 = sphi 0, %s91
  $region4: #{res_down_conv_block.3} parent=0 // loop_header_branch
    %12 = sbr.rel (%p10) target = $region8
  $region5: #{res_down_conv_block.3} parent=0 // loop_body
    %s14 = ssub.s32 %s9, 1
    %s15 = ssub.s32 %s9, 2
    %s16 = sadd.s32 %s9, 1
    %s17 = ssub.s32 %s9, %s16
    %p18 = scmp.eq.s32.totalorder %s17, 0
    %s20 = sadd.s32 %s19, 1
    %s21 = scalar_select %p18, %s19, %s20
    %p24 = pneg %p18
    %p25 = scmp.eq.s32.totalorder %s9, 1
    %p26 = por %p24, %p25
    %p27 = scmp.ne.s32.totalorder %s19, %s22
    %p28 = scmp.eq.s32.totalorder %s9, 0
    %p29 = por %p27, %p28
    %p30 = scmp.ne.s32.totalorder %s19, %s22
    %p31 = scmp.eq.s32.totalorder %s14, 1
    %p32 = por %p30, %p31
    %p33 = scmp.ne.s32.totalorder %s22, %s23
    %p34 = scmp.eq.s32.totalorder %s14, 0
    %p35 = por %p33, %p34
    %p36 = scmp.ne.s32.totalorder %s22, %s23
    %p37 = scmp.eq.s32.totalorder %s15, 1
    %p38 = por %p36, %p37
    %p40 = scmp.ne.s32.totalorder %s23, %s39
    %p41 = scmp.eq.s32.totalorder %s15, 0
    %p42 = por %p40, %p41
    %s44 = sadd.s32 %s43, 1
    %p47 = scmp.eq.s32.totalorder %s9, 1
    %p48 = scmp.ne.s32.totalorder %s43, %s45
    %p49 = scmp.eq.s32.totalorder %s9, 0
    %p50 = por %p48, %p49
    %p51 = scmp.ne.s32.totalorder %s43, %s45
    %p52 = scmp.eq.s32.totalorder %s14, 1
    %p53 = por %p51, %p52
    %p54 = scmp.ne.s32.totalorder %s45, %s46
    %p55 = scmp.eq.s32.totalorder %s14, 0
    %p56 = por %p54, %p55
    %p57 = scmp.ne.s32.totalorder %s45, %s46
    %p58 = scmp.eq.s32.totalorder %s15, 1
    %p59 = por %p57, %p58
    %p61 = scmp.ne.s32.totalorder %s46, %s60
    %p62 = scmp.eq.s32.totalorder %s15, 0
    %p63 = por %p61, %p62
    %s65 = sadd.s32 %s64, 1
    %p68 = scmp.eq.s32.totalorder %s9, 1
    %p69 = scmp.ne.s32.totalorder %s64, %s66
    %p70 = scmp.eq.s32.totalorder %s9, 0
    %p71 = por %p69, %p70
    %p72 = scmp.ne.s32.totalorder %s64, %s66
    %p73 = scmp.eq.s32.totalorder %s14, 1
    %p74 = por %p72, %p73
    %p75 = scmp.ne.s32.totalorder %s66, %s67
    %p76 = scmp.eq.s32.totalorder %s14, 0
    %p77 = por %p75, %p76
    %p78 = scmp.ne.s32.totalorder %s66, %s67
    %p79 = scmp.eq.s32.totalorder %s15, 1
    %p80 = por %p78, %p79
    %p82 = scmp.ne.s32.totalorder %s67, %s81
    %p83 = scmp.eq.s32.totalorder %s15, 0
    %p84 = por %p82, %p83
    %s85 = ssub.s32 %s9, %s16
    %p86 = scmp.eq.s32.totalorder %s85, 0
    %s88 = sadd.s32 %s87, 1
    %s89 = scalar_select %p86, %s87, %s88
    %p92 = pneg %p86
    %p93 = scmp.eq.s32.totalorder %s9, 1
    %p94 = por %p92, %p93
    %p95 = scmp.ne.s32.totalorder %s87, %s90
    %p96 = scmp.eq.s32.totalorder %s9, 0
    %p97 = por %p95, %p96
    %p98 = scmp.ne.s32.totalorder %s87, %s90
    %p99 = scmp.eq.s32.totalorder %s14, 1
    %p100 = por %p98, %p99
    %p101 = scmp.ne.s32.totalorder %s90, %s91
    %p102 = scmp.eq.s32.totalorder %s14, 0
    %p103 = por %p101, %p102
    %p104 = scmp.ne.s32.totalorder %s90, %s91
    %p105 = scmp.eq.s32.totalorder %s15, 1
    %p106 = por %p104, %p105
    %p108 = scmp.ne.s32.totalorder %s91, %s107
    %p109 = scmp.eq.s32.totalorder %s15, 0
    %p110 = por %p108, %p109
    %p111 = scmp.le.s32.totalorder 1, %s9
    %p112 = scmp.lt.s32.totalorder %s9, 3
    %p113 = pnand %p111, %p112
    %p114 = pneg %p113
    // Predicated region
    $region9: #{res_down_conv_block.3} parent=5 // pred_check
      _
    $region10: #{res_down_conv_block.3} parent=5 // pred_check_branch
      %116 = sbr.rel (%p113) target = $region12
    $region11: #{res_down_conv_block.3} parent=5 // pred_region
      %s117 = ssub.s32 %s9, 1
      // Predicated region
      $region13: #{res_down_conv_block.3} parent=11 // pred_check
        %p118 = pneg %p56
      $region14: #{res_down_conv_block.3} parent=11 // pred_check_branch
        %120 = sbr.rel (%p118) target = $region16
      $region15: #{res_down_conv_block.3} parent=11 // pred_region
        _
      $region16: #{res_down_conv_block.3} parent=11 // pred_fallthru
        _
      // Predicated region
      $region17: #{res_down_conv_block.3} parent=11 // pred_check
        %p121 = pneg %p77
      $region18: #{res_down_conv_block.3} parent=11 // pred_check_branch
        %123 = sbr.rel (%p121) target = $region20
      $region19: #{res_down_conv_block.3} parent=11 // pred_region
        _
      $region20: #{res_down_conv_block.3} parent=11 // pred_fallthru
        _
    $region12: #{res_down_conv_block.3} parent=5 // pred_fallthru
      _
    %p124 = scmp.lt.s32.totalorder %s9, 2
    // Predicated region
    $region21: #{res_down_conv_block.3} parent=5 // pred_check
      %p125 = pneg %p124
    $region22: #{res_down_conv_block.3} parent=5 // pred_check_branch
      %127 = sbr.rel (%p125) target = $region24
    $region23: #{res_down_conv_block.3} parent=5 // pred_region
      // Predicated region
      $region25: #{res_down_conv_block.3} parent=23 // pred_check
        %p128 = pneg %p29
      $region26: #{res_down_conv_block.3} parent=23 // pred_check_branch
        %130 = sbr.rel (%p128) target = $region28
      $region27: #{res_down_conv_block.3} parent=23 // pred_region
        %p131 = scmp.lt.s32.totalorder %s9, 1
        %s132 = scalar_select %p131, %s9, 1
        %s133 = smul.addr %s132, 8
        %s134 = smul.addr %s133, 4
        %s135 = scalar_lea.vmem %s0, %s134
      $region28: #{res_down_conv_block.3} parent=23 // pred_fallthru
        _
    $region24: #{res_down_conv_block.3} parent=5 // pred_fallthru
      _
    %p136 = scmp.le.s32.totalorder 1, %s9
    %p137 = scmp.lt.s32.totalorder %s9, 3
    %p138 = pnand %p136, %p137
    %p139 = pneg %p138
    // Predicated region
    $region29: #{res_down_conv_block.3} parent=5 // pred_check
      _
    $region30: #{res_down_conv_block.3} parent=5 // pred_check_branch
      %141 = sbr.rel (%p138) target = $region32
    $region31: #{res_down_conv_block.3} parent=5 // pred_region
      %s142 = ssub.s32 %s9, 1
      %p143 = scmp.lt.s32.totalorder %s14, 1
      %s144 = scalar_select %p143, %s14, 1
      %s145 = smul.addr %s144, 8
      %s146 = smul.addr %s145, 4
      %s147 = scalar_lea.vmem %s0, %s146
      %p148 = pneg %p35
      %p149 = pneg %p32
      %p150 = pneg %p56
      %p151 = pneg %p53
      %p152 = pneg %p77
      %p153 = pneg %p74
      %p154 = pneg %p103
      %p155 = pneg %p100
      %s156 = smul.u32 8, %s14
      %p157 = scmp.lt.s32.totalorder %s156, 15
      %s158 = scalar_select %p157, %s156, 15
      %s159 = smul.addr %s158, 8
      %s160 = scalar_lea.vmem %s3, %s159
      %p161 = scmp.lt.s32.totalorder %s14, 1
      %s162 = scalar_select %p161, %s14, 1
      %s163 = smul.addr %s162, 8
      %s164 = smul.addr %s163, 4
      %s165 = scalar_lea.vmem %s0, %s164
      %s166 = smul.u32 8, %s14
      %p167 = scmp.lt.s32.totalorder %s166, 15
      %s168 = scalar_select %p167, %s166, 15
      %s169 = smul.addr %s168, 8
      %s170 = scalar_lea.vmem %s3, %s169
      %s171 = smul.u32 8, %s14
      %v173 = vld [vmem:[%s165] sm:$0xf]
      %v174 = vld [vmem:[%s165 + $0x4] sm:$0xf]
      %v175 = vld [vmem:[%s165 + $0x8] sm:$0xf]
      %v176 = vld [vmem:[%s165 + $0xc] sm:$0xf]
      %v177 = vld [vmem:[%s165 + $0x10] sm:$0xf]
      %v178 = vld [vmem:[%s165 + $0x14] sm:$0xf]
      %v179 = vld [vmem:[%s165 + $0x18] sm:$0xf]
      %v180 = vld [vmem:[%s165 + $0x1c] sm:$0xf]
      %v181 = vld [vmem:[%s1] sm:$0xf]
      %v182 = vld [vmem:[%s1 + $0x4] sm:$0xf]
      %v183 = vld [vmem:[%s2] sm:$0x1]
      %v185 = vlaneseq
      %v186 = vshrl.u32 %v185, 7
      %v187 = vsub.s32 0, %v186
      %v188 = vrot.slane %v183, %v187
      %v198 = vunpack.c.l.b16 %v173
      %v199 = vunpack.c.l.b16 %v174
      %v200 = vunpack.c.l.b16 %v175
      %v201 = vunpack.c.l.b16 %v176
      %v202 = vunpack.c.l.b16 %v177
      %v203 = vunpack.c.l.b16 %v178
      %v204 = vunpack.c.l.b16 %v179
      %v205 = vunpack.c.l.b16 %v180
      %v206 = vpack.c.b16 %v199, %v198
      %v207 = vpack.c.b16 %v201, %v200
      %v208 = vpack.c.b16 %v203, %v202
      %v209 = vpack.c.b16 %v205, %v204
      %v212 = vunpack.c.l.b16 %v181
      %v213 = vunpack.c.l.b16 %v182
      %v214 = vpack.c.b16 %v213, %v212
      %vm216 = vcmask 130048
      %v218 = vsel %vm216, %v206, 0
      %v221 = vsel %vm216, %v207, 0
      %v224 = vsel %vm216, %v208, 0
      %v227 = vsel %vm216, %v209, 0
      %229 = vmatprep.subr.bf16.mxu0 0
      %230 = vmatpush1.bf16.msra.mxu0 %v214
      %231 = vmatprep.subr.bf16.mxu0 0
      %232 = vmatpush1.bf16.msra.mxu0 0
      %233 = vmatprep.subr.bf16.mxu0 0
      %234 = vmatpush1.bf16.msra.mxu0 0
      %235 = vmatprep.subr.bf16.mxu0 0
      %236 = vmatpush1.bf16.msra.mxu0 0
      %237 = vmatprep.subr.bf16.mxu0 0
      %238 = vmatpush1.bf16.msra.mxu0 0
      %239 = vmatprep.subr.bf16.mxu0 0
      %240 = vmatpush1.bf16.msra.mxu0 0
      %241 = vmatprep.subr.bf16.mxu0 0
      %242 = vmatpush1.bf16.msra.mxu0 0
      %243 = vmatprep.subr.bf16.mxu0 0
      %244 = vmatpush1.bf16.msra.mxu0 0
      %245 = vmatprep.subr.bf16.mxu0 0
      %246 = vmatpush1.bf16.msra.mxu0 0
      %247 = vmatprep.subr.bf16.mxu0 0
      %248 = vmatpush1.bf16.msra.mxu0 0
      %249 = vmatprep.subr.bf16.mxu0 0
      %250 = vmatpush1.bf16.msra.mxu0 0
      %251 = vmatprep.subr.bf16.mxu0 0
      %252 = vmatpush1.bf16.msra.mxu0 0
      %253 = vmatprep.subr.bf16.mxu0 0
      %254 = vmatpush1.bf16.msra.mxu0 0
      %255 = vmatprep.subr.bf16.mxu0 0
      %256 = vmatpush1.bf16.msra.mxu0 0
      %257 = vmatprep.subr.bf16.mxu0 0
      %258 = vmatpush1.bf16.msra.mxu0 0
      %259 = vmatprep.subr.bf16.mxu0 0
      %260 = vmatpush1.bf16.msra.mxu0 0
      %261 = vmatprep.mubr.bf16.mxu0 0
      %262 = vmatmul.mubr.bf16.gmra.mrb[0].mxu0 %v218
      %v263 = vpop.f32.mrb[0].mxu0
      %v264 = vadd.f32 %v188, %v263
      %v265 = vpop.f32.mrb[0].mxu0
      %v266 = vpop.f32.mrb[0].mxu0
      %v267 = vadd.f32 %v188, %v266
      %v268 = vpop.f32.mrb[0].mxu0
      %269 = vmatprep.mubr.bf16.mxu0 0
      %270 = vmatmul.mubr.bf16.gmra.mrb[0].mxu0 %v221
      %v271 = vpop.f32.mrb[0].mxu0
      %v272 = vadd.f32 %v188, %v271
      %v273 = vpop.f32.mrb[0].mxu0
      %v274 = vpop.f32.mrb[0].mxu0
      %v275 = vadd.f32 %v188, %v274
      %v276 = vpop.f32.mrb[0].mxu0
      %277 = vmatprep.mubr.bf16.mxu0 0
      %278 = vmatmul.mubr.bf16.gmra.mrb[0].mxu0 %v224
      %v279 = vpop.f32.mrb[0].mxu0
      %v280 = vadd.f32 %v188, %v279
      %v281 = vpop.f32.mrb[0].mxu0
      %v282 = vpop.f32.mrb[0].mxu0
      %v283 = vadd.f32 %v188, %v282
      %v284 = vpop.f32.mrb[0].mxu0
      %285 = vmatprep.mubr.bf16.mxu0 0
      %286 = vmatmul.mubr.bf16.gmra.mrb[0].mxu0 %v227
      %v287 = vpop.f32.mrb[0].mxu0
      %v288 = vadd.f32 %v188, %v287
      %v289 = vpop.f32.mrb[0].mxu0
      %v290 = vpop.f32.mrb[0].mxu0
      %v291 = vadd.f32 %v188, %v290
      %v292 = vpop.f32.mrb[0].mxu0
      %293 = vdwg.mxu0
      %v294 = vmin.f32 %v264, 20.0
      %v295 = vmin.f32 %v267, 20.0
      %v296 = vmin.f32 %v272, 20.0
      %v297 = vmin.f32 %v275, 20.0
      %v298 = vmin.f32 %v280, 20.0
      %v299 = vmin.f32 %v283, 20.0
      %v300 = vmin.f32 %v288, 20.0
      %v301 = vmin.f32 %v291, 20.0
      %v302 = vmul.f32 %v294, 1.442695
      %v303 = vpow.pop %v302
      %v304 = vmul.f32 %v295, 1.442695
      %v305 = vpow.pop %v304
      %v306 = vmul.f32 %v296, 1.442695
      %v307 = vpow.pop %v306
      %v308 = vmul.f32 %v297, 1.442695
      %v309 = vpow.pop %v308
      %v310 = vmul.f32 %v298, 1.442695
      %v311 = vpow.pop %v310
      %v312 = vmul.f32 %v299, 1.442695
      %v313 = vpow.pop %v312
      %v314 = vmul.f32 %v300, 1.442695
      %v315 = vpow.pop %v314
      %v316 = vmul.f32 %v301, 1.442695
      %v317 = vpow.pop %v316
      %v318 = vadd.f32 %v303, 2.0
      %v319 = vadd.f32 %v305, 2.0
      %v320 = vadd.f32 %v307, 2.0
      %v321 = vadd.f32 %v309, 2.0
      %v322 = vadd.f32 %v311, 2.0
      %v323 = vadd.f32 %v313, 2.0
      %v324 = vadd.f32 %v315, 2.0
      %v325 = vadd.f32 %v317, 2.0
      %v326 = vmul.f32 %v303, %v318
      %v327 = vmul.f32 %v305, %v319
      %v328 = vmul.f32 %v307, %v320
      %v329 = vmul.f32 %v309, %v321
      %v330 = vmul.f32 %v311, %v322
      %v331 = vmul.f32 %v313, %v323
      %v332 = vmul.f32 %v315, %v324
      %v333 = vmul.f32 %v317, %v325
      %v334 = vmul.f32 %v264, %v326
      %v335 = vmul.f32 %v267, %v327
      %v336 = vmul.f32 %v272, %v328
      %v337 = vmul.f32 %v275, %v329
      %v338 = vmul.f32 %v280, %v330
      %v339 = vmul.f32 %v283, %v331
      %v340 = vmul.f32 %v288, %v332
      %v341 = vmul.f32 %v291, %v333
      %v342 = vadd.f32 %v326, 2.0
      %v343 = vadd.f32 %v327, 2.0
      %v344 = vadd.f32 %v328, 2.0
      %v345 = vadd.f32 %v329, 2.0
      %v346 = vadd.f32 %v330, 2.0
      %v347 = vadd.f32 %v331, 2.0
      %v348 = vadd.f32 %v332, 2.0
      %v349 = vadd.f32 %v333, 2.0
      %v350 = vrcp.pop %v342
      %v351 = vrcp.pop %v343
      %v352 = vrcp.pop %v344
      %v353 = vrcp.pop %v345
      %v354 = vrcp.pop %v346
      %v355 = vrcp.pop %v347
      %v356 = vrcp.pop %v348
      %v357 = vrcp.pop %v349
      %v358 = vmul.f32 %v334, %v350
      %v359 = vmul.f32 %v335, %v351
      %v360 = vmul.f32 %v336, %v352
      %v361 = vmul.f32 %v337, %v353
      %v362 = vmul.f32 %v338, %v354
      %v363 = vmul.f32 %v339, %v355
      %v364 = vmul.f32 %v340, %v356
      %v365 = vmul.f32 %v341, %v357
      %vm366 = vcmp.gt.f32.partialorder %v264, 20.0
      %vm367 = vcmp.gt.f32.partialorder %v267, 20.0
      %vm368 = vcmp.gt.f32.partialorder %v272, 20.0
      %vm369 = vcmp.gt.f32.partialorder %v275, 20.0
      %vm370 = vcmp.gt.f32.partialorder %v280, 20.0
      %vm371 = vcmp.gt.f32.partialorder %v283, 20.0
      %vm372 = vcmp.gt.f32.partialorder %v288, 20.0
      %vm373 = vcmp.gt.f32.partialorder %v291, 20.0
      %v374 = vsel %vm366, %v264, %v358
      %v375 = vsel %vm367, %v267, %v359
      %v376 = vsel %vm368, %v272, %v360
      %v377 = vsel %vm369, %v275, %v361
      %v378 = vsel %vm370, %v280, %v362
      %v379 = vsel %vm371, %v283, %v363
      %v380 = vsel %vm372, %v288, %v364
      %v381 = vsel %vm373, %v291, %v365
      %382 = vst [vmem:[%s170] sm:$0xff] %v374
      %383 = vst [vmem:[%s170 + $0x8] sm:$0xff] %v375
      %384 = vst [vmem:[%s170 + $0x10] sm:$0xff] %v376
      %385 = vst [vmem:[%s170 + $0x18] sm:$0xff] %v377
      %386 = vst [vmem:[%s170 + $0x20] sm:$0xff] %v378
      %387 = vst [vmem:[%s170 + $0x28] sm:$0xff] %v379
      %388 = vst [vmem:[%s170 + $0x30] sm:$0xff] %v380
      %389 = vst [vmem:[%s170 + $0x38] sm:$0xff] %v381
      %s390 = smul.u32 8, %s14
      %p391 = scmp.lt.s32.totalorder %s390, 15
      %s392 = scalar_select %p391, %s390, 15
      %s393 = smul.addr %s392, 8
      %s394 = scalar_lea.vmem %s3, %s393
      // Predicated region
      $region33: #{res_down_conv_block.3} parent=31 // pred_check
        %p395 = pneg %p100
      $region34: #{res_down_conv_block.3} parent=31 // pred_check_branch
        %397 = sbr.rel (%p395) target = $region36
      $region35: #{res_down_conv_block.3} parent=31 // pred_region
        %s398 = smul.u32 8, %s14
      $region36: #{res_down_conv_block.3} parent=31 // pred_fallthru
        _
    $region32: #{res_down_conv_block.3} parent=5 // pred_fallthru
      _
    %p399 = scmp.le.s32.totalorder 2, %s9
    // Predicated region
    $region37: #{res_down_conv_block.3} parent=5 // pred_check
      %p400 = pneg %p399
    $region38: #{res_down_conv_block.3} parent=5 // pred_check_branch
      %402 = sbr.rel (%p400) target = $region40
    $region39: #{res_down_conv_block.3} parent=5 // pred_region
      %s403 = ssub.s32 %s9, 2
      // Predicated region
      $region41: #{res_down_conv_block.3} parent=39 // pred_check
        %p404 = pneg %p106
      $region42: #{res_down_conv_block.3} parent=39 // pred_check_branch
        %406 = sbr.rel (%p404) target = $region44
      $region43: #{res_down_conv_block.3} parent=39 // pred_region
        %s407 = smul.u32 8, %s15
        %p408 = scmp.lt.s32.totalorder %s407, 15
        %s409 = scalar_select %p408, %s407, 15
        %s410 = smul.addr %s409, 8
        %s411 = scalar_lea.vmem %s3, %s410
      $region44: #{res_down_conv_block.3} parent=39 // pred_fallthru
        _
    $region40: #{res_down_conv_block.3} parent=5 // pred_fallthru
      _
  $region6: #{res_down_conv_block.3} parent=0 // loop_footer
    %s13 = sadd.s32 1, %s9
  $region7: #{res_down_conv_block.3} parent=0 // loop_footer_branch
    %8 = sbr.rel target = $region3
  $region8: #{res_down_conv_block.3} parent=0 // loop_exit
    _

// kernel: res_down_conv_block.4
$region0: #{res_down_conv_block.4}
  #allocation0 [shape = 'u32[]', space=smem, size = 0x4, offset = 0x4, fixed_abs, tag = 'smem constant byte address 0x4 - core index']
  #allocation1 [shape = 'u32[144,128]{1,0:T(1,128)}', space=vmem, size = 0x12000, scoped, tag = 'internal scratch']
  %s0 = inlined_call_operand.vmem [shape: bf16[2,10,10,16], index: 0, kind: input, shape index: {}]
  %s1 = inlined_call_operand.vmem [shape: bf16[9,16,128], index: 1, kind: input, shape index: {}]
  %s2 = inlined_call_operand.vmem [shape: f32[1,128], index: 2, kind: input, shape index: {}]
  %s3 = inlined_call_operand.vmem [shape: bf16[128,128], index: 3, kind: output, shape index: {}]
  %s4 = sld [smem:[#allocation0]]
  $region45: #{res_down_conv_block.4} parent=0
    _
  %s6 = ssub.s32 1, %s4
  %s7 = scalar_select 0, %s6, %s4
  loop: start=0, step=1, limit=4
  $region2: #{res_down_conv_block.4} parent=0 // loop_pre_header
    _
  $region3: #{res_down_conv_block.4} parent=0 // loop_header
    %s9 = sphi 0, %s13
    %p10 = scmp.ge.s32.totalorder %s9, 4
    %s19 = sphi 0, %s21
    %s22 = sphi 0, %s19
    %s23 = sphi 0, %s22
    %s39 = sphi 0, %s23
    %s43 = sphi 0, %s43
    %s45 = sphi 0, %s43
    %s46 = sphi 0, %s45
    %s60 = sphi 0, %s46
    %s64 = sphi 0, %s64
    %s66 = sphi 0, %s64
    %s67 = sphi 0, %s66
    %s81 = sphi 0, %s67
    %s87 = sphi 0, %s89
    %s90 = sphi 0, %s87
    %s91 = sphi 0, %s90
    %s107 = sphi 0, %s91
  $region4: #{res_down_conv_block.4} parent=0 // loop_header_branch
    %12 = sbr.rel (%p10) target = $region8
  $region5: #{res_down_conv_block.4} parent=0 // loop_body
    %s14 = ssub.s32 %s9, 1
    %s15 = ssub.s32 %s9, 2
    %s16 = sadd.s32 %s9, 1
    %s17 = ssub.s32 %s9, %s16
    %p18 = scmp.eq.s32.totalorder %s17, 0
    %s20 = sadd.s32 %s19, 1
    %s21 = scalar_select %p18, %s19, %s20
    %p24 = pneg %p18
    %p25 = scmp.eq.s32.totalorder %s9, 1
    %p26 = por %p24, %p25
    %p27 = scmp.ne.s32.totalorder %s19, %s22
    %p28 = scmp.eq.s32.totalorder %s9, 0
    %p29 = por %p27, %p28
    %p30 = scmp.ne.s32.totalorder %s19, %s22
    %p31 = scmp.eq.s32.totalorder %s14, 1
    %p32 = por %p30, %p31
    %p33 = scmp.ne.s32.totalorder %s22, %s23
    %p34 = scmp.eq.s32.totalorder %s14, 0
    %p35 = por %p33, %p34
    %p36 = scmp.ne.s32.totalorder %s22, %s23
    %p37 = scmp.eq.s32.totalorder %s15, 1
    %p38 = por %p36, %p37
    %p40 = scmp.ne.s32.totalorder %s23, %s39
    %p41 = scmp.eq.s32.totalorder %s15, 0
    %p42 = por %p40, %p41
    %s44 = sadd.s32 %s43, 1
    %p47 = scmp.eq.s32.totalorder %s9, 1
    %p48 = scmp.ne.s32.totalorder %s43, %s45
    %p49 = scmp.eq.s32.totalorder %s9, 0
    %p50 = por %p48, %p49
    %p51 = scmp.ne.s32.totalorder %s43, %s45
    %p52 = scmp.eq.s32.totalorder %s14, 1
    %p53 = por %p51, %p52
    %p54 = scmp.ne.s32.totalorder %s45, %s46
    %p55 = scmp.eq.s32.totalorder %s14, 0
    %p56 = por %p54, %p55
    %p57 = scmp.ne.s32.totalorder %s45, %s46
    %p58 = scmp.eq.s32.totalorder %s15, 1
    %p59 = por %p57, %p58
    %p61 = scmp.ne.s32.totalorder %s46, %s60
    %p62 = scmp.eq.s32.totalorder %s15, 0
    %p63 = por %p61, %p62
    %s65 = sadd.s32 %s64, 1
    %p68 = scmp.eq.s32.totalorder %s9, 1
    %p69 = scmp.ne.s32.totalorder %s64, %s66
    %p70 = scmp.eq.s32.totalorder %s9, 0
    %p71 = por %p69, %p70
    %p72 = scmp.ne.s32.totalorder %s64, %s66
    %p73 = scmp.eq.s32.totalorder %s14, 1
    %p74 = por %p72, %p73
    %p75 = scmp.ne.s32.totalorder %s66, %s67
    %p76 = scmp.eq.s32.totalorder %s14, 0
    %p77 = por %p75, %p76
    %p78 = scmp.ne.s32.totalorder %s66, %s67
    %p79 = scmp.eq.s32.totalorder %s15, 1
    %p80 = por %p78, %p79
    %p82 = scmp.ne.s32.totalorder %s67, %s81
    %p83 = scmp.eq.s32.totalorder %s15, 0
    %p84 = por %p82, %p83
    %s85 = ssub.s32 %s9, %s16
    %p86 = scmp.eq.s32.totalorder %s85, 0
    %s88 = sadd.s32 %s87, 1
    %s89 = scalar_select %p86, %s87, %s88
    %p92 = pneg %p86
    %p93 = scmp.eq.s32.totalorder %s9, 1
    %p94 = por %p92, %p93
    %p95 = scmp.ne.s32.totalorder %s87, %s90
    %p96 = scmp.eq.s32.totalorder %s9, 0
    %p97 = por %p95, %p96
    %p98 = scmp.ne.s32.totalorder %s87, %s90
    %p99 = scmp.eq.s32.totalorder %s14, 1
    %p100 = por %p98, %p99
    %p101 = scmp.ne.s32.totalorder %s90, %s91
    %p102 = scmp.eq.s32.totalorder %s14, 0
    %p103 = por %p101, %p102
    %p104 = scmp.ne.s32.totalorder %s90, %s91
    %p105 = scmp.eq.s32.totalorder %s15, 1
    %p106 = por %p104, %p105
    %p108 = scmp.ne.s32.totalorder %s91, %s107
    %p109 = scmp.eq.s32.totalorder %s15, 0
    %p110 = por %p108, %p109
    %p111 = scmp.le.s32.totalorder 1, %s9
    %p112 = scmp.lt.s32.totalorder %s9, 3
    %p113 = pnand %p111, %p112
    %p114 = pneg %p113
    // Predicated region
    $region9: #{res_down_conv_block.4} parent=5 // pred_check
      _
    $region10: #{res_down_conv_block.4} parent=5 // pred_check_branch
      %116 = sbr.rel (%p113) target = $region12
    $region11: #{res_down_conv_block.4} parent=5 // pred_region
      %s117 = ssub.s32 %s9, 1
      // Predicated region
      $region13: #{res_down_conv_block.4} parent=11 // pred_check
        %p118 = pneg %p56
      $region14: #{res_down_conv_block.4} parent=11 // pred_check_branch
        %120 = sbr.rel (%p118) target = $region16
      $region15: #{res_down_conv_block.4} parent=11 // pred_region
        _
      $region16: #{res_down_conv_block.4} parent=11 // pred_fallthru
        _
      // Predicated region
      $region17: #{res_down_conv_block.4} parent=11 // pred_check
        %p121 = pneg %p77
      $region18: #{res_down_conv_block.4} parent=11 // pred_check_branch
        %123 = sbr.rel (%p121) target = $region20
      $region19: #{res_down_conv_block.4} parent=11 // pred_region
        _
      $region20: #{res_down_conv_block.4} parent=11 // pred_fallthru
        _
    $region12: #{res_down_conv_block.4} parent=5 // pred_fallthru
      _
    %p124 = scmp.lt.s32.totalorder %s9, 2
    // Predicated region
    $region21: #{res_down_conv_block.4} parent=5 // pred_check
      %p125 = pneg %p124
    $region22: #{res_down_conv_block.4} parent=5 // pred_check_branch
      %127 = sbr.rel (%p125) target = $region24
    $region23: #{res_down_conv_block.4} parent=5 // pred_region
      // Predicated region
      $region25: #{res_down_conv_block.4} parent=23 // pred_check
        %p128 = pneg %p29
      $region26: #{res_down_conv_block.4} parent=23 // pred_check_branch
        %130 = sbr.rel (%p128) target = $region28
      $region27: #{res_down_conv_block.4} parent=23 // pred_region
        %p131 = scmp.lt.s32.totalorder %s9, 1
        %s132 = scalar_select %p131, %s9, 1
        %s133 = smul.addr %s132, 20
        %s134 = smul.addr %s133, 4
        %s135 = scalar_lea.vmem %s0, %s134
      $region28: #{res_down_conv_block.4} parent=23 // pred_fallthru
        _
    $region24: #{res_down_conv_block.4} parent=5 // pred_fallthru
      _
    %p136 = scmp.le.s32.totalorder 1, %s9
    %p137 = scmp.lt.s32.totalorder %s9, 3
    %p138 = pnand %p136, %p137
    %p139 = pneg %p138
    // Predicated region
    $region29: #{res_down_conv_block.4} parent=5 // pred_check
      _
    $region30: #{res_down_conv_block.4} parent=5 // pred_check_branch
      %141 = sbr.rel (%p138) target = $region32
    $region31: #{res_down_conv_block.4} parent=5 // pred_region
      %s142 = ssub.s32 %s9, 1
      %p143 = scmp.lt.s32.totalorder %s14, 1
      %s144 = scalar_select %p143, %s14, 1
      %s145 = smul.addr %s144, 20
      %s146 = smul.addr %s145, 4
      %s147 = scalar_lea.vmem %s0, %s146
      %p148 = pneg %p35
      %p149 = pneg %p32
      %p150 = pneg %p56
      %p151 = pneg %p53
      %p152 = pneg %p77
      %p153 = pneg %p74
      %p154 = pneg %p103
      %p155 = pneg %p100
      %s156 = smul.u32 8, %s14
      %p157 = scmp.lt.s32.totalorder %s156, 15
      %s158 = scalar_select %p157, %s156, 15
      %s159 = smul.addr %s158, 4
      %s160 = scalar_lea.vmem %s3, %s159
      %p161 = scmp.lt.s32.totalorder %s14, 1
      %s162 = scalar_select %p161, %s14, 1
      %s163 = smul.addr %s162, 20
      %s164 = smul.addr %s163, 4
      %s165 = scalar_lea.vmem %s0, %s164
      %s166 = smul.u32 8, %s14
      %p167 = scmp.lt.s32.totalorder %s166, 15
      %s168 = scalar_select %p167, %s166, 15
      %s169 = smul.addr %s168, 4
      %s170 = scalar_lea.vmem %s3, %s169
      %s171 = smul.u32 8, %s14
      %v173 = vld [vmem:[%s165] sm:$0xf]
      %v174 = vld [vmem:[%s165 + $0x4] sm:$0x1]
      %v175 = vld [vmem:[%s165 + $0x8] sm:$0xf]
      %v176 = vld [vmem:[%s165 + $0xc] sm:$0x1]
      %v177 = vld [vmem:[%s165 + $0x10] sm:$0xf]
      %v178 = vld [vmem:[%s165 + $0x14] sm:$0x1]
      %v179 = vld [vmem:[%s165 + $0x18] sm:$0xf]
      %v180 = vld [vmem:[%s165 + $0x1c] sm:$0x1]
      %v181 = vld [vmem:[%s165 + $0x20] sm:$0xf]
      %v182 = vld [vmem:[%s165 + $0x24] sm:$0x1]
      %v183 = vld [vmem:[%s165 + $0x28] sm:$0xf]
      %v184 = vld [vmem:[%s165 + $0x2c] sm:$0x1]
      %v185 = vld [vmem:[%s165 + $0x30] sm:$0xf]
      %v186 = vld [vmem:[%s165 + $0x34] sm:$0x1]
      %v187 = vld [vmem:[%s165 + $0x38] sm:$0xf]
      %v188 = vld [vmem:[%s165 + $0x3c] sm:$0x1]
      %v189 = vld [vmem:[%s165 + $0x40] sm:$0xf]
      %v190 = vld [vmem:[%s165 + $0x44] sm:$0x1]
      %v191 = vld [vmem:[%s165 + $0x48] sm:$0xf]
      %v192 = vld [vmem:[%s165 + $0x4c] sm:$0x1]
      %v193 = vld [vmem:[%s1] sm:$0xf]
      %v194 = vld [vmem:[%s1 + $0x4] sm:$0xf]
      %vm195 = vsmask.f32 3328
      %vm196 = vsmask.f32 7440
      %vm197 = vmor %vm195, %vm196
      %v199 = vshrl.u32 %v173, 16
      %v201 = vrot.slane %v199, 4
      %v202 = vshll.u32 %v173, 16
      %v204 = vrot.slane %v202, 5
      %v205 = vor.u32 %v201, %v204
      %v206 = vrot.slane %v205, 4
      %v208 = vshll.u32 %v174, 16
      %v210 = vrot.slane %v208, 5
      %v211 = vsel %vm197, %v206, %v210
      %v213 = vshrl.u32 %v175, 16
      %v215 = vrot.slane %v213, 4
      %v216 = vshll.u32 %v175, 16
      %v218 = vrot.slane %v216, 5
      %v219 = vor.u32 %v215, %v218
      %v220 = vrot.slane %v219, 4
      %v222 = vshll.u32 %v176, 16
      %v224 = vrot.slane %v222, 5
      %v225 = vsel %vm197, %v220, %v224
      %v227 = vshrl.u32 %v177, 16
      %v229 = vrot.slane %v227, 4
      %v230 = vshll.u32 %v177, 16
      %v232 = vrot.slane %v230, 5
      %v233 = vor.u32 %v229, %v232
      %v234 = vrot.slane %v233, 4
      %v236 = vshll.u32 %v178, 16
      %v238 = vrot.slane %v236, 5
      %v239 = vsel %vm197, %v234, %v238
      %v241 = vshrl.u32 %v179, 16
      %v243 = vrot.slane %v241, 4
      %v244 = vshll.u32 %v179, 16
      %v246 = vrot.slane %v244, 5
      %v247 = vor.u32 %v243, %v246
      %v248 = vrot.slane %v247, 4
      %v250 = vshll.u32 %v180, 16
      %v252 = vrot.slane %v250, 5
      %v253 = vsel %vm197, %v248, %v252
      %v255 = vshrl.u32 %v181, 16
      %v257 = vrot.slane %v255, 4
      %v258 = vshll.u32 %v181, 16
      %v260 = vrot.slane %v258, 5
      %v261 = vor.u32 %v257, %v260
      %v262 = vrot.slane %v261, 4
      %v264 = vshll.u32 %v182, 16
      %v266 = vrot.slane %v264, 5
      %v267 = vsel %vm197, %v262, %v266
      %v269 = vshrl.u32 %v183, 16
      %v271 = vrot.slane %v269, 4
      %v272 = vshll.u32 %v183, 16
      %v274 = vrot.slane %v272, 5
      %v275 = vor.u32 %v271, %v274
      %v276 = vrot.slane %v275, 4
      %v278 = vshll.u32 %v184, 16
      %v280 = vrot.slane %v278, 5
      %v281 = vsel %vm197, %v276, %v280
      %v283 = vshrl.u32 %v185, 16
      %v285 = vrot.slane %v283, 4
      %v286 = vshll.u32 %v185, 16
      %v288 = vrot.slane %v286, 5
      %v289 = vor.u32 %v285, %v288
      %v290 = vrot.slane %v289, 4
      %v292 = vshll.u32 %v186, 16
      %v294 = vrot.slane %v292, 5
      %v295 = vsel %vm197, %v290, %v294
      %v297 = vshrl.u32 %v187, 16
      %v299 = vrot.slane %v297, 4
      %v300 = vshll.u32 %v187, 16
      %v302 = vrot.slane %v300, 5
      %v303 = vor.u32 %v299, %v302
      %v304 = vrot.slane %v303, 4
      %v306 = vshll.u32 %v188, 16
      %v308 = vrot.slane %v306, 5
      %v309 = vsel %vm197, %v304, %v308
      %s310 = scalar_lea.vmem %s1, 8
      %v311 = vld [vmem:[%s310] sm:$0xf]
      %v312 = vld [vmem:[%s310 + $0x4] sm:$0xf]
      %v313 = vunpack.c.l.b16 %v211
      %v314 = vunpack.c.l.b16 %v225
      %v315 = vunpack.c.l.b16 %v239
      %v316 = vunpack.c.l.b16 %v253
      %v317 = vunpack.c.l.b16 %v267
      %v318 = vunpack.c.l.b16 %v281
      %v319 = vunpack.c.l.b16 %v295
      %v320 = vunpack.c.l.b16 %v309
      %v321 = vpack.c.b16 %v314, %v313
      %v322 = vpack.c.b16 %v316, %v315
      %v323 = vpack.c.b16 %v318, %v317
      %v324 = vpack.c.b16 %v320, %v319
      %v327 = vunpack.c.l.b16 %v311
      %v328 = vunpack.c.l.b16 %v312
      %v329 = vpack.c.b16 %v328, %v327
      %vm331 = vcmask 130048
      %v333 = vsel %vm331, %v321, 0
      %v336 = vsel %vm331, %v322, 0
      %v339 = vsel %vm331, %v323, 0
      %v342 = vsel %vm331, %v324, 0
      %344 = vmatprep.subr.bf16.mxu0 0
      %345 = vmatpush1.bf16.msra.mxu0 %v329
      %346 = vmatprep.subr.bf16.mxu0 0
      %347 = vmatpush1.bf16.msra.mxu0 0
      %348 = vmatprep.subr.bf16.mxu0 0
      %349 = vmatpush1.bf16.msra.mxu0 0
      %350 = vmatprep.subr.bf16.mxu0 0
      %351 = vmatpush1.bf16.msra.mxu0 0
      %352 = vmatprep.subr.bf16.mxu0 0
      %353 = vmatpush1.bf16.msra.mxu0 0
      %354 = vmatprep.subr.bf16.mxu0 0
      %355 = vmatpush1.bf16.msra.mxu0 0
      %356 = vmatprep.subr.bf16.mxu0 0
      %357 = vmatpush1.bf16.msra.mxu0 0
      %358 = vmatprep.subr.bf16.mxu0 0
      %359 = vmatpush1.bf16.msra.mxu0 0
      %360 = vmatprep.subr.bf16.mxu0 0
      %361 = vmatpush1.bf16.msra.mxu0 0
      %362 = vmatprep.subr.bf16.mxu0 0
      %363 = vmatpush1.bf16.msra.mxu0 0
      %364 = vmatprep.subr.bf16.mxu0 0
      %365 = vmatpush1.bf16.msra.mxu0 0
      %366 = vmatprep.subr.bf16.mxu0 0
      %367 = vmatpush1.bf16.msra.mxu0 0
      %368 = vmatprep.subr.bf16.mxu0 0
      %369 = vmatpush1.bf16.msra.mxu0 0
      %370 = vmatprep.subr.bf16.mxu0 0
      %371 = vmatpush1.bf16.msra.mxu0 0
      %372 = vmatprep.subr.bf16.mxu0 0
      %373 = vmatpush1.bf16.msra.mxu0 0
      %374 = vmatprep.subr.bf16.mxu0 0
      %375 = vmatpush1.bf16.msra.mxu0 0
      %376 = vmatprep.mubr.bf16.mxu0 0
      %377 = vmatmul.mubr.bf16.gmra.mrb[0].mxu0 %v333
      %v378 = vpop.f32.mrb[0].mxu0
      %v379 = vadd.f32 0.0, %v378
      %v380 = vpop.f32.mrb[0].mxu0
      %v381 = vpop.f32.mrb[0].mxu0
      %v382 = vadd.f32 0.0, %v381
      %v383 = vpop.f32.mrb[0].mxu0
      %384 = vmatprep.mubr.bf16.mxu0 0
      %385 = vmatmul.mubr.bf16.gmra.mrb[0].mxu0 %v336
      %v386 = vpop.f32.mrb[0].mxu0
      %v387 = vadd.f32 0.0, %v386
      %v388 = vpop.f32.mrb[0].mxu0
      %v389 = vpop.f32.mrb[0].mxu0
      %v390 = vadd.f32 0.0, %v389
      %v391 = vpop.f32.mrb[0].mxu0
      %392 = vmatprep.mubr.bf16.mxu0 0
      %393 = vmatmul.mubr.bf16.gmra.mrb[0].mxu0 %v339
      %v394 = vpop.f32.mrb[0].mxu0
      %v395 = vadd.f32 0.0, %v394
      %v396 = vpop.f32.mrb[0].mxu0
      %v397 = vpop.f32.mrb[0].mxu0
      %v398 = vadd.f32 0.0, %v397
      %v399 = vpop.f32.mrb[0].mxu0
      %400 = vmatprep.mubr.bf16.mxu0 0
      %401 = vmatmul.mubr.bf16.gmra.mrb[0].mxu0 %v342
      %v402 = vpop.f32.mrb[0].mxu0
      %v403 = vadd.f32 0.0, %v402
      %v404 = vpop.f32.mrb[0].mxu0
      %v405 = vpop.f32.mrb[0].mxu0
      %v406 = vadd.f32 0.0, %v405
      %v407 = vpop.f32.mrb[0].mxu0
      %408 = vdwg.mxu0
      %v417 = vunpack.c.l.b16 %v173
      %v418 = vunpack.c.l.b16 %v175
      %v419 = vunpack.c.l.b16 %v177
      %v420 = vunpack.c.l.b16 %v179
      %v421 = vunpack.c.l.b16 %v181
      %v422 = vunpack.c.l.b16 %v183
      %v423 = vunpack.c.l.b16 %v185
      %v424 = vunpack.c.l.b16 %v187
      %v425 = vpack.c.b16 %v418, %v417
      %v426 = vpack.c.b16 %v420, %v419
      %v427 = vpack.c.b16 %v422, %v421
      %v428 = vpack.c.b16 %v424, %v423
      %v431 = vunpack.c.l.b16 %v193
      %v432 = vunpack.c.l.b16 %v194
      %v433 = vpack.c.b16 %v432, %v431
      %v436 = vsel %vm331, %v425, 0
      %v439 = vsel %vm331, %v426, 0
      %v442 = vsel %vm331, %v427, 0
      %v445 = vsel %vm331, %v428, 0
      %447 = vmatprep.subr.bf16.mxu0 0
      %448 = vmatpush1.bf16.msra.mxu0 %v433
      %449 = vmatprep.subr.bf16.mxu0 0
      %450 = vmatpush1.bf16.msra.mxu0 0
      %451 = vmatprep.subr.bf16.mxu0 0
      %452 = vmatpush1.bf16.msra.mxu0 0
      %453 = vmatprep.subr.bf16.mxu0 0
      %454 = vmatpush1.bf16.msra.mxu0 0
      %455 = vmatprep.subr.bf16.mxu0 0
      %456 = vmatpush1.bf16.msra.mxu0 0
      %457 = vmatprep.subr.bf16.mxu0 0
      %458 = vmatpush1.bf16.msra.mxu0 0
      %459 = vmatprep.subr.bf16.mxu0 0
      %460 = vmatpush1.bf16.msra.mxu0 0
      %461 = vmatprep.subr.bf16.mxu0 0
      %462 = vmatpush1.bf16.msra.mxu0 0
      %463 = vmatprep.subr.bf16.mxu0 0
      %464 = vmatpush1.bf16.msra.mxu0 0
      %465 = vmatprep.subr.bf16.mxu0 0
      %466 = vmatpush1.bf16.msra.mxu0 0
      %467 = vmatprep.subr.bf16.mxu0 0
      %468 = vmatpush1.bf16.msra.mxu0 0
      %469 = vmatprep.subr.bf16.mxu0 0
      %470 = vmatpush1.bf16.msra.mxu0 0
      %471 = vmatprep.subr.bf16.mxu0 0
      %472 = vmatpush1.bf16.msra.mxu0 0
      %473 = vmatprep.subr.bf16.mxu0 0
      %474 = vmatpush1.bf16.msra.mxu0 0
      %475 = vmatprep.subr.bf16.mxu0 0
      %476 = vmatpush1.bf16.msra.mxu0 0
      %477 = vmatprep.subr.bf16.mxu0 0
      %478 = vmatpush1.bf16.msra.mxu0 0
      %479 = vmatprep.mubr.bf16.mxu0 0
      %480 = vmatmul.mubr.bf16.gmra.mrb[0].mxu0 %v436
      %v481 = vpop.f32.mrb[0].mxu0
      %v482 = vadd.f32 %v379, %v481
      %v483 = vpop.f32.mrb[0].mxu0
      %v484 = vpop.f32.mrb[0].mxu0
      %v485 = vadd.f32 %v382, %v484
      %v486 = vpop.f32.mrb[0].mxu0
      %487 = vmatprep.mubr.bf16.mxu0 0
      %488 = vmatmul.mubr.bf16.gmra.mrb[0].mxu0 %v439
      %v489 = vpop.f32.mrb[0].mxu0
      %v490 = vadd.f32 %v387, %v489
      %v491 = vpop.f32.mrb[0].mxu0
      %v492 = vpop.f32.mrb[0].mxu0
      %v493 = vadd.f32 %v390, %v492
      %v494 = vpop.f32.mrb[0].mxu0
      %495 = vmatprep.mubr.bf16.mxu0 0
      %496 = vmatmul.mubr.bf16.gmra.mrb[0].mxu0 %v442
      %v497 = vpop.f32.mrb[0].mxu0
      %v498 = vadd.f32 %v395, %v497
      %v499 = vpop.f32.mrb[0].mxu0
      %v500 = vpop.f32.mrb[0].mxu0
      %v501 = vadd.f32 %v398, %v500
      %v502 = vpop.f32.mrb[0].mxu0
      %503 = vmatprep.mubr.bf16.mxu0 0
      %504 = vmatmul.mubr.bf16.gmra.mrb[0].mxu0 %v445
      %v505 = vpop.f32.mrb[0].mxu0
      %v506 = vadd.f32 %v403, %v505
      %v507 = vpop.f32.mrb[0].mxu0
      %v508 = vpop.f32.mrb[0].mxu0
      %v509 = vadd.f32 %v406, %v508
      %v510 = vpop.f32.mrb[0].mxu0
      %511 = vdwg.mxu0
      %vm520 = vcmask 1042432
      %vm521 = vcmask 1046532
      %vm522 = vmor %vm520, %vm521
      %v523 = vrot.slane %v173, 5
      %v524 = vrot.slane %v523, 4
      %v525 = vrot.slane %v174, 5
      %v526 = vsel %vm522, %v524, %v525
      %v527 = vrot.slane %v175, 5
      %v528 = vrot.slane %v527, 4
      %v529 = vrot.slane %v176, 5
      %v530 = vsel %vm522, %v528, %v529
      %v531 = vrot.slane %v177, 5
      %v532 = vrot.slane %v531, 4
      %v533 = vrot.slane %v178, 5
      %v534 = vsel %vm522, %v532, %v533
      %v535 = vrot.slane %v179, 5
      %v536 = vrot.slane %v535, 4
      %v537 = vrot.slane %v180, 5
      %v538 = vsel %vm522, %v536, %v537
      %v539 = vrot.slane %v181, 5
      %v540 = vrot.slane %v539, 4
      %v541 = vrot.slane %v182, 5
      %v542 = vsel %vm522, %v540, %v541
      %v543 = vrot.slane %v183, 5
      %v544 = vrot.slane %v543, 4
      %v545 = vrot.slane %v184, 5
      %v546 = vsel %vm522, %v544, %v545
      %v547 = vrot.slane %v185, 5
      %v548 = vrot.slane %v547, 4
      %v549 = vrot.slane %v186, 5
      %v550 = vsel %vm522, %v548, %v549
      %v551 = vrot.slane %v187, 5
      %v552 = vrot.slane %v551, 4
      %v553 = vrot.slane %v188, 5
      %v554 = vsel %vm522, %v552, %v553
      %s555 = scalar_lea.vmem %s1, 16
      %v556 = vld [vmem:[%s555] sm:$0xf]
      %v557 = vld [vmem:[%s555 + $0x4] sm:$0xf]
      %v558 = vunpack.c.l.b16 %v526
      %v559 = vunpack.c.l.b16 %v530
      %v560 = vunpack.c.l.b16 %v534
      %v561 = vunpack.c.l.b16 %v538
      %v562 = vunpack.c.l.b16 %v542
      %v563 = vunpack.c.l.b16 %v546
      %v564 = vunpack.c.l.b16 %v550
      %v565 = vunpack.c.l.b16 %v554
      %v566 = vpack.c.b16 %v559, %v558
      %v567 = vpack.c.b16 %v561, %v560
      %v568 = vpack.c.b16 %v563, %v562
      %v569 = vpack.c.b16 %v565, %v564
      %v572 = vunpack.c.l.b16 %v556
      %v573 = vunpack.c.l.b16 %v557
      %v574 = vpack.c.b16 %v573, %v572
      %v577 = vsel %vm331, %v566, 0
      %v580 = vsel %vm331, %v567, 0
      %v583 = vsel %vm331, %v568, 0
      %v586 = vsel %vm331, %v569, 0
      %588 = vmatprep.subr.bf16.mxu0 0
      %589 = vmatpush1.bf16.msra.mxu0 %v574
      %590 = vmatprep.subr.bf16.mxu0 0
      %591 = vmatpush1.bf16.msra.mxu0 0
      %592 = vmatprep.subr.bf16.mxu0 0
      %593 = vmatpush1.bf16.msra.mxu0 0
      %594 = vmatprep.subr.bf16.mxu0 0
      %595 = vmatpush1.bf16.msra.mxu0 0
      %596 = vmatprep.subr.bf16.mxu0 0
      %597 = vmatpush1.bf16.msra.mxu0 0
      %598 = vmatprep.subr.bf16.mxu0 0
      %599 = vmatpush1.bf16.msra.mxu0 0
      %600 = vmatprep.subr.bf16.mxu0 0
      %601 = vmatpush1.bf16.msra.mxu0 0
      %602 = vmatprep.subr.bf16.mxu0 0
      %603 = vmatpush1.bf16.msra.mxu0 0
      %604 = vmatprep.subr.bf16.mxu0 0
      %605 = vmatpush1.bf16.msra.mxu0 0
      %606 = vmatprep.subr.bf16.mxu0 0
      %607 = vmatpush1.bf16.msra.mxu0 0
      %608 = vmatprep.subr.bf16.mxu0 0
      %609 = vmatpush1.bf16.msra.mxu0 0
      %610 = vmatprep.subr.bf16.mxu0 0
      %611 = vmatpush1.bf16.msra.mxu0 0
      %612 = vmatprep.subr.bf16.mxu0 0
      %613 = vmatpush1.bf16.msra.mxu0 0
      %614 = vmatprep.subr.bf16.mxu0 0
      %615 = vmatpush1.bf16.msra.mxu0 0
      %616 = vmatprep.subr.bf16.mxu0 0
      %617 = vmatpush1.bf16.msra.mxu0 0
      %618 = vmatprep.subr.bf16.mxu0 0
      %619 = vmatpush1.bf16.msra.mxu0 0
      %620 = vmatprep.mubr.bf16.mxu0 0
      %621 = vmatmul.mubr.bf16.gmra.mrb[0].mxu0 %v577
      %v622 = vpop.f32.mrb[0].mxu0
      %v623 = vadd.f32 0.0, %v622
      %v624 = vpop.f32.mrb[0].mxu0
      %v625 = vpop.f32.mrb[0].mxu0
      %v626 = vadd.f32 0.0, %v625
      %v627 = vpop.f32.mrb[0].mxu0
      %628 = vmatprep.mubr.bf16.mxu0 0
      %629 = vmatmul.mubr.bf16.gmra.mrb[0].mxu0 %v580
      %v630 = vpop.f32.mrb[0].mxu0
      %v631 = vadd.f32 0.0, %v630
      %v632 = vpop.f32.mrb[0].mxu0
      %v633 = vpop.f32.mrb[0].mxu0
      %v634 = vadd.f32 0.0, %v633
      %v635 = vpop.f32.mrb[0].mxu0
      %636 = vmatprep.mubr.bf16.mxu0 0
      %637 = vmatmul.mubr.bf16.gmra.mrb[0].mxu0 %v583
      %v638 = vpop.f32.mrb[0].mxu0
      %v639 = vadd.f32 0.0, %v638
      %v640 = vpop.f32.mrb[0].mxu0
      %v641 = vpop.f32.mrb[0].mxu0
      %v642 = vadd.f32 0.0, %v641
      %v643 = vpop.f32.mrb[0].mxu0
      %644 = vmatprep.mubr.bf16.mxu0 0
      %645 = vmatmul.mubr.bf16.gmra.mrb[0].mxu0 %v586
      %v646 = vpop.f32.mrb[0].mxu0
      %v647 = vadd.f32 0.0, %v646
      %v648 = vpop.f32.mrb[0].mxu0
      %v649 = vpop.f32.mrb[0].mxu0
      %v650 = vadd.f32 0.0, %v649
      %v651 = vpop.f32.mrb[0].mxu0
      %652 = vdwg.mxu0
      %v653 = vadd.f32 %v482, %v623
      %v654 = vadd.f32 %v485, %v626
      %v655 = vadd.f32 %v490, %v631
      %v656 = vadd.f32 %v493, %v634
      %v657 = vadd.f32 %v498, %v639
      %v658 = vadd.f32 %v501, %v642
      %v659 = vadd.f32 %v506, %v647
      %v660 = vadd.f32 %v509, %v650
      %s661 = scalar_lea.vmem %s1, 24
      %v662 = vld [vmem:[%s661] sm:$0xf]
      %v663 = vld [vmem:[%s661 + $0x4] sm:$0xf]
      %v665 = vunpack.c.l.b16 %v189
      %v666 = vpack.c.b16 %v419, %v418
      %v667 = vpack.c.b16 %v421, %v420
      %v668 = vpack.c.b16 %v423, %v422
      %v669 = vpack.c.b16 %v665, %v424
      %v672 = vunpack.c.l.b16 %v662
      %v673 = vunpack.c.l.b16 %v663
      %v674 = vpack.c.b16 %v673, %v672
      %v677 = vsel %vm331, %v666, 0
      %v680 = vsel %vm331, %v667, 0
      %v683 = vsel %vm331, %v668, 0
      %v686 = vsel %vm331, %v669, 0
      %688 = vmatprep.subr.bf16.mxu0 0
      %689 = vmatpush1.bf16.msra.mxu0 %v674
      %690 = vmatprep.subr.bf16.mxu0 0
      %691 = vmatpush1.bf16.msra.mxu0 0
      %692 = vmatprep.subr.bf16.mxu0 0
      %693 = vmatpush1.bf16.msra.mxu0 0
      %694 = vmatprep.subr.bf16.mxu0 0
      %695 = vmatpush1.bf16.msra.mxu0 0
      %696 = vmatprep.subr.bf16.mxu0 0
      %697 = vmatpush1.bf16.msra.mxu0 0
      %698 = vmatprep.subr.bf16.mxu0 0
      %699 = vmatpush1.bf16.msra.mxu0 0
      %700 = vmatprep.subr.bf16.mxu0 0
      %701 = vmatpush1.bf16.msra.mxu0 0
      %702 = vmatprep.subr.bf16.mxu0 0
      %703 = vmatpush1.bf16.msra.mxu0 0
      %704 = vmatprep.subr.bf16.mxu0 0
      %705 = vmatpush1.bf16.msra.mxu0 0
      %706 = vmatprep.subr.bf16.mxu0 0
      %707 = vmatpush1.bf16.msra.mxu0 0
      %708 = vmatprep.subr.bf16.mxu0 0
      %709 = vmatpush1.bf16.msra.mxu0 0
      %710 = vmatprep.subr.bf16.mxu0 0
      %711 = vmatpush1.bf16.msra.mxu0 0
      %712 = vmatprep.subr.bf16.mxu0 0
      %713 = vmatpush1.bf16.msra.mxu0 0
      %714 = vmatprep.subr.bf16.mxu0 0
      %715 = vmatpush1.bf16.msra.mxu0 0
      %716 = vmatprep.subr.bf16.mxu0 0
      %717 = vmatpush1.bf16.msra.mxu0 0
      %718 = vmatprep.subr.bf16.mxu0 0
      %719 = vmatpush1.bf16.msra.mxu0 0
      %720 = vmatprep.mubr.bf16.mxu0 0
      %721 = vmatmul.mubr.bf16.gmra.mrb[0].mxu0 %v677
      %v722 = vpop.f32.mrb[0].mxu0
      %v723 = vadd.f32 0.0, %v722
      %v724 = vpop.f32.mrb[0].mxu0
      %v725 = vpop.f32.mrb[0].mxu0
      %v726 = vadd.f32 0.0, %v725
      %v727 = vpop.f32.mrb[0].mxu0
      %728 = vmatprep.mubr.bf16.mxu0 0
      %729 = vmatmul.mubr.bf16.gmra.mrb[0].mxu0 %v680
      %v730 = vpop.f32.mrb[0].mxu0
      %v731 = vadd.f32 0.0, %v730
      %v732 = vpop.f32.mrb[0].mxu0
      %v733 = vpop.f32.mrb[0].mxu0
      %v734 = vadd.f32 0.0, %v733
      %v735 = vpop.f32.mrb[0].mxu0
      %736 = vmatprep.mubr.bf16.mxu0 0
      %737 = vmatmul.mubr.bf16.gmra.mrb[0].mxu0 %v683
      %v738 = vpop.f32.mrb[0].mxu0
      %v739 = vadd.f32 0.0, %v738
      %v740 = vpop.f32.mrb[0].mxu0
      %v741 = vpop.f32.mrb[0].mxu0
      %v742 = vadd.f32 0.0, %v741
      %v743 = vpop.f32.mrb[0].mxu0
      %744 = vmatprep.mubr.bf16.mxu0 0
      %745 = vmatmul.mubr.bf16.gmra.mrb[0].mxu0 %v686
      %v746 = vpop.f32.mrb[0].mxu0
      %v747 = vadd.f32 0.0, %v746
      %v748 = vpop.f32.mrb[0].mxu0
      %v749 = vpop.f32.mrb[0].mxu0
      %v750 = vadd.f32 0.0, %v749
      %v751 = vpop.f32.mrb[0].mxu0
      %752 = vdwg.mxu0
      %v753 = vadd.f32 %v653, %v723
      %v754 = vadd.f32 %v654, %v726
      %v755 = vadd.f32 %v655, %v731
      %v756 = vadd.f32 %v656, %v734
      %v757 = vadd.f32 %v657, %v739
      %v758 = vadd.f32 %v658, %v742
      %v759 = vadd.f32 %v659, %v747
      %v760 = vadd.f32 %v660, %v750
      %v762 = vshrl.u32 %v189, 16
      %v764 = vrot.slane %v762, 4
      %v765 = vshll.u32 %v189, 16
      %v767 = vrot.slane %v765, 5
      %v768 = vor.u32 %v764, %v767
      %v769 = vrot.slane %v768, 4
      %v771 = vshll.u32 %v190, 16
      %v773 = vrot.slane %v771, 5
      %v774 = vsel %vm197, %v769, %v773
      %s775 = scalar_lea.vmem %s1, 32
      %v776 = vld [vmem:[%s775] sm:$0xf]
      %v777 = vld [vmem:[%s775 + $0x4] sm:$0xf]
      %v778 = vunpack.c.l.b16 %v774
      %v779 = vpack.c.b16 %v315, %v314
      %v780 = vpack.c.b16 %v317, %v316
      %v781 = vpack.c.b16 %v319, %v318
      %v782 = vpack.c.b16 %v778, %v320
      %v785 = vunpack.c.l.b16 %v776
      %v786 = vunpack.c.l.b16 %v777
      %v787 = vpack.c.b16 %v786, %v785
      %v790 = vsel %vm331, %v779, 0
      %v793 = vsel %vm331, %v780, 0
      %v796 = vsel %vm331, %v781, 0
      %v799 = vsel %vm331, %v782, 0
      %801 = vmatprep.subr.bf16.mxu0 0
      %802 = vmatpush1.bf16.msra.mxu0 %v787
      %803 = vmatprep.subr.bf16.mxu0 0
      %804 = vmatpush1.bf16.msra.mxu0 0
      %805 = vmatprep.subr.bf16.mxu0 0
      %806 = vmatpush1.bf16.msra.mxu0 0
      %807 = vmatprep.subr.bf16.mxu0 0
      %808 = vmatpush1.bf16.msra.mxu0 0
      %809 = vmatprep.subr.bf16.mxu0 0
      %810 = vmatpush1.bf16.msra.mxu0 0
      %811 = vmatprep.subr.bf16.mxu0 0
      %812 = vmatpush1.bf16.msra.mxu0 0
      %813 = vmatprep.subr.bf16.mxu0 0
      %814 = vmatpush1.bf16.msra.mxu0 0
      %815 = vmatprep.subr.bf16.mxu0 0
      %816 = vmatpush1.bf16.msra.mxu0 0
      %817 = vmatprep.subr.bf16.mxu0 0
      %818 = vmatpush1.bf16.msra.mxu0 0
      %819 = vmatprep.subr.bf16.mxu0 0
      %820 = vmatpush1.bf16.msra.mxu0 0
      %821 = vmatprep.subr.bf16.mxu0 0
      %822 = vmatpush1.bf16.msra.mxu0 0
      %823 = vmatprep.subr.bf16.mxu0 0
      %824 = vmatpush1.bf16.msra.mxu0 0
      %825 = vmatprep.subr.bf16.mxu0 0
      %826 = vmatpush1.bf16.msra.mxu0 0
      %827 = vmatprep.subr.bf16.mxu0 0
      %828 = vmatpush1.bf16.msra.mxu0 0
      %829 = vmatprep.subr.bf16.mxu0 0
      %830 = vmatpush1.bf16.msra.mxu0 0
      %831 = vmatprep.subr.bf16.mxu0 0
      %832 = vmatpush1.bf16.msra.mxu0 0
      %833 = vmatprep.mubr.bf16.mxu0 0
      %834 = vmatmul.mubr.bf16.gmra.mrb[0].mxu0 %v790
      %v835 = vpop.f32.mrb[0].mxu0
      %v836 = vadd.f32 0.0, %v835
      %v837 = vpop.f32.mrb[0].mxu0
      %v838 = vpop.f32.mrb[0].mxu0
      %v839 = vadd.f32 0.0, %v838
      %v840 = vpop.f32.mrb[0].mxu0
      %841 = vmatprep.mubr.bf16.mxu0 0
      %842 = vmatmul.mubr.bf16.gmra.mrb[0].mxu0 %v793
      %v843 = vpop.f32.mrb[0].mxu0
      %v844 = vadd.f32 0.0, %v843
      %v845 = vpop.f32.mrb[0].mxu0
      %v846 = vpop.f32.mrb[0].mxu0
      %v847 = vadd.f32 0.0, %v846
      %v848 = vpop.f32.mrb[0].mxu0
      %849 = vmatprep.mubr.bf16.mxu0 0
      %850 = vmatmul.mubr.bf16.gmra.mrb[0].mxu0 %v796
      %v851 = vpop.f32.mrb[0].mxu0
      %v852 = vadd.f32 0.0, %v851
      %v853 = vpop.f32.mrb[0].mxu0
      %v854 = vpop.f32.mrb[0].mxu0
      %v855 = vadd.f32 0.0, %v854
      %v856 = vpop.f32.mrb[0].mxu0
      %857 = vmatprep.mubr.bf16.mxu0 0
      %858 = vmatmul.mubr.bf16.gmra.mrb[0].mxu0 %v799
      %v859 = vpop.f32.mrb[0].mxu0
      %v860 = vadd.f32 0.0, %v859
      %v861 = vpop.f32.mrb[0].mxu0
      %v862 = vpop.f32.mrb[0].mxu0
      %v863 = vadd.f32 0.0, %v862
      %v864 = vpop.f32.mrb[0].mxu0
      %865 = vdwg.mxu0
      %v866 = vadd.f32 %v753, %v836
      %v867 = vadd.f32 %v754, %v839
      %v868 = vadd.f32 %v755, %v844
      %v869 = vadd.f32 %v756, %v847
      %v870 = vadd.f32 %v757, %v852
      %v871 = vadd.f32 %v758, %v855
      %v872 = vadd.f32 %v759, %v860
      %v873 = vadd.f32 %v760, %v863
      %v875 = vrot.slane %v189, 5
      %v876 = vrot.slane %v875, 4
      %v877 = vrot.slane %v190, 5
      %v878 = vsel %vm522, %v876, %v877
      %s879 = scalar_lea.vmem %s1, 40
      %v880 = vld [vmem:[%s879] sm:$0xf]
      %v881 = vld [vmem:[%s879 + $0x4] sm:$0xf]
      %v882 = vunpack.c.l.b16 %v878
      %v883 = vpack.c.b16 %v560, %v559
      %v884 = vpack.c.b16 %v562, %v561
      %v885 = vpack.c.b16 %v564, %v563
      %v886 = vpack.c.b16 %v882, %v565
      %v889 = vunpack.c.l.b16 %v880
      %v890 = vunpack.c.l.b16 %v881
      %v891 = vpack.c.b16 %v890, %v889
      %v894 = vsel %vm331, %v883, 0
      %v897 = vsel %vm331, %v884, 0
      %v900 = vsel %vm331, %v885, 0
      %v903 = vsel %vm331, %v886, 0
      %905 = vmatprep.subr.bf16.mxu0 0
      %906 = vmatpush1.bf16.msra.mxu0 %v891
      %907 = vmatprep.subr.bf16.mxu0 0
      %908 = vmatpush1.bf16.msra.mxu0 0
      %909 = vmatprep.subr.bf16.mxu0 0
      %910 = vmatpush1.bf16.msra.mxu0 0
      %911 = vmatprep.subr.bf16.mxu0 0
      %912 = vmatpush1.bf16.msra.mxu0 0
      %913 = vmatprep.subr.bf16.mxu0 0
      %914 = vmatpush1.bf16.msra.mxu0 0
      %915 = vmatprep.subr.bf16.mxu0 0
      %916 = vmatpush1.bf16.msra.mxu0 0
      %917 = vmatprep.subr.bf16.mxu0 0
      %918 = vmatpush1.bf16.msra.mxu0 0
      %919 = vmatprep.subr.bf16.mxu0 0
      %920 = vmatpush1.bf16.msra.mxu0 0
      %921 = vmatprep.subr.bf16.mxu0 0
      %922 = vmatpush1.bf16.msra.mxu0 0
      %923 = vmatprep.subr.bf16.mxu0 0
      %924 = vmatpush1.bf16.msra.mxu0 0
      %925 = vmatprep.subr.bf16.mxu0 0
      %926 = vmatpush1.bf16.msra.mxu0 0
      %927 = vmatprep.subr.bf16.mxu0 0
      %928 = vmatpush1.bf16.msra.mxu0 0
      %929 = vmatprep.subr.bf16.mxu0 0
      %930 = vmatpush1.bf16.msra.mxu0 0
      %931 = vmatprep.subr.bf16.mxu0 0
      %932 = vmatpush1.bf16.msra.mxu0 0
      %933 = vmatprep.subr.bf16.mxu0 0
      %934 = vmatpush1.bf16.msra.mxu0 0
      %935 = vmatprep.subr.bf16.mxu0 0
      %936 = vmatpush1.bf16.msra.mxu0 0
      %937 = vmatprep.mubr.bf16.mxu0 0
      %938 = vmatmul.mubr.bf16.gmra.mrb[0].mxu0 %v894
      %v939 = vpop.f32.mrb[0].mxu0
      %v940 = vadd.f32 0.0, %v939
      %v941 = vpop.f32.mrb[0].mxu0
      %v942 = vpop.f32.mrb[0].mxu0
      %v943 = vadd.f32 0.0, %v942
      %v944 = vpop.f32.mrb[0].mxu0
      %945 = vmatprep.mubr.bf16.mxu0 0
      %946 = vmatmul.mubr.bf16.gmra.mrb[0].mxu0 %v897
      %v947 = vpop.f32.mrb[0].mxu0
      %v948 = vadd.f32 0.0, %v947
      %v949 = vpop.f32.mrb[0].mxu0
      %v950 = vpop.f32.mrb[0].mxu0
      %v951 = vadd.f32 0.0, %v950
      %v952 = vpop.f32.mrb[0].mxu0
      %953 = vmatprep.mubr.bf16.mxu0 0
      %954 = vmatmul.mubr.bf16.gmra.mrb[0].mxu0 %v900
      %v955 = vpop.f32.mrb[0].mxu0
      %v956 = vadd.f32 0.0, %v955
      %v957 = vpop.f32.mrb[0].mxu0
      %v958 = vpop.f32.mrb[0].mxu0
      %v959 = vadd.f32 0.0, %v958
      %v960 = vpop.f32.mrb[0].mxu0
      %961 = vmatprep.mubr.bf16.mxu0 0
      %962 = vmatmul.mubr.bf16.gmra.mrb[0].mxu0 %v903
      %v963 = vpop.f32.mrb[0].mxu0
      %v964 = vadd.f32 0.0, %v963
      %v965 = vpop.f32.mrb[0].mxu0
      %v966 = vpop.f32.mrb[0].mxu0
      %v967 = vadd.f32 0.0, %v966
      %v968 = vpop.f32.mrb[0].mxu0
      %969 = vdwg.mxu0
      %v970 = vadd.f32 %v866, %v940
      %v971 = vadd.f32 %v867, %v943
      %v972 = vadd.f32 %v868, %v948
      %v973 = vadd.f32 %v869, %v951
      %v974 = vadd.f32 %v870, %v956
      %v975 = vadd.f32 %v871, %v959
      %v976 = vadd.f32 %v872, %v964
      %v977 = vadd.f32 %v873, %v967
      %s978 = scalar_lea.vmem %s1, 48
      %v979 = vld [vmem:[%s978] sm:$0xf]
      %v980 = vld [vmem:[%s978 + $0x4] sm:$0xf]
      %v982 = vunpack.c.l.b16 %v191
      %v983 = vpack.c.b16 %v982, %v665
      %v986 = vunpack.c.l.b16 %v979
      %v987 = vunpack.c.l.b16 %v980
      %v988 = vpack.c.b16 %v987, %v986
      %v991 = vsel %vm331, %v983, 0
      %993 = vmatprep.subr.bf16.mxu0 0
      %994 = vmatpush1.bf16.msra.mxu0 %v988
      %995 = vmatprep.subr.bf16.mxu0 0
      %996 = vmatpush1.bf16.msra.mxu0 0
      %997 = vmatprep.subr.bf16.mxu0 0
      %998 = vmatpush1.bf16.msra.mxu0 0
      %999 = vmatprep.subr.bf16.mxu0 0
      %1000 = vmatpush1.bf16.msra.mxu0 0
      %1001 = vmatprep.subr.bf16.mxu0 0
      %1002 = vmatpush1.bf16.msra.mxu0 0
      %1003 = vmatprep.subr.bf16.mxu0 0
      %1004 = vmatpush1.bf16.msra.mxu0 0
      %1005 = vmatprep.subr.bf16.mxu0 0
      %1006 = vmatpush1.bf16.msra.mxu0 0
      %1007 = vmatprep.subr.bf16.mxu0 0
      %1008 = vmatpush1.bf16.msra.mxu0 0
      %1009 = vmatprep.subr.bf16.mxu0 0
      %1010 = vmatpush1.bf16.msra.mxu0 0
      %1011 = vmatprep.subr.bf16.mxu0 0
      %1012 = vmatpush1.bf16.msra.mxu0 0
      %1013 = vmatprep.subr.bf16.mxu0 0
      %1014 = vmatpush1.bf16.msra.mxu0 0
      %1015 = vmatprep.subr.bf16.mxu0 0
      %1016 = vmatpush1.bf16.msra.mxu0 0
      %1017 = vmatprep.subr.bf16.mxu0 0
      %1018 = vmatpush1.bf16.msra.mxu0 0
      %1019 = vmatprep.subr.bf16.mxu0 0
      %1020 = vmatpush1.bf16.msra.mxu0 0
      %1021 = vmatprep.subr.bf16.mxu0 0
      %1022 = vmatpush1.bf16.msra.mxu0 0
      %1023 = vmatprep.subr.bf16.mxu0 0
      %1024 = vmatpush1.bf16.msra.mxu0 0
      %1025 = vmatprep.mubr.bf16.mxu0 0
      %1026 = vmatmul.mubr.bf16.gmra.mrb[0].mxu0 %v439
      %v1027 = vpop.f32.mrb[0].mxu0
      %v1028 = vadd.f32 0.0, %v1027
      %v1029 = vpop.f32.mrb[0].mxu0
      %v1030 = vpop.f32.mrb[0].mxu0
      %v1031 = vadd.f32 0.0, %v1030
      %v1032 = vpop.f32.mrb[0].mxu0
      %1033 = vmatprep.mubr.bf16.mxu0 0
      %1034 = vmatmul.mubr.bf16.gmra.mrb[0].mxu0 %v442
      %v1035 = vpop.f32.mrb[0].mxu0
      %v1036 = vadd.f32 0.0, %v1035
      %v1037 = vpop.f32.mrb[0].mxu0
      %v1038 = vpop.f32.mrb[0].mxu0
      %v1039 = vadd.f32 0.0, %v1038
      %v1040 = vpop.f32.mrb[0].mxu0
      %1041 = vmatprep.mubr.bf16.mxu0 0
      %1042 = vmatmul.mubr.bf16.gmra.mrb[0].mxu0 %v445
      %v1043 = vpop.f32.mrb[0].mxu0
      %v1044 = vadd.f32 0.0, %v1043
      %v1045 = vpop.f32.mrb[0].mxu0
      %v1046 = vpop.f32.mrb[0].mxu0
      %v1047 = vadd.f32 0.0, %v1046
      %v1048 = vpop.f32.mrb[0].mxu0
      %1049 = vmatprep.mubr.bf16.mxu0 0
      %1050 = vmatmul.mubr.bf16.gmra.mrb[0].mxu0 %v991
      %v1051 = vpop.f32.mrb[0].mxu0
      %v1052 = vadd.f32 0.0, %v1051
      %v1053 = vpop.f32.mrb[0].mxu0
      %v1054 = vpop.f32.mrb[0].mxu0
      %v1055 = vadd.f32 0.0, %v1054
      %v1056 = vpop.f32.mrb[0].mxu0
      %1057 = vdwg.mxu0
      %v1058 = vadd.f32 %v970, %v1028
      %v1059 = vadd.f32 %v971, %v1031
      %v1060 = vadd.f32 %v972, %v1036
      %v1061 = vadd.f32 %v973, %v1039
      %v1062 = vadd.f32 %v974, %v1044
      %v1063 = vadd.f32 %v975, %v1047
      %v1064 = vadd.f32 %v976, %v1052
      %v1065 = vadd.f32 %v977, %v1055
      %v1067 = vshrl.u32 %v191, 16
      %v1069 = vrot.slane %v1067, 4
      %v1070 = vshll.u32 %v191, 16
      %v1072 = vrot.slane %v1070, 5
      %v1073 = vor.u32 %v1069, %v1072
      %v1074 = vrot.slane %v1073, 4
      %v1076 = vshll.u32 %v192, 16
      %v1078 = vrot.slane %v1076, 5
      %v1079 = vsel %vm197, %v1074, %v1078
      %s1080 = scalar_lea.vmem %s1, 56
      %v1081 = vld [vmem:[%s1080] sm:$0xf]
      %v1082 = vld [vmem:[%s1080 + $0x4] sm:$0xf]
      %v1083 = vunpack.c.l.b16 %v1079
      %v1084 = vpack.c.b16 %v1083, %v778
      %v1087 = vunpack.c.l.b16 %v1081
      %v1088 = vunpack.c.l.b16 %v1082
      %v1089 = vpack.c.b16 %v1088, %v1087
      %v1092 = vsel %vm331, %v1084, 0
      %1094 = vmatprep.subr.bf16.mxu0 0
      %1095 = vmatpush1.bf16.msra.mxu0 %v1089
      %1096 = vmatprep.subr.bf16.mxu0 0
      %1097 = vmatpush1.bf16.msra.mxu0 0
      %1098 = vmatprep.subr.bf16.mxu0 0
      %1099 = vmatpush1.bf16.msra.mxu0 0
      %1100 = vmatprep.subr.bf16.mxu0 0
      %1101 = vmatpush1.bf16.msra.mxu0 0
      %1102 = vmatprep.subr.bf16.mxu0 0
      %1103 = vmatpush1.bf16.msra.mxu0 0
      %1104 = vmatprep.subr.bf16.mxu0 0
      %1105 = vmatpush1.bf16.msra.mxu0 0
      %1106 = vmatprep.subr.bf16.mxu0 0
      %1107 = vmatpush1.bf16.msra.mxu0 0
      %1108 = vmatprep.subr.bf16.mxu0 0
      %1109 = vmatpush1.bf16.msra.mxu0 0
      %1110 = vmatprep.subr.bf16.mxu0 0
      %1111 = vmatpush1.bf16.msra.mxu0 0
      %1112 = vmatprep.subr.bf16.mxu0 0
      %1113 = vmatpush1.bf16.msra.mxu0 0
      %1114 = vmatprep.subr.bf16.mxu0 0
      %1115 = vmatpush1.bf16.msra.mxu0 0
      %1116 = vmatprep.subr.bf16.mxu0 0
      %1117 = vmatpush1.bf16.msra.mxu0 0
      %1118 = vmatprep.subr.bf16.mxu0 0
      %1119 = vmatpush1.bf16.msra.mxu0 0
      %1120 = vmatprep.subr.bf16.mxu0 0
      %1121 = vmatpush1.bf16.msra.mxu0 0
      %1122 = vmatprep.subr.bf16.mxu0 0
      %1123 = vmatpush1.bf16.msra.mxu0 0
      %1124 = vmatprep.subr.bf16.mxu0 0
      %1125 = vmatpush1.bf16.msra.mxu0 0
      %1126 = vmatprep.mubr.bf16.mxu0 0
      %1127 = vmatmul.mubr.bf16.gmra.mrb[0].mxu0 %v336
      %v1128 = vpop.f32.mrb[0].mxu0
      %v1129 = vadd.f32 0.0, %v1128
      %v1130 = vpop.f32.mrb[0].mxu0
      %v1131 = vpop.f32.mrb[0].mxu0
      %v1132 = vadd.f32 0.0, %v1131
      %v1133 = vpop.f32.mrb[0].mxu0
      %1134 = vmatprep.mubr.bf16.mxu0 0
      %1135 = vmatmul.mubr.bf16.gmra.mrb[0].mxu0 %v339
      %v1136 = vpop.f32.mrb[0].mxu0
      %v1137 = vadd.f32 0.0, %v1136
      %v1138 = vpop.f32.mrb[0].mxu0
      %v1139 = vpop.f32.mrb[0].mxu0
      %v1140 = vadd.f32 0.0, %v1139
      %v1141 = vpop.f32.mrb[0].mxu0
      %1142 = vmatprep.mubr.bf16.mxu0 0
      %1143 = vmatmul.mubr.bf16.gmra.mrb[0].mxu0 %v342
      %v1144 = vpop.f32.mrb[0].mxu0
      %v1145 = vadd.f32 0.0, %v1144
      %v1146 = vpop.f32.mrb[0].mxu0
      %v1147 = vpop.f32.mrb[0].mxu0
      %v1148 = vadd.f32 0.0, %v1147
      %v1149 = vpop.f32.mrb[0].mxu0
      %1150 = vmatprep.mubr.bf16.mxu0 0
      %1151 = vmatmul.mubr.bf16.gmra.mrb[0].mxu0 %v1092
      %v1152 = vpop.f32.mrb[0].mxu0
      %v1153 = vadd.f32 0.0, %v1152
      %v1154 = vpop.f32.mrb[0].mxu0
      %v1155 = vpop.f32.mrb[0].mxu0
      %v1156 = vadd.f32 0.0, %v1155
      %v1157 = vpop.f32.mrb[0].mxu0
      %1158 = vdwg.mxu0
      %v1159 = vadd.f32 %v1058, %v1129
      %v1160 = vadd.f32 %v1059, %v1132
      %v1161 = vadd.f32 %v1060, %v1137
      %v1162 = vadd.f32 %v1061, %v1140
      %v1163 = vadd.f32 %v1062, %v1145
      %v1164 = vadd.f32 %v1063, %v1148
      %v1165 = vadd.f32 %v1064, %v1153
      %v1166 = vadd.f32 %v1065, %v1156
      %v1168 = vrot.slane %v191, 5
      %v1169 = vrot.slane %v1168, 4
      %v1170 = vrot.slane %v192, 5
      %v1171 = vsel %vm522, %v1169, %v1170
      %s1172 = scalar_lea.vmem %s1, 64
      %v1173 = vld [vmem:[%s1172] sm:$0xf]
      %v1174 = vld [vmem:[%s1172 + $0x4] sm:$0xf]
      %v1175 = vunpack.c.l.b16 %v1171
      %v1176 = vpack.c.b16 %v1175, %v882
      %v1179 = vunpack.c.l.b16 %v1173
      %v1180 = vunpack.c.l.b16 %v1174
      %v1181 = vpack.c.b16 %v1180, %v1179
      %v1184 = vsel %vm331, %v1176, 0
      %1186 = vmatprep.subr.bf16.mxu0 0
      %1187 = vmatpush1.bf16.msra.mxu0 %v1181
      %1188 = vmatprep.subr.bf16.mxu0 0
      %1189 = vmatpush1.bf16.msra.mxu0 0
      %1190 = vmatprep.subr.bf16.mxu0 0
      %1191 = vmatpush1.bf16.msra.mxu0 0
      %1192 = vmatprep.subr.bf16.mxu0 0
      %1193 = vmatpush1.bf16.msra.mxu0 0
      %1194 = vmatprep.subr.bf16.mxu0 0
      %1195 = vmatpush1.bf16.msra.mxu0 0
      %1196 = vmatprep.subr.bf16.mxu0 0
      %1197 = vmatpush1.bf16.msra.mxu0 0
      %1198 = vmatprep.subr.bf16.mxu0 0
      %1199 = vmatpush1.bf16.msra.mxu0 0
      %1200 = vmatprep.subr.bf16.mxu0 0
      %1201 = vmatpush1.bf16.msra.mxu0 0
      %1202 = vmatprep.subr.bf16.mxu0 0
      %1203 = vmatpush1.bf16.msra.mxu0 0
      %1204 = vmatprep.subr.bf16.mxu0 0
      %1205 = vmatpush1.bf16.msra.mxu0 0
      %1206 = vmatprep.subr.bf16.mxu0 0
      %1207 = vmatpush1.bf16.msra.mxu0 0
      %1208 = vmatprep.subr.bf16.mxu0 0
      %1209 = vmatpush1.bf16.msra.mxu0 0
      %1210 = vmatprep.subr.bf16.mxu0 0
      %1211 = vmatpush1.bf16.msra.mxu0 0
      %1212 = vmatprep.subr.bf16.mxu0 0
      %1213 = vmatpush1.bf16.msra.mxu0 0
      %1214 = vmatprep.subr.bf16.mxu0 0
      %1215 = vmatpush1.bf16.msra.mxu0 0
      %1216 = vmatprep.subr.bf16.mxu0 0
      %1217 = vmatpush1.bf16.msra.mxu0 0
      %1218 = vmatprep.mubr.bf16.mxu0 0
      %1219 = vmatmul.mubr.bf16.gmra.mrb[0].mxu0 %v580
      %v1220 = vpop.f32.mrb[0].mxu0
      %v1221 = vadd.f32 0.0, %v1220
      %v1222 = vpop.f32.mrb[0].mxu0
      %v1223 = vpop.f32.mrb[0].mxu0
      %v1224 = vadd.f32 0.0, %v1223
      %v1225 = vpop.f32.mrb[0].mxu0
      %1226 = vmatprep.mubr.bf16.mxu0 0
      %1227 = vmatmul.mubr.bf16.gmra.mrb[0].mxu0 %v583
      %v1228 = vpop.f32.mrb[0].mxu0
      %v1229 = vadd.f32 0.0, %v1228
      %v1230 = vpop.f32.mrb[0].mxu0
      %v1231 = vpop.f32.mrb[0].mxu0
      %v1232 = vadd.f32 0.0, %v1231
      %v1233 = vpop.f32.mrb[0].mxu0
      %1234 = vmatprep.mubr.bf16.mxu0 0
      %1235 = vmatmul.mubr.bf16.gmra.mrb[0].mxu0 %v586
      %v1236 = vpop.f32.mrb[0].mxu0
      %v1237 = vadd.f32 0.0, %v1236
      %v1238 = vpop.f32.mrb[0].mxu0
      %v1239 = vpop.f32.mrb[0].mxu0
      %v1240 = vadd.f32 0.0, %v1239
      %v1241 = vpop.f32.mrb[0].mxu0
      %1242 = vmatprep.mubr.bf16.mxu0 0
      %1243 = vmatmul.mubr.bf16.gmra.mrb[0].mxu0 %v1184
      %v1244 = vpop.f32.mrb[0].mxu0
      %v1245 = vadd.f32 0.0, %v1244
      %v1246 = vpop.f32.mrb[0].mxu0
      %v1247 = vpop.f32.mrb[0].mxu0
      %v1248 = vadd.f32 0.0, %v1247
      %v1249 = vpop.f32.mrb[0].mxu0
      %1250 = vdwg.mxu0
      %v1251 = vadd.f32 %v1159, %v1221
      %v1252 = vadd.f32 %v1160, %v1224
      %v1253 = vadd.f32 %v1161, %v1229
      %v1254 = vadd.f32 %v1162, %v1232
      %v1255 = vadd.f32 %v1163, %v1237
      %v1256 = vadd.f32 %v1164, %v1240
      %v1257 = vadd.f32 %v1165, %v1245
      %v1258 = vadd.f32 %v1166, %v1248
      %v1259 = vld [vmem:[%s2] sm:$0x1]
      %v1261 = vlaneseq
      %v1262 = vshrl.u32 %v1261, 7
      %v1263 = vsub.s32 0, %v1262
      %v1264 = vrot.slane %v1259, %v1263
      %v1266 = vadd.f32 %v1251, %v1264
      %v1267 = vadd.f32 %v1252, %v1264
      %v1268 = vadd.f32 %v1253, %v1264
      %v1269 = vadd.f32 %v1254, %v1264
      %v1270 = vadd.f32 %v1255, %v1264
      %v1271 = vadd.f32 %v1256, %v1264
      %v1272 = vadd.f32 %v1257, %v1264
      %v1273 = vadd.f32 %v1258, %v1264
      %v1274 = vmin.f32 %v1266, 20.0
      %v1275 = vmin.f32 %v1267, 20.0
      %v1276 = vmin.f32 %v1268, 20.0
      %v1277 = vmin.f32 %v1269, 20.0
      %v1278 = vmin.f32 %v1270, 20.0
      %v1279 = vmin.f32 %v1271, 20.0
      %v1280 = vmin.f32 %v1272, 20.0
      %v1281 = vmin.f32 %v1273, 20.0
      %v1282 = vmul.f32 %v1274, 1.442695
      %v1283 = vpow.pop %v1282
      %v1284 = vmul.f32 %v1275, 1.442695
      %v1285 = vpow.pop %v1284
      %v1286 = vmul.f32 %v1276, 1.442695
      %v1287 = vpow.pop %v1286
      %v1288 = vmul.f32 %v1277, 1.442695
      %v1289 = vpow.pop %v1288
      %v1290 = vmul.f32 %v1278, 1.442695
      %v1291 = vpow.pop %v1290
      %v1292 = vmul.f32 %v1279, 1.442695
      %v1293 = vpow.pop %v1292
      %v1294 = vmul.f32 %v1280, 1.442695
      %v1295 = vpow.pop %v1294
      %v1296 = vmul.f32 %v1281, 1.442695
      %v1297 = vpow.pop %v1296
      %v1298 = vadd.f32 %v1283, 2.0
      %v1299 = vadd.f32 %v1285, 2.0
      %v1300 = vadd.f32 %v1287, 2.0
      %v1301 = vadd.f32 %v1289, 2.0
      %v1302 = vadd.f32 %v1291, 2.0
      %v1303 = vadd.f32 %v1293, 2.0
      %v1304 = vadd.f32 %v1295, 2.0
      %v1305 = vadd.f32 %v1297, 2.0
      %v1306 = vmul.f32 %v1283, %v1298
      %v1307 = vmul.f32 %v1285, %v1299
      %v1308 = vmul.f32 %v1287, %v1300
      %v1309 = vmul.f32 %v1289, %v1301
      %v1310 = vmul.f32 %v1291, %v1302
      %v1311 = vmul.f32 %v1293, %v1303
      %v1312 = vmul.f32 %v1295, %v1304
      %v1313 = vmul.f32 %v1297, %v1305
      %v1314 = vmul.f32 %v1266, %v1306
      %v1315 = vmul.f32 %v1267, %v1307
      %v1316 = vmul.f32 %v1268, %v1308
      %v1317 = vmul.f32 %v1269, %v1309
      %v1318 = vmul.f32 %v1270, %v1310
      %v1319 = vmul.f32 %v1271, %v1311
      %v1320 = vmul.f32 %v1272, %v1312
      %v1321 = vmul.f32 %v1273, %v1313
      %v1322 = vadd.f32 %v1306, 2.0
      %v1323 = vadd.f32 %v1307, 2.0
      %v1324 = vadd.f32 %v1308, 2.0
      %v1325 = vadd.f32 %v1309, 2.0
      %v1326 = vadd.f32 %v1310, 2.0
      %v1327 = vadd.f32 %v1311, 2.0
      %v1328 = vadd.f32 %v1312, 2.0
      %v1329 = vadd.f32 %v1313, 2.0
      %v1330 = vrcp.pop %v1322
      %v1331 = vrcp.pop %v1323
      %v1332 = vrcp.pop %v1324
      %v1333 = vrcp.pop %v1325
      %v1334 = vrcp.pop %v1326
      %v1335 = vrcp.pop %v1327
      %v1336 = vrcp.pop %v1328
      %v1337 = vrcp.pop %v1329
      %v1338 = vmul.f32 %v1314, %v1330
      %v1339 = vmul.f32 %v1315, %v1331
      %v1340 = vmul.f32 %v1316, %v1332
      %v1341 = vmul.f32 %v1317, %v1333
      %v1342 = vmul.f32 %v1318, %v1334
      %v1343 = vmul.f32 %v1319, %v1335
      %v1344 = vmul.f32 %v1320, %v1336
      %v1345 = vmul.f32 %v1321, %v1337
      %vm1346 = vcmp.gt.f32.partialorder %v1266, 20.0
      %vm1347 = vcmp.gt.f32.partialorder %v1267, 20.0
      %vm1348 = vcmp.gt.f32.partialorder %v1268, 20.0
      %vm1349 = vcmp.gt.f32.partialorder %v1269, 20.0
      %vm1350 = vcmp.gt.f32.partialorder %v1270, 20.0
      %vm1351 = vcmp.gt.f32.partialorder %v1271, 20.0
      %vm1352 = vcmp.gt.f32.partialorder %v1272, 20.0
      %vm1353 = vcmp.gt.f32.partialorder %v1273, 20.0
      %v1354 = vsel %vm1346, %v1266, %v1338
      %v1355 = vsel %vm1347, %v1267, %v1339
      %v1356 = vsel %vm1348, %v1268, %v1340
      %v1357 = vsel %vm1349, %v1269, %v1341
      %v1358 = vsel %vm1350, %v1270, %v1342
      %v1359 = vsel %vm1351, %v1271, %v1343
      %v1360 = vsel %vm1352, %v1272, %v1344
      %v1361 = vsel %vm1353, %v1273, %v1345
      %v1362 = vpack.c.bf16 %v1355, %v1354
      %v1363 = vpack.c.bf16 %v1357, %v1356
      %v1364 = vpack.c.bf16 %v1359, %v1358
      %v1365 = vpack.c.bf16 %v1361, %v1360
      %v1370 = vunpack.c.l.b16 %v1362
      %v1371 = vunpack.c.h.b16 %v1362
      %v1372 = vunpack.c.l.b16 %v1363
      %v1373 = vunpack.c.h.b16 %v1363
      %v1374 = vunpack.c.l.b16 %v1364
      %v1375 = vunpack.c.h.b16 %v1364
      %v1376 = vunpack.c.l.b16 %v1365
      %v1377 = vunpack.c.h.b16 %v1365
      %v1378 = vpack.c.b16 %v1370, %v1370
      %v1379 = vpack.c.b16 %v1371, %v1371
      %v1380 = vpack.c.b16 %v1372, %v1372
      %v1381 = vpack.c.b16 %v1373, %v1373
      %v1382 = vpack.c.b16 %v1374, %v1374
      %v1383 = vpack.c.b16 %v1375, %v1375
      %v1384 = vpack.c.b16 %v1376, %v1376
      %v1385 = vpack.c.b16 %v1377, %v1377
      %1394 = vst [vmem:[%s170] sm:$0xf] %v1378
      %1395 = vst [vmem:[%s170 + $0x4] sm:$0xf] %v1379
      %1396 = vst [vmem:[%s170 + $0x8] sm:$0xf] %v1380
      %1397 = vst [vmem:[%s170 + $0xc] sm:$0xf] %v1381
      %1398 = vst [vmem:[%s170 + $0x10] sm:$0xf] %v1382
      %1399 = vst [vmem:[%s170 + $0x14] sm:$0xf] %v1383
      %1400 = vst [vmem:[%s170 + $0x18] sm:$0xf] %v1384
      %1401 = vst [vmem:[%s170 + $0x1c] sm:$0xf] %v1385
      %s1402 = smul.u32 8, %s14
      %p1403 = scmp.lt.s32.totalorder %s1402, 15
      %s1404 = scalar_select %p1403, %s1402, 15
      %s1405 = smul.addr %s1404, 4
      %s1406 = scalar_lea.vmem %s3, %s1405
      // Predicated region
      $region33: #{res_down_conv_block.4} parent=31 // pred_check
        %p1407 = pneg %p100
      $region34: #{res_down_conv_block.4} parent=31 // pred_check_branch
        %1409 = sbr.rel (%p1407) target = $region36
      $region35: #{res_down_conv_block.4} parent=31 // pred_region
        %s1410 = smul.u32 8, %s14
      $region36: #{res_down_conv_block.4} parent=31 // pred_fallthru
        _
    $region32: #{res_down_conv_block.4} parent=5 // pred_fallthru
      _
    %p1411 = scmp.le.s32.totalorder 2, %s9
    // Predicated region
    $region37: #{res_down_conv_block.4} parent=5 // pred_check
      %p1412 = pneg %p1411
    $region38: #{res_down_conv_block.4} parent=5 // pred_check_branch
      %1414 = sbr.rel (%p1412) target = $region40
    $region39: #{res_down_conv_block.4} parent=5 // pred_region
      %s1415 = ssub.s32 %s9, 2
      // Predicated region
      $region41: #{res_down_conv_block.4} parent=39 // pred_check
        %p1416 = pneg %p106
      $region42: #{res_down_conv_block.4} parent=39 // pred_check_branch
        %1418 = sbr.rel (%p1416) target = $region44
      $region43: #{res_down_conv_block.4} parent=39 // pred_region
        %s1419 = smul.u32 8, %s15
        %p1420 = scmp.lt.s32.totalorder %s1419, 15
        %s1421 = scalar_select %p1420, %s1419, 15
        %s1422 = smul.addr %s1421, 4
        %s1423 = scalar_lea.vmem %s3, %s1422
      $region44: #{res_down_conv_block.4} parent=39 // pred_fallthru
        _
    $region40: #{res_down_conv_block.4} parent=5 // pred_fallthru
      _
  $region6: #{res_down_conv_block.4} parent=0 // loop_footer
    %s13 = sadd.s32 1, %s9
  $region7: #{res_down_conv_block.4} parent=0 // loop_footer_branch
    %8 = sbr.rel target = $region3
  $region8: #{res_down_conv_block.4} parent=0 // loop_exit
    _

// kernel: res_down_conv_block.5
$region0: #{res_down_conv_block.5}
  #allocation0 [shape = 'u32[]', space=smem, size = 0x4, offset = 0x4, fixed_abs, tag = 'smem constant byte address 0x4 - core index']
  #allocation1 [shape = 'u32[144,128]{1,0:T(1,128)}', space=vmem, size = 0x12000, scoped, tag = 'internal scratch']
  %s0 = inlined_call_operand.vmem [shape: bf16[2,10,10,128], index: 0, kind: input, shape index: {}]
  %s1 = inlined_call_operand.vmem [shape: bf16[9,128,128], index: 1, kind: input, shape index: {}]
  %s2 = inlined_call_operand.vmem [shape: f32[1,128], index: 2, kind: input, shape index: {}]
  %s3 = inlined_call_operand.vmem [shape: f32[128,128], index: 3, kind: input, shape index: {}]
  %s4 = inlined_call_operand.hbm [shape: f32[128,128], index: 4, kind: output, shape index: {}]
  %s5 = sld [smem:[#allocation0]]
  $region49: #{res_down_conv_block.5} parent=0
    _
  %s7 = ssub.s32 1, %s5
  %s8 = scalar_select 0, %s7, %s5
  $region1: #{res_down_conv_block.5} parent=0
    #allocation2 [shape = 'u8[65536]{0}', space=vmem, size = 0x10000, scoped, tag = 'output window, operand 0']
    #allocation3 [shape = 's32[2]{0}', space=sflag, size = 0x8, scoped, tag = 'scoped memory for res_down_conv_block.5']
    %9 = vsyncpa [#allocation3], 0
    %s10 = scalar_lea.sflag [#allocation3], 1
    %11 = vsyncpa %s10, 0
    loop: start=0, step=1, limit=4
    $region2: #{res_down_conv_block.5} parent=1 // loop_pre_header
      _
    $region3: #{res_down_conv_block.5} parent=1 // loop_header
      %s13 = sphi 0, %s17
      %p14 = scmp.ge.s32.totalorder %s13, 4
      %s23 = sphi 0, %s25
      %s26 = sphi 0, %s23
      %s27 = sphi 0, %s26
      %s43 = sphi 0, %s27
      %s47 = sphi 0, %s47
      %s49 = sphi 0, %s47
      %s50 = sphi 0, %s49
      %s64 = sphi 0, %s50
      %s68 = sphi 0, %s68
      %s70 = sphi 0, %s68
      %s71 = sphi 0, %s70
      %s85 = sphi 0, %s71
      %s91 = sphi 0, %s93
      %s94 = sphi 0, %s91
      %s95 = sphi 0, %s94
      %s111 = sphi 0, %s95
      %s117 = sphi 0, %s119
      %s120 = sphi 0, %s117
      %s121 = sphi 0, %s120
      %s137 = sphi 0, %s121
    $region4: #{res_down_conv_block.5} parent=1 // loop_header_branch
      %16 = sbr.rel (%p14) target = $region8
    $region5: #{res_down_conv_block.5} parent=1 // loop_body
      %s18 = ssub.s32 %s13, 1
      %s19 = ssub.s32 %s13, 2
      %s20 = sadd.s32 %s13, 1
      %s21 = ssub.s32 %s13, %s20
      %p22 = scmp.eq.s32.totalorder %s21, 0
      %s24 = sadd.s32 %s23, 1
      %s25 = scalar_select %p22, %s23, %s24
      %p28 = pneg %p22
      %p29 = scmp.eq.s32.totalorder %s13, 1
      %p30 = por %p28, %p29
      %p31 = scmp.ne.s32.totalorder %s23, %s26
      %p32 = scmp.eq.s32.totalorder %s13, 0
      %p33 = por %p31, %p32
      %p34 = scmp.ne.s32.totalorder %s23, %s26
      %p35 = scmp.eq.s32.totalorder %s18, 1
      %p36 = por %p34, %p35
      %p37 = scmp.ne.s32.totalorder %s26, %s27
      %p38 = scmp.eq.s32.totalorder %s18, 0
      %p39 = por %p37, %p38
      %p40 = scmp.ne.s32.totalorder %s26, %s27
      %p41 = scmp.eq.s32.totalorder %s19, 1
      %p42 = por %p40, %p41
      %p44 = scmp.ne.s32.totalorder %s27, %s43
      %p45 = scmp.eq.s32.totalorder %s19, 0
      %p46 = por %p44, %p45
      %s48 = sadd.s32 %s47, 1
      %p51 = scmp.eq.s32.totalorder %s13, 1
      %p52 = scmp.ne.s32.totalorder %s47, %s49
      %p53 = scmp.eq.s32.totalorder %s13, 0
      %p54 = por %p52, %p53
      %p55 = scmp.ne.s32.totalorder %s47, %s49
      %p56 = scmp.eq.s32.totalorder %s18, 1
      %p57 = por %p55, %p56
      %p58 = scmp.ne.s32.totalorder %s49, %s50
      %p59 = scmp.eq.s32.totalorder %s18, 0
      %p60 = por %p58, %p59
      %p61 = scmp.ne.s32.totalorder %s49, %s50
      %p62 = scmp.eq.s32.totalorder %s19, 1
      %p63 = por %p61, %p62
      %p65 = scmp.ne.s32.totalorder %s50, %s64
      %p66 = scmp.eq.s32.totalorder %s19, 0
      %p67 = por %p65, %p66
      %s69 = sadd.s32 %s68, 1
      %p72 = scmp.eq.s32.totalorder %s13, 1
      %p73 = scmp.ne.s32.totalorder %s68, %s70
      %p74 = scmp.eq.s32.totalorder %s13, 0
      %p75 = por %p73, %p74
      %p76 = scmp.ne.s32.totalorder %s68, %s70
      %p77 = scmp.eq.s32.totalorder %s18, 1
      %p78 = por %p76, %p77
      %p79 = scmp.ne.s32.totalorder %s70, %s71
      %p80 = scmp.eq.s32.totalorder %s18, 0
      %p81 = por %p79, %p80
      %p82 = scmp.ne.s32.totalorder %s70, %s71
      %p83 = scmp.eq.s32.totalorder %s19, 1
      %p84 = por %p82, %p83
      %p86 = scmp.ne.s32.totalorder %s71, %s85
      %p87 = scmp.eq.s32.totalorder %s19, 0
      %p88 = por %p86, %p87
      %s89 = ssub.s32 %s13, %s20
      %p90 = scmp.eq.s32.totalorder %s89, 0
      %s92 = sadd.s32 %s91, 1
      %s93 = scalar_select %p90, %s91, %s92
      %p96 = pneg %p90
      %p97 = scmp.eq.s32.totalorder %s13, 1
      %p98 = por %p96, %p97
      %p99 = scmp.ne.s32.totalorder %s91, %s94
      %p100 = scmp.eq.s32.totalorder %s13, 0
      %p101 = por %p99, %p100
      %p102 = scmp.ne.s32.totalorder %s91, %s94
      %p103 = scmp.eq.s32.totalorder %s18, 1
      %p104 = por %p102, %p103
      %p105 = scmp.ne.s32.totalorder %s94, %s95
      %p106 = scmp.eq.s32.totalorder %s18, 0
      %p107 = por %p105, %p106
      %p108 = scmp.ne.s32.totalorder %s94, %s95
      %p109 = scmp.eq.s32.totalorder %s19, 1
      %p110 = por %p108, %p109
      %p112 = scmp.ne.s32.totalorder %s95, %s111
      %p113 = scmp.eq.s32.totalorder %s19, 0
      %p114 = por %p112, %p113
      %s115 = ssub.s32 %s13, %s20
      %p116 = scmp.eq.s32.totalorder %s115, 0
      %s118 = sadd.s32 %s117, 1
      %s119 = scalar_select %p116, %s117, %s118
      %p122 = pneg %p116
      %p123 = scmp.eq.s32.totalorder %s13, 1
      %p124 = por %p122, %p123
      %p125 = scmp.ne.s32.totalorder %s117, %s120
      %p126 = scmp.eq.s32.totalorder %s13, 0
      %p127 = por %p125, %p126
      %p128 = scmp.ne.s32.totalorder %s117, %s120
      %p129 = scmp.eq.s32.totalorder %s18, 1
      %p130 = por %p128, %p129
      %p131 = scmp.ne.s32.totalorder %s120, %s121
      %p132 = scmp.eq.s32.totalorder %s18, 0
      %p133 = por %p131, %p132
      %p134 = scmp.ne.s32.totalorder %s120, %s121
      %p135 = scmp.eq.s32.totalorder %s19, 1
      %p136 = por %p134, %p135
      %p138 = scmp.ne.s32.totalorder %s121, %s137
      %p139 = scmp.eq.s32.totalorder %s19, 0
      %p140 = por %p138, %p139
      %p141 = scmp.le.s32.totalorder 1, %s13
      %p142 = scmp.lt.s32.totalorder %s13, 3
      %p143 = pnand %p141, %p142
      %p144 = pneg %p143
      // Predicated region
      $region9: #{res_down_conv_block.5} parent=5 // pred_check
        _
      $region10: #{res_down_conv_block.5} parent=5 // pred_check_branch
        %146 = sbr.rel (%p143) target = $region12
      $region11: #{res_down_conv_block.5} parent=5 // pred_region
        %s147 = ssub.s32 %s13, 1
        // Predicated region
        $region13: #{res_down_conv_block.5} parent=11 // pred_check
          %p148 = pneg %p60
        $region14: #{res_down_conv_block.5} parent=11 // pred_check_branch
          %150 = sbr.rel (%p148) target = $region16
        $region15: #{res_down_conv_block.5} parent=11 // pred_region
          _
        $region16: #{res_down_conv_block.5} parent=11 // pred_fallthru
          _
        // Predicated region
        $region17: #{res_down_conv_block.5} parent=11 // pred_check
          %p151 = pneg %p81
        $region18: #{res_down_conv_block.5} parent=11 // pred_check_branch
          %153 = sbr.rel (%p151) target = $region20
        $region19: #{res_down_conv_block.5} parent=11 // pred_region
          _
        $region20: #{res_down_conv_block.5} parent=11 // pred_fallthru
          _
      $region12: #{res_down_conv_block.5} parent=5 // pred_fallthru
        _
      %p154 = scmp.lt.s32.totalorder %s13, 2
      // Predicated region
      $region21: #{res_down_conv_block.5} parent=5 // pred_check
        %p155 = pneg %p154
      $region22: #{res_down_conv_block.5} parent=5 // pred_check_branch
        %157 = sbr.rel (%p155) target = $region24
      $region23: #{res_down_conv_block.5} parent=5 // pred_region
        // Predicated region
        $region25: #{res_down_conv_block.5} parent=23 // pred_check
          %p158 = pneg %p33
        $region26: #{res_down_conv_block.5} parent=23 // pred_check_branch
          %160 = sbr.rel (%p158) target = $region28
        $region27: #{res_down_conv_block.5} parent=23 // pred_region
          %p161 = scmp.lt.s32.totalorder %s13, 1
          %s162 = scalar_select %p161, %s13, 1
          %s163 = smul.addr %s162, 20
          %s164 = smul.addr %s163, 4
          %s165 = scalar_lea.vmem %s0, %s164
        $region28: #{res_down_conv_block.5} parent=23 // pred_fallthru
          _
        // Predicated region
        $region29: #{res_down_conv_block.5} parent=23 // pred_check
          %p166 = pneg %p101
        $region30: #{res_down_conv_block.5} parent=23 // pred_check_branch
          %168 = sbr.rel (%p166) target = $region32
        $region31: #{res_down_conv_block.5} parent=23 // pred_region
          %s169 = smul.u32 8, %s13
          %p170 = scmp.lt.s32.totalorder %s169, 15
          %s171 = scalar_select %p170, %s169, 15
          %s172 = smul.addr %s171, 8
          %s173 = scalar_lea.vmem %s3, %s172
          %s174 = smul.u32 8, %s13
        $region32: #{res_down_conv_block.5} parent=23 // pred_fallthru
          _
      $region24: #{res_down_conv_block.5} parent=5 // pred_fallthru
        _
      %p175 = scmp.le.s32.totalorder 1, %s13
      %p176 = scmp.lt.s32.totalorder %s13, 3
      %p177 = pnand %p175, %p176
      %p178 = pneg %p177
      // Predicated region
      $region33: #{res_down_conv_block.5} parent=5 // pred_check
        _
      $region34: #{res_down_conv_block.5} parent=5 // pred_check_branch
        %180 = sbr.rel (%p177) target = $region36
      $region35: #{res_down_conv_block.5} parent=5 // pred_region
        %s181 = ssub.s32 %s13, 1
        %p182 = scmp.lt.s32.totalorder %s18, 1
        %s183 = scalar_select %p182, %s18, 1
        %s184 = smul.addr %s183, 20
        %s185 = smul.addr %s184, 4
        %s186 = scalar_lea.vmem %s0, %s185
        %p187 = pneg %p39
        %p188 = pneg %p36
        %p189 = pneg %p60
        %p190 = pneg %p57
        %p191 = pneg %p81
        %p192 = pneg %p78
        %s193 = smul.u32 8, %s18
        %p194 = scmp.lt.s32.totalorder %s193, 15
        %s195 = scalar_select %p194, %s193, 15
        %s196 = smul.addr %s195, 8
        %s197 = scalar_lea.vmem %s3, %s196
        %p198 = pneg %p107
        %p199 = pneg %p104
        %p200 = pneg %p133
        %p201 = pneg %p130
        %s202 = sand.u32 %s120, 1
        %s203 = scalar_lea.sflag [#allocation3], %s202
        %s204 = sand.u32 %s120, 1
        %s205 = smul.addr %s204, 64
        %s206 = scalar_lea.vmem [#allocation2], %s205
        %p207 = scmp.lt.s32.totalorder %s18, 1
        %s208 = scalar_select %p207, %s18, 1
        %s209 = smul.addr %s208, 20
        %s210 = smul.addr %s209, 4
        %s211 = scalar_lea.vmem %s0, %s210
        %s212 = smul.u32 8, %s18
        %p213 = scmp.lt.s32.totalorder %s212, 15
        %s214 = scalar_select %p213, %s212, 15
        %s215 = smul.addr %s214, 8
        %s216 = scalar_lea.vmem %s3, %s215
        %s217 = smul.u32 8, %s18
        %s218 = smul.u32 8, %s18
        %v220 = vld [vmem:[%s211] sm:$0xf]
        %v221 = vld [vmem:[%s211 + $0x4] sm:$0x1]
        %v222 = vld [vmem:[%s211 + $0x8] sm:$0xf]
        %v223 = vld [vmem:[%s211 + $0xc] sm:$0x1]
        %v224 = vld [vmem:[%s211 + $0x10] sm:$0xf]
        %v225 = vld [vmem:[%s211 + $0x14] sm:$0x1]
        %v226 = vld [vmem:[%s211 + $0x18] sm:$0xf]
        %v227 = vld [vmem:[%s211 + $0x1c] sm:$0x1]
        %v228 = vld [vmem:[%s211 + $0x20] sm:$0xf]
        %v229 = vld [vmem:[%s211 + $0x24] sm:$0x1]
        %v230 = vld [vmem:[%s211 + $0x28] sm:$0xf]
        %v231 = vld [vmem:[%s211 + $0x2c] sm:$0x1]
        %v232 = vld [vmem:[%s211 + $0x30] sm:$0xf]
        %v233 = vld [vmem:[%s211 + $0x34] sm:$0x1]
        %v234 = vld [vmem:[%s211 + $0x38] sm:$0xf]
        %v235 = vld [vmem:[%s211 + $0x3c] sm:$0x1]
        %v236 = vld [vmem:[%s211 + $0x40] sm:$0xf]
        %v237 = vld [vmem:[%s211 + $0x44] sm:$0x1]
        %v238 = vld [vmem:[%s211 + $0x48] sm:$0xf]
        %v239 = vld [vmem:[%s211 + $0x4c] sm:$0x1]
        %v240 = vld [vmem:[%s1] sm:$0xf]
        %v241 = vld [vmem:[%s1 + $0x4] sm:$0xf]
        %v242 = vld [vmem:[%s1 + $0x8] sm:$0xf]
        %v243 = vld [vmem:[%s1 + $0xc] sm:$0xf]
        %v244 = vld [vmem:[%s1 + $0x10] sm:$0xf]
        %v245 = vld [vmem:[%s1 + $0x14] sm:$0xf]
        %v246 = vld [vmem:[%s1 + $0x18] sm:$0xf]
        %v247 = vld [vmem:[%s1 + $0x1c] sm:$0xf]
        %v248 = vld [vmem:[%s1 + $0x20] sm:$0xf]
        %v249 = vld [vmem:[%s1 + $0x24] sm:$0xf]
        %v250 = vld [vmem:[%s1 + $0x28] sm:$0xf]
        %v251 = vld [vmem:[%s1 + $0x2c] sm:$0xf]
        %v252 = vld [vmem:[%s1 + $0x30] sm:$0xf]
        %v253 = vld [vmem:[%s1 + $0x34] sm:$0xf]
        %v254 = vld [vmem:[%s1 + $0x38] sm:$0xf]
        %v255 = vld [vmem:[%s1 + $0x3c] sm:$0xf]
        %vm256 = vsmask.f32 3328
        %vm257 = vsmask.f32 7440
        %vm258 = vmor %vm256, %vm257
        %v260 = vshrl.u32 %v220, 16
        %v262 = vrot.slane %v260, 4
        %v263 = vshll.u32 %v220, 16
        %v265 = vrot.slane %v263, 5
        %v266 = vor.u32 %v262, %v265
        %v267 = vrot.slane %v266, 4
        %v269 = vshll.u32 %v221, 16
        %v271 = vrot.slane %v269, 5
        %v272 = vsel %vm258, %v267, %v271
        %v274 = vshrl.u32 %v222, 16
        %v276 = vrot.slane %v274, 4
        %v277 = vshll.u32 %v222, 16
        %v279 = vrot.slane %v277, 5
        %v280 = vor.u32 %v276, %v279
        %v281 = vrot.slane %v280, 4
        %v283 = vshll.u32 %v223, 16
        %v285 = vrot.slane %v283, 5
        %v286 = vsel %vm258, %v281, %v285
        %v288 = vshrl.u32 %v224, 16
        %v290 = vrot.slane %v288, 4
        %v291 = vshll.u32 %v224, 16
        %v293 = vrot.slane %v291, 5
        %v294 = vor.u32 %v290, %v293
        %v295 = vrot.slane %v294, 4
        %v297 = vshll.u32 %v225, 16
        %v299 = vrot.slane %v297, 5
        %v300 = vsel %vm258, %v295, %v299
        %v302 = vshrl.u32 %v226, 16
        %v304 = vrot.slane %v302, 4
        %v305 = vshll.u32 %v226, 16
        %v307 = vrot.slane %v305, 5
        %v308 = vor.u32 %v304, %v307
        %v309 = vrot.slane %v308, 4
        %v311 = vshll.u32 %v227, 16
        %v313 = vrot.slane %v311, 5
        %v314 = vsel %vm258, %v309, %v313
        %v316 = vshrl.u32 %v228, 16
        %v318 = vrot.slane %v316, 4
        %v319 = vshll.u32 %v228, 16
        %v321 = vrot.slane %v319, 5
        %v322 = vor.u32 %v318, %v321
        %v323 = vrot.slane %v322, 4
        %v325 = vshll.u32 %v229, 16
        %v327 = vrot.slane %v325, 5
        %v328 = vsel %vm258, %v323, %v327
        %v330 = vshrl.u32 %v230, 16
        %v332 = vrot.slane %v330, 4
        %v333 = vshll.u32 %v230, 16
        %v335 = vrot.slane %v333, 5
        %v336 = vor.u32 %v332, %v335
        %v337 = vrot.slane %v336, 4
        %v339 = vshll.u32 %v231, 16
        %v341 = vrot.slane %v339, 5
        %v342 = vsel %vm258, %v337, %v341
        %v344 = vshrl.u32 %v232, 16
        %v346 = vrot.slane %v344, 4
        %v347 = vshll.u32 %v232, 16
        %v349 = vrot.slane %v347, 5
        %v350 = vor.u32 %v346, %v349
        %v351 = vrot.slane %v350, 4
        %v353 = vshll.u32 %v233, 16
        %v355 = vrot.slane %v353, 5
        %v356 = vsel %vm258, %v351, %v355
        %v358 = vshrl.u32 %v234, 16
        %v360 = vrot.slane %v358, 4
        %v361 = vshll.u32 %v234, 16
        %v363 = vrot.slane %v361, 5
        %v364 = vor.u32 %v360, %v363
        %v365 = vrot.slane %v364, 4
        %v367 = vshll.u32 %v235, 16
        %v369 = vrot.slane %v367, 5
        %v370 = vsel %vm258, %v365, %v369
        %s371 = scalar_lea.vmem %s1, 64
        %v372 = vld [vmem:[%s371] sm:$0xf]
        %v373 = vld [vmem:[%s371 + $0x4] sm:$0xf]
        %v374 = vld [vmem:[%s371 + $0x8] sm:$0xf]
        %v375 = vld [vmem:[%s371 + $0xc] sm:$0xf]
        %v376 = vld [vmem:[%s371 + $0x10] sm:$0xf]
        %v377 = vld [vmem:[%s371 + $0x14] sm:$0xf]
        %v378 = vld [vmem:[%s371 + $0x18] sm:$0xf]
        %v379 = vld [vmem:[%s371 + $0x1c] sm:$0xf]
        %v380 = vld [vmem:[%s371 + $0x20] sm:$0xf]
        %v381 = vld [vmem:[%s371 + $0x24] sm:$0xf]
        %v382 = vld [vmem:[%s371 + $0x28] sm:$0xf]
        %v383 = vld [vmem:[%s371 + $0x2c] sm:$0xf]
        %v384 = vld [vmem:[%s371 + $0x30] sm:$0xf]
        %v385 = vld [vmem:[%s371 + $0x34] sm:$0xf]
        %v386 = vld [vmem:[%s371 + $0x38] sm:$0xf]
        %v387 = vld [vmem:[%s371 + $0x3c] sm:$0xf]
        %v388 = vunpack.c.l.b16 %v272
        %v389 = vunpack.c.l.b16 %v286
        %v390 = vunpack.c.l.b16 %v300
        %v391 = vunpack.c.l.b16 %v314
        %v392 = vunpack.c.l.b16 %v328
        %v393 = vunpack.c.l.b16 %v342
        %v394 = vunpack.c.l.b16 %v356
        %v395 = vunpack.c.l.b16 %v370
        %v396 = vpack.c.b16 %v389, %v388
        %v397 = vpack.c.b16 %v391, %v390
        %v398 = vpack.c.b16 %v393, %v392
        %v399 = vpack.c.b16 %v395, %v394
        %v420 = vunpack.c.l.b16 %v372
        %v421 = vunpack.c.l.b16 %v373
        %v422 = vunpack.c.l.b16 %v374
        %v423 = vunpack.c.l.b16 %v375
        %v424 = vunpack.c.l.b16 %v376
        %v425 = vunpack.c.l.b16 %v377
        %v426 = vunpack.c.l.b16 %v378
        %v427 = vunpack.c.l.b16 %v379
        %v428 = vunpack.c.l.b16 %v380
        %v429 = vunpack.c.l.b16 %v381
        %v430 = vunpack.c.l.b16 %v382
        %v431 = vunpack.c.l.b16 %v383
        %v432 = vunpack.c.l.b16 %v384
        %v433 = vunpack.c.l.b16 %v385
        %v434 = vunpack.c.l.b16 %v386
        %v435 = vunpack.c.l.b16 %v387
        %v436 = vpack.c.b16 %v421, %v420
        %v437 = vpack.c.b16 %v423, %v422
        %v438 = vpack.c.b16 %v425, %v424
        %v439 = vpack.c.b16 %v427, %v426
        %v440 = vpack.c.b16 %v429, %v428
        %v441 = vpack.c.b16 %v431, %v430
        %v442 = vpack.c.b16 %v433, %v432
        %v443 = vpack.c.b16 %v435, %v434
        %452 = vmatprep.subr.bf16.mxu0 0
        %453 = vmatpush1.bf16.msra.mxu0 %v436
        %454 = vmatprep.subr.bf16.mxu0 0
        %455 = vmatpush1.bf16.msra.mxu0 %v437
        %456 = vmatprep.subr.bf16.mxu0 0
        %457 = vmatpush1.bf16.msra.mxu0 %v438
        %458 = vmatprep.subr.bf16.mxu0 0
        %459 = vmatpush1.bf16.msra.mxu0 %v439
        %460 = vmatprep.subr.bf16.mxu0 0
        %461 = vmatpush1.bf16.msra.mxu0 %v440
        %462 = vmatprep.subr.bf16.mxu0 0
        %463 = vmatpush1.bf16.msra.mxu0 %v441
        %464 = vmatprep.subr.bf16.mxu0 0
        %465 = vmatpush1.bf16.msra.mxu0 %v442
        %466 = vmatprep.subr.bf16.mxu0 0
        %467 = vmatpush1.bf16.msra.mxu0 %v443
        %468 = vmatprep.subr.bf16.mxu0 0
        %469 = vmatpush1.bf16.msra.mxu0 0
        %470 = vmatprep.subr.bf16.mxu0 0
        %471 = vmatpush1.bf16.msra.mxu0 0
        %472 = vmatprep.subr.bf16.mxu0 0
        %473 = vmatpush1.bf16.msra.mxu0 0
        %474 = vmatprep.subr.bf16.mxu0 0
        %475 = vmatpush1.bf16.msra.mxu0 0
        %476 = vmatprep.subr.bf16.mxu0 0
        %477 = vmatpush1.bf16.msra.mxu0 0
        %478 = vmatprep.subr.bf16.mxu0 0
        %479 = vmatpush1.bf16.msra.mxu0 0
        %480 = vmatprep.subr.bf16.mxu0 0
        %481 = vmatpush1.bf16.msra.mxu0 0
        %482 = vmatprep.subr.bf16.mxu0 0
        %483 = vmatpush1.bf16.msra.mxu0 0
        %484 = vmatprep.mubr.bf16.mxu0 0
        %485 = vmatmul.mubr.bf16.gmra.mrb[0].mxu0 %v396
        %v486 = vpop.f32.mrb[0].mxu0
        %v487 = vadd.f32 0.0, %v486
        %v488 = vpop.f32.mrb[0].mxu0
        %v489 = vpop.f32.mrb[0].mxu0
        %v490 = vadd.f32 0.0, %v489
        %v491 = vpop.f32.mrb[0].mxu0
        %492 = vmatprep.mubr.bf16.mxu0 0
        %493 = vmatmul.mubr.bf16.gmra.mrb[0].mxu0 %v397
        %v494 = vpop.f32.mrb[0].mxu0
        %v495 = vadd.f32 0.0, %v494
        %v496 = vpop.f32.mrb[0].mxu0
        %v497 = vpop.f32.mrb[0].mxu0
        %v498 = vadd.f32 0.0, %v497
        %v499 = vpop.f32.mrb[0].mxu0
        %500 = vmatprep.mubr.bf16.mxu0 0
        %501 = vmatmul.mubr.bf16.gmra.mrb[0].mxu0 %v398
        %v502 = vpop.f32.mrb[0].mxu0
        %v503 = vadd.f32 0.0, %v502
        %v504 = vpop.f32.mrb[0].mxu0
        %v505 = vpop.f32.mrb[0].mxu0
        %v506 = vadd.f32 0.0, %v505
        %v507 = vpop.f32.mrb[0].mxu0
        %508 = vmatprep.mubr.bf16.mxu0 0
        %509 = vmatmul.mubr.bf16.gmra.mrb[0].mxu0 %v399
        %v510 = vpop.f32.mrb[0].mxu0
        %v511 = vadd.f32 0.0, %v510
        %v512 = vpop.f32.mrb[0].mxu0
        %v513 = vpop.f32.mrb[0].mxu0
        %v514 = vadd.f32 0.0, %v513
        %v515 = vpop.f32.mrb[0].mxu0
        %516 = vdwg.mxu0
        %v525 = vunpack.c.l.b16 %v220
        %v526 = vunpack.c.l.b16 %v222
        %v527 = vunpack.c.l.b16 %v224
        %v528 = vunpack.c.l.b16 %v226
        %v529 = vunpack.c.l.b16 %v228
        %v530 = vunpack.c.l.b16 %v230
        %v531 = vunpack.c.l.b16 %v232
        %v532 = vunpack.c.l.b16 %v234
        %v533 = vpack.c.b16 %v526, %v525
        %v534 = vpack.c.b16 %v528, %v527
        %v535 = vpack.c.b16 %v530, %v529
        %v536 = vpack.c.b16 %v532, %v531
        %v557 = vunpack.c.l.b16 %v240
        %v558 = vunpack.c.l.b16 %v241
        %v559 = vunpack.c.l.b16 %v242
        %v560 = vunpack.c.l.b16 %v243
        %v561 = vunpack.c.l.b16 %v244
        %v562 = vunpack.c.l.b16 %v245
        %v563 = vunpack.c.l.b16 %v246
        %v564 = vunpack.c.l.b16 %v247
        %v565 = vunpack.c.l.b16 %v248
        %v566 = vunpack.c.l.b16 %v249
        %v567 = vunpack.c.l.b16 %v250
        %v568 = vunpack.c.l.b16 %v251
        %v569 = vunpack.c.l.b16 %v252
        %v570 = vunpack.c.l.b16 %v253
        %v571 = vunpack.c.l.b16 %v254
        %v572 = vunpack.c.l.b16 %v255
        %v573 = vpack.c.b16 %v558, %v557
        %v574 = vpack.c.b16 %v560, %v559
        %v575 = vpack.c.b16 %v562, %v561
        %v576 = vpack.c.b16 %v564, %v563
        %v577 = vpack.c.b16 %v566, %v565
        %v578 = vpack.c.b16 %v568, %v567
        %v579 = vpack.c.b16 %v570, %v569
        %v580 = vpack.c.b16 %v572, %v571
        %589 = vmatprep.subr.bf16.mxu0 0
        %590 = vmatpush1.bf16.msra.mxu0 %v573
        %591 = vmatprep.subr.bf16.mxu0 0
        %592 = vmatpush1.bf16.msra.mxu0 %v574
        %593 = vmatprep.subr.bf16.mxu0 0
        %594 = vmatpush1.bf16.msra.mxu0 %v575
        %595 = vmatprep.subr.bf16.mxu0 0
        %596 = vmatpush1.bf16.msra.mxu0 %v576
        %597 = vmatprep.subr.bf16.mxu0 0
        %598 = vmatpush1.bf16.msra.mxu0 %v577
        %599 = vmatprep.subr.bf16.mxu0 0
        %600 = vmatpush1.bf16.msra.mxu0 %v578
        %601 = vmatprep.subr.bf16.mxu0 0
        %602 = vmatpush1.bf16.msra.mxu0 %v579
        %603 = vmatprep.subr.bf16.mxu0 0
        %604 = vmatpush1.bf16.msra.mxu0 %v580
        %605 = vmatprep.subr.bf16.mxu0 0
        %606 = vmatpush1.bf16.msra.mxu0 0
        %607 = vmatprep.subr.bf16.mxu0 0
        %608 = vmatpush1.bf16.msra.mxu0 0
        %609 = vmatprep.subr.bf16.mxu0 0
        %610 = vmatpush1.bf16.msra.mxu0 0
        %611 = vmatprep.subr.bf16.mxu0 0
        %612 = vmatpush1.bf16.msra.mxu0 0
        %613 = vmatprep.subr.bf16.mxu0 0
        %614 = vmatpush1.bf16.msra.mxu0 0
        %615 = vmatprep.subr.bf16.mxu0 0
        %616 = vmatpush1.bf16.msra.mxu0 0
        %617 = vmatprep.subr.bf16.mxu0 0
        %618 = vmatpush1.bf16.msra.mxu0 0
        %619 = vmatprep.subr.bf16.mxu0 0
        %620 = vmatpush1.bf16.msra.mxu0 0
        %621 = vmatprep.mubr.bf16.mxu0 0
        %622 = vmatmul.mubr.bf16.gmra.mrb[0].mxu0 %v533
        %v623 = vpop.f32.mrb[0].mxu0
        %v624 = vadd.f32 %v487, %v623
        %v625 = vpop.f32.mrb[0].mxu0
        %v626 = vpop.f32.mrb[0].mxu0
        %v627 = vadd.f32 %v490, %v626
        %v628 = vpop.f32.mrb[0].mxu0
        %629 = vmatprep.mubr.bf16.mxu0 0
        %630 = vmatmul.mubr.bf16.gmra.mrb[0].mxu0 %v534
        %v631 = vpop.f32.mrb[0].mxu0
        %v632 = vadd.f32 %v495, %v631
        %v633 = vpop.f32.mrb[0].mxu0
        %v634 = vpop.f32.mrb[0].mxu0
        %v635 = vadd.f32 %v498, %v634
        %v636 = vpop.f32.mrb[0].mxu0
        %637 = vmatprep.mubr.bf16.mxu0 0
        %638 = vmatmul.mubr.bf16.gmra.mrb[0].mxu0 %v535
        %v639 = vpop.f32.mrb[0].mxu0
        %v640 = vadd.f32 %v503, %v639
        %v641 = vpop.f32.mrb[0].mxu0
        %v642 = vpop.f32.mrb[0].mxu0
        %v643 = vadd.f32 %v506, %v642
        %v644 = vpop.f32.mrb[0].mxu0
        %645 = vmatprep.mubr.bf16.mxu0 0
        %646 = vmatmul.mubr.bf16.gmra.mrb[0].mxu0 %v536
        %v647 = vpop.f32.mrb[0].mxu0
        %v648 = vadd.f32 %v511, %v647
        %v649 = vpop.f32.mrb[0].mxu0
        %v650 = vpop.f32.mrb[0].mxu0
        %v651 = vadd.f32 %v514, %v650
        %v652 = vpop.f32.mrb[0].mxu0
        %653 = vdwg.mxu0
        %vm662 = vcmask 1042432
        %vm663 = vcmask 1046532
        %vm664 = vmor %vm662, %vm663
        %v665 = vrot.slane %v220, 5
        %v666 = vrot.slane %v665, 4
        %v667 = vrot.slane %v221, 5
        %v668 = vsel %vm664, %v666, %v667
        %v669 = vrot.slane %v222, 5
        %v670 = vrot.slane %v669, 4
        %v671 = vrot.slane %v223, 5
        %v672 = vsel %vm664, %v670, %v671
        %v673 = vrot.slane %v224, 5
        %v674 = vrot.slane %v673, 4
        %v675 = vrot.slane %v225, 5
        %v676 = vsel %vm664, %v674, %v675
        %v677 = vrot.slane %v226, 5
        %v678 = vrot.slane %v677, 4
        %v679 = vrot.slane %v227, 5
        %v680 = vsel %vm664, %v678, %v679
        %v681 = vrot.slane %v228, 5
        %v682 = vrot.slane %v681, 4
        %v683 = vrot.slane %v229, 5
        %v684 = vsel %vm664, %v682, %v683
        %v685 = vrot.slane %v230, 5
        %v686 = vrot.slane %v685, 4
        %v687 = vrot.slane %v231, 5
        %v688 = vsel %vm664, %v686, %v687
        %v689 = vrot.slane %v232, 5
        %v690 = vrot.slane %v689, 4
        %v691 = vrot.slane %v233, 5
        %v692 = vsel %vm664, %v690, %v691
        %v693 = vrot.slane %v234, 5
        %v694 = vrot.slane %v693, 4
        %v695 = vrot.slane %v235, 5
        %v696 = vsel %vm664, %v694, %v695
        %s697 = scalar_lea.vmem %s1, 128
        %v698 = vld [vmem:[%s697] sm:$0xf]
        %v699 = vld [vmem:[%s697 + $0x4] sm:$0xf]
        %v700 = vld [vmem:[%s697 + $0x8] sm:$0xf]
        %v701 = vld [vmem:[%s697 + $0xc] sm:$0xf]
        %v702 = vld [vmem:[%s697 + $0x10] sm:$0xf]
        %v703 = vld [vmem:[%s697 + $0x14] sm:$0xf]
        %v704 = vld [vmem:[%s697 + $0x18] sm:$0xf]
        %v705 = vld [vmem:[%s697 + $0x1c] sm:$0xf]
        %v706 = vld [vmem:[%s697 + $0x20] sm:$0xf]
        %v707 = vld [vmem:[%s697 + $0x24] sm:$0xf]
        %v708 = vld [vmem:[%s697 + $0x28] sm:$0xf]
        %v709 = vld [vmem:[%s697 + $0x2c] sm:$0xf]
        %v710 = vld [vmem:[%s697 + $0x30] sm:$0xf]
        %v711 = vld [vmem:[%s697 + $0x34] sm:$0xf]
        %v712 = vld [vmem:[%s697 + $0x38] sm:$0xf]
        %v713 = vld [vmem:[%s697 + $0x3c] sm:$0xf]
        %v714 = vunpack.c.l.b16 %v668
        %v715 = vunpack.c.l.b16 %v672
        %v716 = vunpack.c.l.b16 %v676
        %v717 = vunpack.c.l.b16 %v680
        %v718 = vunpack.c.l.b16 %v684
        %v719 = vunpack.c.l.b16 %v688
        %v720 = vunpack.c.l.b16 %v692
        %v721 = vunpack.c.l.b16 %v696
        %v722 = vpack.c.b16 %v715, %v714
        %v723 = vpack.c.b16 %v717, %v716
        %v724 = vpack.c.b16 %v719, %v718
        %v725 = vpack.c.b16 %v721, %v720
        %v746 = vunpack.c.l.b16 %v698
        %v747 = vunpack.c.l.b16 %v699
        %v748 = vunpack.c.l.b16 %v700
        %v749 = vunpack.c.l.b16 %v701
        %v750 = vunpack.c.l.b16 %v702
        %v751 = vunpack.c.l.b16 %v703
        %v752 = vunpack.c.l.b16 %v704
        %v753 = vunpack.c.l.b16 %v705
        %v754 = vunpack.c.l.b16 %v706
        %v755 = vunpack.c.l.b16 %v707
        %v756 = vunpack.c.l.b16 %v708
        %v757 = vunpack.c.l.b16 %v709
        %v758 = vunpack.c.l.b16 %v710
        %v759 = vunpack.c.l.b16 %v711
        %v760 = vunpack.c.l.b16 %v712
        %v761 = vunpack.c.l.b16 %v713
        %v762 = vpack.c.b16 %v747, %v746
        %v763 = vpack.c.b16 %v749, %v748
        %v764 = vpack.c.b16 %v751, %v750
        %v765 = vpack.c.b16 %v753, %v752
        %v766 = vpack.c.b16 %v755, %v754
        %v767 = vpack.c.b16 %v757, %v756
        %v768 = vpack.c.b16 %v759, %v758
        %v769 = vpack.c.b16 %v761, %v760
        %778 = vmatprep.subr.bf16.mxu0 0
        %779 = vmatpush1.bf16.msra.mxu0 %v762
        %780 = vmatprep.subr.bf16.mxu0 0
        %781 = vmatpush1.bf16.msra.mxu0 %v763
        %782 = vmatprep.subr.bf16.mxu0 0
        %783 = vmatpush1.bf16.msra.mxu0 %v764
        %784 = vmatprep.subr.bf16.mxu0 0
        %785 = vmatpush1.bf16.msra.mxu0 %v765
        %786 = vmatprep.subr.bf16.mxu0 0
        %787 = vmatpush1.bf16.msra.mxu0 %v766
        %788 = vmatprep.subr.bf16.mxu0 0
        %789 = vmatpush1.bf16.msra.mxu0 %v767
        %790 = vmatprep.subr.bf16.mxu0 0
        %791 = vmatpush1.bf16.msra.mxu0 %v768
        %792 = vmatprep.subr.bf16.mxu0 0
        %793 = vmatpush1.bf16.msra.mxu0 %v769
        %794 = vmatprep.subr.bf16.mxu0 0
        %795 = vmatpush1.bf16.msra.mxu0 0
        %796 = vmatprep.subr.bf16.mxu0 0
        %797 = vmatpush1.bf16.msra.mxu0 0
        %798 = vmatprep.subr.bf16.mxu0 0
        %799 = vmatpush1.bf16.msra.mxu0 0
        %800 = vmatprep.subr.bf16.mxu0 0
        %801 = vmatpush1.bf16.msra.mxu0 0
        %802 = vmatprep.subr.bf16.mxu0 0
        %803 = vmatpush1.bf16.msra.mxu0 0
        %804 = vmatprep.subr.bf16.mxu0 0
        %805 = vmatpush1.bf16.msra.mxu0 0
        %806 = vmatprep.subr.bf16.mxu0 0
        %807 = vmatpush1.bf16.msra.mxu0 0
        %808 = vmatprep.subr.bf16.mxu0 0
        %809 = vmatpush1.bf16.msra.mxu0 0
        %810 = vmatprep.mubr.bf16.mxu0 0
        %811 = vmatmul.mubr.bf16.gmra.mrb[0].mxu0 %v722
        %v812 = vpop.f32.mrb[0].mxu0
        %v813 = vadd.f32 0.0, %v812
        %v814 = vpop.f32.mrb[0].mxu0
        %v815 = vpop.f32.mrb[0].mxu0
        %v816 = vadd.f32 0.0, %v815
        %v817 = vpop.f32.mrb[0].mxu0
        %818 = vmatprep.mubr.bf16.mxu0 0
        %819 = vmatmul.mubr.bf16.gmra.mrb[0].mxu0 %v723
        %v820 = vpop.f32.mrb[0].mxu0
        %v821 = vadd.f32 0.0, %v820
        %v822 = vpop.f32.mrb[0].mxu0
        %v823 = vpop.f32.mrb[0].mxu0
        %v824 = vadd.f32 0.0, %v823
        %v825 = vpop.f32.mrb[0].mxu0
        %826 = vmatprep.mubr.bf16.mxu0 0
        %827 = vmatmul.mubr.bf16.gmra.mrb[0].mxu0 %v724
        %v828 = vpop.f32.mrb[0].mxu0
        %v829 = vadd.f32 0.0, %v828
        %v830 = vpop.f32.mrb[0].mxu0
        %v831 = vpop.f32.mrb[0].mxu0
        %v832 = vadd.f32 0.0, %v831
        %v833 = vpop.f32.mrb[0].mxu0
        %834 = vmatprep.mubr.bf16.mxu0 0
        %835 = vmatmul.mubr.bf16.gmra.mrb[0].mxu0 %v725
        %v836 = vpop.f32.mrb[0].mxu0
        %v837 = vadd.f32 0.0, %v836
        %v838 = vpop.f32.mrb[0].mxu0
        %v839 = vpop.f32.mrb[0].mxu0
        %v840 = vadd.f32 0.0, %v839
        %v841 = vpop.f32.mrb[0].mxu0
        %842 = vdwg.mxu0
        %v843 = vadd.f32 %v624, %v813
        %v844 = vadd.f32 %v627, %v816
        %v845 = vadd.f32 %v632, %v821
        %v846 = vadd.f32 %v635, %v824
        %v847 = vadd.f32 %v640, %v829
        %v848 = vadd.f32 %v643, %v832
        %v849 = vadd.f32 %v648, %v837
        %v850 = vadd.f32 %v651, %v840
        %s851 = scalar_lea.vmem %s1, 192
        %v852 = vld [vmem:[%s851] sm:$0xf]
        %v853 = vld [vmem:[%s851 + $0x4] sm:$0xf]
        %v854 = vld [vmem:[%s851 + $0x8] sm:$0xf]
        %v855 = vld [vmem:[%s851 + $0xc] sm:$0xf]
        %v856 = vld [vmem:[%s851 + $0x10] sm:$0xf]
        %v857 = vld [vmem:[%s851 + $0x14] sm:$0xf]
        %v858 = vld [vmem:[%s851 + $0x18] sm:$0xf]
        %v859 = vld [vmem:[%s851 + $0x1c] sm:$0xf]
        %v860 = vld [vmem:[%s851 + $0x20] sm:$0xf]
        %v861 = vld [vmem:[%s851 + $0x24] sm:$0xf]
        %v862 = vld [vmem:[%s851 + $0x28] sm:$0xf]
        %v863 = vld [vmem:[%s851 + $0x2c] sm:$0xf]
        %v864 = vld [vmem:[%s851 + $0x30] sm:$0xf]
        %v865 = vld [vmem:[%s851 + $0x34] sm:$0xf]
        %v866 = vld [vmem:[%s851 + $0x38] sm:$0xf]
        %v867 = vld [vmem:[%s851 + $0x3c] sm:$0xf]
        %v869 = vunpack.c.l.b16 %v236
        %v870 = vpack.c.b16 %v527, %v526
        %v871 = vpack.c.b16 %v529, %v528
        %v872 = vpack.c.b16 %v531, %v530
        %v873 = vpack.c.b16 %v869, %v532
        %v894 = vunpack.c.l.b16 %v852
        %v895 = vunpack.c.l.b16 %v853
        %v896 = vunpack.c.l.b16 %v854
        %v897 = vunpack.c.l.b16 %v855
        %v898 = vunpack.c.l.b16 %v856
        %v899 = vunpack.c.l.b16 %v857
        %v900 = vunpack.c.l.b16 %v858
        %v901 = vunpack.c.l.b16 %v859
        %v902 = vunpack.c.l.b16 %v860
        %v903 = vunpack.c.l.b16 %v861
        %v904 = vunpack.c.l.b16 %v862
        %v905 = vunpack.c.l.b16 %v863
        %v906 = vunpack.c.l.b16 %v864
        %v907 = vunpack.c.l.b16 %v865
        %v908 = vunpack.c.l.b16 %v866
        %v909 = vunpack.c.l.b16 %v867
        %v910 = vpack.c.b16 %v895, %v894
        %v911 = vpack.c.b16 %v897, %v896
        %v912 = vpack.c.b16 %v899, %v898
        %v913 = vpack.c.b16 %v901, %v900
        %v914 = vpack.c.b16 %v903, %v902
        %v915 = vpack.c.b16 %v905, %v904
        %v916 = vpack.c.b16 %v907, %v906
        %v917 = vpack.c.b16 %v909, %v908
        %926 = vmatprep.subr.bf16.mxu0 0
        %927 = vmatpush1.bf16.msra.mxu0 %v910
        %928 = vmatprep.subr.bf16.mxu0 0
        %929 = vmatpush1.bf16.msra.mxu0 %v911
        %930 = vmatprep.subr.bf16.mxu0 0
        %931 = vmatpush1.bf16.msra.mxu0 %v912
        %932 = vmatprep.subr.bf16.mxu0 0
        %933 = vmatpush1.bf16.msra.mxu0 %v913
        %934 = vmatprep.subr.bf16.mxu0 0
        %935 = vmatpush1.bf16.msra.mxu0 %v914
        %936 = vmatprep.subr.bf16.mxu0 0
        %937 = vmatpush1.bf16.msra.mxu0 %v915
        %938 = vmatprep.subr.bf16.mxu0 0
        %939 = vmatpush1.bf16.msra.mxu0 %v916
        %940 = vmatprep.subr.bf16.mxu0 0
        %941 = vmatpush1.bf16.msra.mxu0 %v917
        %942 = vmatprep.subr.bf16.mxu0 0
        %943 = vmatpush1.bf16.msra.mxu0 0
        %944 = vmatprep.subr.bf16.mxu0 0
        %945 = vmatpush1.bf16.msra.mxu0 0
        %946 = vmatprep.subr.bf16.mxu0 0
        %947 = vmatpush1.bf16.msra.mxu0 0
        %948 = vmatprep.subr.bf16.mxu0 0
        %949 = vmatpush1.bf16.msra.mxu0 0
        %950 = vmatprep.subr.bf16.mxu0 0
        %951 = vmatpush1.bf16.msra.mxu0 0
        %952 = vmatprep.subr.bf16.mxu0 0
        %953 = vmatpush1.bf16.msra.mxu0 0
        %954 = vmatprep.subr.bf16.mxu0 0
        %955 = vmatpush1.bf16.msra.mxu0 0
        %956 = vmatprep.subr.bf16.mxu0 0
        %957 = vmatpush1.bf16.msra.mxu0 0
        %958 = vmatprep.mubr.bf16.mxu0 0
        %959 = vmatmul.mubr.bf16.gmra.mrb[0].mxu0 %v870
        %v960 = vpop.f32.mrb[0].mxu0
        %v961 = vadd.f32 0.0, %v960
        %v962 = vpop.f32.mrb[0].mxu0
        %v963 = vpop.f32.mrb[0].mxu0
        %v964 = vadd.f32 0.0, %v963
        %v965 = vpop.f32.mrb[0].mxu0
        %966 = vmatprep.mubr.bf16.mxu0 0
        %967 = vmatmul.mubr.bf16.gmra.mrb[0].mxu0 %v871
        %v968 = vpop.f32.mrb[0].mxu0
        %v969 = vadd.f32 0.0, %v968
        %v970 = vpop.f32.mrb[0].mxu0
        %v971 = vpop.f32.mrb[0].mxu0
        %v972 = vadd.f32 0.0, %v971
        %v973 = vpop.f32.mrb[0].mxu0
        %974 = vmatprep.mubr.bf16.mxu0 0
        %975 = vmatmul.mubr.bf16.gmra.mrb[0].mxu0 %v872
        %v976 = vpop.f32.mrb[0].mxu0
        %v977 = vadd.f32 0.0, %v976
        %v978 = vpop.f32.mrb[0].mxu0
        %v979 = vpop.f32.mrb[0].mxu0
        %v980 = vadd.f32 0.0, %v979
        %v981 = vpop.f32.mrb[0].mxu0
        %982 = vmatprep.mubr.bf16.mxu0 0
        %983 = vmatmul.mubr.bf16.gmra.mrb[0].mxu0 %v873
        %v984 = vpop.f32.mrb[0].mxu0
        %v985 = vadd.f32 0.0, %v984
        %v986 = vpop.f32.mrb[0].mxu0
        %v987 = vpop.f32.mrb[0].mxu0
        %v988 = vadd.f32 0.0, %v987
        %v989 = vpop.f32.mrb[0].mxu0
        %990 = vdwg.mxu0
        %v991 = vadd.f32 %v843, %v961
        %v992 = vadd.f32 %v844, %v964
        %v993 = vadd.f32 %v845, %v969
        %v994 = vadd.f32 %v846, %v972
        %v995 = vadd.f32 %v847, %v977
        %v996 = vadd.f32 %v848, %v980
        %v997 = vadd.f32 %v849, %v985
        %v998 = vadd.f32 %v850, %v988
        %v1000 = vshrl.u32 %v236, 16
        %v1002 = vrot.slane %v1000, 4
        %v1003 = vshll.u32 %v236, 16
        %v1005 = vrot.slane %v1003, 5
        %v1006 = vor.u32 %v1002, %v1005
        %v1007 = vrot.slane %v1006, 4
        %v1009 = vshll.u32 %v237, 16
        %v1011 = vrot.slane %v1009, 5
        %v1012 = vsel %vm258, %v1007, %v1011
        %s1013 = scalar_lea.vmem %s1, 256
        %v1014 = vld [vmem:[%s1013] sm:$0xf]
        %v1015 = vld [vmem:[%s1013 + $0x4] sm:$0xf]
        %v1016 = vld [vmem:[%s1013 + $0x8] sm:$0xf]
        %v1017 = vld [vmem:[%s1013 + $0xc] sm:$0xf]
        %v1018 = vld [vmem:[%s1013 + $0x10] sm:$0xf]
        %v1019 = vld [vmem:[%s1013 + $0x14] sm:$0xf]
        %v1020 = vld [vmem:[%s1013 + $0x18] sm:$0xf]
        %v1021 = vld [vmem:[%s1013 + $0x1c] sm:$0xf]
        %v1022 = vld [vmem:[%s1013 + $0x20] sm:$0xf]
        %v1023 = vld [vmem:[%s1013 + $0x24] sm:$0xf]
        %v1024 = vld [vmem:[%s1013 + $0x28] sm:$0xf]
        %v1025 = vld [vmem:[%s1013 + $0x2c] sm:$0xf]
        %v1026 = vld [vmem:[%s1013 + $0x30] sm:$0xf]
        %v1027 = vld [vmem:[%s1013 + $0x34] sm:$0xf]
        %v1028 = vld [vmem:[%s1013 + $0x38] sm:$0xf]
        %v1029 = vld [vmem:[%s1013 + $0x3c] sm:$0xf]
        %v1030 = vunpack.c.l.b16 %v1012
        %v1031 = vpack.c.b16 %v390, %v389
        %v1032 = vpack.c.b16 %v392, %v391
        %v1033 = vpack.c.b16 %v394, %v393
        %v1034 = vpack.c.b16 %v1030, %v395
        %v1055 = vunpack.c.l.b16 %v1014
        %v1056 = vunpack.c.l.b16 %v1015
        %v1057 = vunpack.c.l.b16 %v1016
        %v1058 = vunpack.c.l.b16 %v1017
        %v1059 = vunpack.c.l.b16 %v1018
        %v1060 = vunpack.c.l.b16 %v1019
        %v1061 = vunpack.c.l.b16 %v1020
        %v1062 = vunpack.c.l.b16 %v1021
        %v1063 = vunpack.c.l.b16 %v1022
        %v1064 = vunpack.c.l.b16 %v1023
        %v1065 = vunpack.c.l.b16 %v1024
        %v1066 = vunpack.c.l.b16 %v1025
        %v1067 = vunpack.c.l.b16 %v1026
        %v1068 = vunpack.c.l.b16 %v1027
        %v1069 = vunpack.c.l.b16 %v1028
        %v1070 = vunpack.c.l.b16 %v1029
        %v1071 = vpack.c.b16 %v1056, %v1055
        %v1072 = vpack.c.b16 %v1058, %v1057
        %v1073 = vpack.c.b16 %v1060, %v1059
        %v1074 = vpack.c.b16 %v1062, %v1061
        %v1075 = vpack.c.b16 %v1064, %v1063
        %v1076 = vpack.c.b16 %v1066, %v1065
        %v1077 = vpack.c.b16 %v1068, %v1067
        %v1078 = vpack.c.b16 %v1070, %v1069
        %1087 = vmatprep.subr.bf16.mxu0 0
        %1088 = vmatpush1.bf16.msra.mxu0 %v1071
        %1089 = vmatprep.subr.bf16.mxu0 0
        %1090 = vmatpush1.bf16.msra.mxu0 %v1072
        %1091 = vmatprep.subr.bf16.mxu0 0
        %1092 = vmatpush1.bf16.msra.mxu0 %v1073
        %1093 = vmatprep.subr.bf16.mxu0 0
        %1094 = vmatpush1.bf16.msra.mxu0 %v1074
        %1095 = vmatprep.subr.bf16.mxu0 0
        %1096 = vmatpush1.bf16.msra.mxu0 %v1075
        %1097 = vmatprep.subr.bf16.mxu0 0
        %1098 = vmatpush1.bf16.msra.mxu0 %v1076
        %1099 = vmatprep.subr.bf16.mxu0 0
        %1100 = vmatpush1.bf16.msra.mxu0 %v1077
        %1101 = vmatprep.subr.bf16.mxu0 0
        %1102 = vmatpush1.bf16.msra.mxu0 %v1078
        %1103 = vmatprep.subr.bf16.mxu0 0
        %1104 = vmatpush1.bf16.msra.mxu0 0
        %1105 = vmatprep.subr.bf16.mxu0 0
        %1106 = vmatpush1.bf16.msra.mxu0 0
        %1107 = vmatprep.subr.bf16.mxu0 0
        %1108 = vmatpush1.bf16.msra.mxu0 0
        %1109 = vmatprep.subr.bf16.mxu0 0
        %1110 = vmatpush1.bf16.msra.mxu0 0
        %1111 = vmatprep.subr.bf16.mxu0 0
        %1112 = vmatpush1.bf16.msra.mxu0 0
        %1113 = vmatprep.subr.bf16.mxu0 0
        %1114 = vmatpush1.bf16.msra.mxu0 0
        %1115 = vmatprep.subr.bf16.mxu0 0
        %1116 = vmatpush1.bf16.msra.mxu0 0
        %1117 = vmatprep.subr.bf16.mxu0 0
        %1118 = vmatpush1.bf16.msra.mxu0 0
        %1119 = vmatprep.mubr.bf16.mxu0 0
        %1120 = vmatmul.mubr.bf16.gmra.mrb[0].mxu0 %v1031
        %v1121 = vpop.f32.mrb[0].mxu0
        %v1122 = vadd.f32 0.0, %v1121
        %v1123 = vpop.f32.mrb[0].mxu0
        %v1124 = vpop.f32.mrb[0].mxu0
        %v1125 = vadd.f32 0.0, %v1124
        %v1126 = vpop.f32.mrb[0].mxu0
        %1127 = vmatprep.mubr.bf16.mxu0 0
        %1128 = vmatmul.mubr.bf16.gmra.mrb[0].mxu0 %v1032
        %v1129 = vpop.f32.mrb[0].mxu0
        %v1130 = vadd.f32 0.0, %v1129
        %v1131 = vpop.f32.mrb[0].mxu0
        %v1132 = vpop.f32.mrb[0].mxu0
        %v1133 = vadd.f32 0.0, %v1132
        %v1134 = vpop.f32.mrb[0].mxu0
        %1135 = vmatprep.mubr.bf16.mxu0 0
        %1136 = vmatmul.mubr.bf16.gmra.mrb[0].mxu0 %v1033
        %v1137 = vpop.f32.mrb[0].mxu0
        %v1138 = vadd.f32 0.0, %v1137
        %v1139 = vpop.f32.mrb[0].mxu0
        %v1140 = vpop.f32.mrb[0].mxu0
        %v1141 = vadd.f32 0.0, %v1140
        %v1142 = vpop.f32.mrb[0].mxu0
        %1143 = vmatprep.mubr.bf16.mxu0 0
        %1144 = vmatmul.mubr.bf16.gmra.mrb[0].mxu0 %v1034
        %v1145 = vpop.f32.mrb[0].mxu0
        %v1146 = vadd.f32 0.0, %v1145
        %v1147 = vpop.f32.mrb[0].mxu0
        %v1148 = vpop.f32.mrb[0].mxu0
        %v1149 = vadd.f32 0.0, %v1148
        %v1150 = vpop.f32.mrb[0].mxu0
        %1151 = vdwg.mxu0
        %v1152 = vadd.f32 %v991, %v1122
        %v1153 = vadd.f32 %v992, %v1125
        %v1154 = vadd.f32 %v993, %v1130
        %v1155 = vadd.f32 %v994, %v1133
        %v1156 = vadd.f32 %v995, %v1138
        %v1157 = vadd.f32 %v996, %v1141
        %v1158 = vadd.f32 %v997, %v1146
        %v1159 = vadd.f32 %v998, %v1149
        %v1161 = vrot.slane %v236, 5
        %v1162 = vrot.slane %v1161, 4
        %v1163 = vrot.slane %v237, 5
        %v1164 = vsel %vm664, %v1162, %v1163
        %s1165 = scalar_lea.vmem %s1, 320
        %v1166 = vld [vmem:[%s1165] sm:$0xf]
        %v1167 = vld [vmem:[%s1165 + $0x4] sm:$0xf]
        %v1168 = vld [vmem:[%s1165 + $0x8] sm:$0xf]
        %v1169 = vld [vmem:[%s1165 + $0xc] sm:$0xf]
        %v1170 = vld [vmem:[%s1165 + $0x10] sm:$0xf]
        %v1171 = vld [vmem:[%s1165 + $0x14] sm:$0xf]
        %v1172 = vld [vmem:[%s1165 + $0x18] sm:$0xf]
        %v1173 = vld [vmem:[%s1165 + $0x1c] sm:$0xf]
        %v1174 = vld [vmem:[%s1165 + $0x20] sm:$0xf]
        %v1175 = vld [vmem:[%s1165 + $0x24] sm:$0xf]
        %v1176 = vld [vmem:[%s1165 + $0x28] sm:$0xf]
        %v1177 = vld [vmem:[%s1165 + $0x2c] sm:$0xf]
        %v1178 = vld [vmem:[%s1165 + $0x30] sm:$0xf]
        %v1179 = vld [vmem:[%s1165 + $0x34] sm:$0xf]
        %v1180 = vld [vmem:[%s1165 + $0x38] sm:$0xf]
        %v1181 = vld [vmem:[%s1165 + $0x3c] sm:$0xf]
        %v1182 = vunpack.c.l.b16 %v1164
        %v1183 = vpack.c.b16 %v716, %v715
        %v1184 = vpack.c.b16 %v718, %v717
        %v1185 = vpack.c.b16 %v720, %v719
        %v1186 = vpack.c.b16 %v1182, %v721
        %v1207 = vunpack.c.l.b16 %v1166
        %v1208 = vunpack.c.l.b16 %v1167
        %v1209 = vunpack.c.l.b16 %v1168
        %v1210 = vunpack.c.l.b16 %v1169
        %v1211 = vunpack.c.l.b16 %v1170
        %v1212 = vunpack.c.l.b16 %v1171
        %v1213 = vunpack.c.l.b16 %v1172
        %v1214 = vunpack.c.l.b16 %v1173
        %v1215 = vunpack.c.l.b16 %v1174
        %v1216 = vunpack.c.l.b16 %v1175
        %v1217 = vunpack.c.l.b16 %v1176
        %v1218 = vunpack.c.l.b16 %v1177
        %v1219 = vunpack.c.l.b16 %v1178
        %v1220 = vunpack.c.l.b16 %v1179
        %v1221 = vunpack.c.l.b16 %v1180
        %v1222 = vunpack.c.l.b16 %v1181
        %v1223 = vpack.c.b16 %v1208, %v1207
        %v1224 = vpack.c.b16 %v1210, %v1209
        %v1225 = vpack.c.b16 %v1212, %v1211
        %v1226 = vpack.c.b16 %v1214, %v1213
        %v1227 = vpack.c.b16 %v1216, %v1215
        %v1228 = vpack.c.b16 %v1218, %v1217
        %v1229 = vpack.c.b16 %v1220, %v1219
        %v1230 = vpack.c.b16 %v1222, %v1221
        %1239 = vmatprep.subr.bf16.mxu0 0
        %1240 = vmatpush1.bf16.msra.mxu0 %v1223
        %1241 = vmatprep.subr.bf16.mxu0 0
        %1242 = vmatpush1.bf16.msra.mxu0 %v1224
        %1243 = vmatprep.subr.bf16.mxu0 0
        %1244 = vmatpush1.bf16.msra.mxu0 %v1225
        %1245 = vmatprep.subr.bf16.mxu0 0
        %1246 = vmatpush1.bf16.msra.mxu0 %v1226
        %1247 = vmatprep.subr.bf16.mxu0 0
        %1248 = vmatpush1.bf16.msra.mxu0 %v1227
        %1249 = vmatprep.subr.bf16.mxu0 0
        %1250 = vmatpush1.bf16.msra.mxu0 %v1228
        %1251 = vmatprep.subr.bf16.mxu0 0
        %1252 = vmatpush1.bf16.msra.mxu0 %v1229
        %1253 = vmatprep.subr.bf16.mxu0 0
        %1254 = vmatpush1.bf16.msra.mxu0 %v1230
        %1255 = vmatprep.subr.bf16.mxu0 0
        %1256 = vmatpush1.bf16.msra.mxu0 0
        %1257 = vmatprep.subr.bf16.mxu0 0
        %1258 = vmatpush1.bf16.msra.mxu0 0
        %1259 = vmatprep.subr.bf16.mxu0 0
        %1260 = vmatpush1.bf16.msra.mxu0 0
        %1261 = vmatprep.subr.bf16.mxu0 0
        %1262 = vmatpush1.bf16.msra.mxu0 0
        %1263 = vmatprep.subr.bf16.mxu0 0
        %1264 = vmatpush1.bf16.msra.mxu0 0
        %1265 = vmatprep.subr.bf16.mxu0 0
        %1266 = vmatpush1.bf16.msra.mxu0 0
        %1267 = vmatprep.subr.bf16.mxu0 0
        %1268 = vmatpush1.bf16.msra.mxu0 0
        %1269 = vmatprep.subr.bf16.mxu0 0
        %1270 = vmatpush1.bf16.msra.mxu0 0
        %1271 = vmatprep.mubr.bf16.mxu0 0
        %1272 = vmatmul.mubr.bf16.gmra.mrb[0].mxu0 %v1183
        %v1273 = vpop.f32.mrb[0].mxu0
        %v1274 = vadd.f32 0.0, %v1273
        %v1275 = vpop.f32.mrb[0].mxu0
        %v1276 = vpop.f32.mrb[0].mxu0
        %v1277 = vadd.f32 0.0, %v1276
        %v1278 = vpop.f32.mrb[0].mxu0
        %1279 = vmatprep.mubr.bf16.mxu0 0
        %1280 = vmatmul.mubr.bf16.gmra.mrb[0].mxu0 %v1184
        %v1281 = vpop.f32.mrb[0].mxu0
        %v1282 = vadd.f32 0.0, %v1281
        %v1283 = vpop.f32.mrb[0].mxu0
        %v1284 = vpop.f32.mrb[0].mxu0
        %v1285 = vadd.f32 0.0, %v1284
        %v1286 = vpop.f32.mrb[0].mxu0
        %1287 = vmatprep.mubr.bf16.mxu0 0
        %1288 = vmatmul.mubr.bf16.gmra.mrb[0].mxu0 %v1185
        %v1289 = vpop.f32.mrb[0].mxu0
        %v1290 = vadd.f32 0.0, %v1289
        %v1291 = vpop.f32.mrb[0].mxu0
        %v1292 = vpop.f32.mrb[0].mxu0
        %v1293 = vadd.f32 0.0, %v1292
        %v1294 = vpop.f32.mrb[0].mxu0
        %1295 = vmatprep.mubr.bf16.mxu0 0
        %1296 = vmatmul.mubr.bf16.gmra.mrb[0].mxu0 %v1186
        %v1297 = vpop.f32.mrb[0].mxu0
        %v1298 = vadd.f32 0.0, %v1297
        %v1299 = vpop.f32.mrb[0].mxu0
        %v1300 = vpop.f32.mrb[0].mxu0
        %v1301 = vadd.f32 0.0, %v1300
        %v1302 = vpop.f32.mrb[0].mxu0
        %1303 = vdwg.mxu0
        %v1304 = vadd.f32 %v1152, %v1274
        %v1305 = vadd.f32 %v1153, %v1277
        %v1306 = vadd.f32 %v1154, %v1282
        %v1307 = vadd.f32 %v1155, %v1285
        %v1308 = vadd.f32 %v1156, %v1290
        %v1309 = vadd.f32 %v1157, %v1293
        %v1310 = vadd.f32 %v1158, %v1298
        %v1311 = vadd.f32 %v1159, %v1301
        %s1312 = scalar_lea.vmem %s1, 384
        %v1313 = vld [vmem:[%s1312] sm:$0xf]
        %v1314 = vld [vmem:[%s1312 + $0x4] sm:$0xf]
        %v1315 = vld [vmem:[%s1312 + $0x8] sm:$0xf]
        %v1316 = vld [vmem:[%s1312 + $0xc] sm:$0xf]
        %v1317 = vld [vmem:[%s1312 + $0x10] sm:$0xf]
        %v1318 = vld [vmem:[%s1312 + $0x14] sm:$0xf]
        %v1319 = vld [vmem:[%s1312 + $0x18] sm:$0xf]
        %v1320 = vld [vmem:[%s1312 + $0x1c] sm:$0xf]
        %v1321 = vld [vmem:[%s1312 + $0x20] sm:$0xf]
        %v1322 = vld [vmem:[%s1312 + $0x24] sm:$0xf]
        %v1323 = vld [vmem:[%s1312 + $0x28] sm:$0xf]
        %v1324 = vld [vmem:[%s1312 + $0x2c] sm:$0xf]
        %v1325 = vld [vmem:[%s1312 + $0x30] sm:$0xf]
        %v1326 = vld [vmem:[%s1312 + $0x34] sm:$0xf]
        %v1327 = vld [vmem:[%s1312 + $0x38] sm:$0xf]
        %v1328 = vld [vmem:[%s1312 + $0x3c] sm:$0xf]
        %v1330 = vunpack.c.l.b16 %v238
        %v1331 = vpack.c.b16 %v1330, %v869
        %v1349 = vunpack.c.l.b16 %v1313
        %v1350 = vunpack.c.l.b16 %v1314
        %v1351 = vunpack.c.l.b16 %v1315
        %v1352 = vunpack.c.l.b16 %v1316
        %v1353 = vunpack.c.l.b16 %v1317
        %v1354 = vunpack.c.l.b16 %v1318
        %v1355 = vunpack.c.l.b16 %v1319
        %v1356 = vunpack.c.l.b16 %v1320
        %v1357 = vunpack.c.l.b16 %v1321
        %v1358 = vunpack.c.l.b16 %v1322
        %v1359 = vunpack.c.l.b16 %v1323
        %v1360 = vunpack.c.l.b16 %v1324
        %v1361 = vunpack.c.l.b16 %v1325
        %v1362 = vunpack.c.l.b16 %v1326
        %v1363 = vunpack.c.l.b16 %v1327
        %v1364 = vunpack.c.l.b16 %v1328
        %v1365 = vpack.c.b16 %v1350, %v1349
        %v1366 = vpack.c.b16 %v1352, %v1351
        %v1367 = vpack.c.b16 %v1354, %v1353
        %v1368 = vpack.c.b16 %v1356, %v1355
        %v1369 = vpack.c.b16 %v1358, %v1357
        %v1370 = vpack.c.b16 %v1360, %v1359
        %v1371 = vpack.c.b16 %v1362, %v1361
        %v1372 = vpack.c.b16 %v1364, %v1363
        %1381 = vmatprep.subr.bf16.mxu0 0
        %1382 = vmatpush1.bf16.msra.mxu0 %v1365
        %1383 = vmatprep.subr.bf16.mxu0 0
        %1384 = vmatpush1.bf16.msra.mxu0 %v1366
        %1385 = vmatprep.subr.bf16.mxu0 0
        %1386 = vmatpush1.bf16.msra.mxu0 %v1367
        %1387 = vmatprep.subr.bf16.mxu0 0
        %1388 = vmatpush1.bf16.msra.mxu0 %v1368
        %1389 = vmatprep.subr.bf16.mxu0 0
        %1390 = vmatpush1.bf16.msra.mxu0 %v1369
        %1391 = vmatprep.subr.bf16.mxu0 0
        %1392 = vmatpush1.bf16.msra.mxu0 %v1370
        %1393 = vmatprep.subr.bf16.mxu0 0
        %1394 = vmatpush1.bf16.msra.mxu0 %v1371
        %1395 = vmatprep.subr.bf16.mxu0 0
        %1396 = vmatpush1.bf16.msra.mxu0 %v1372
        %1397 = vmatprep.subr.bf16.mxu0 0
        %1398 = vmatpush1.bf16.msra.mxu0 0
        %1399 = vmatprep.subr.bf16.mxu0 0
        %1400 = vmatpush1.bf16.msra.mxu0 0
        %1401 = vmatprep.subr.bf16.mxu0 0
        %1402 = vmatpush1.bf16.msra.mxu0 0
        %1403 = vmatprep.subr.bf16.mxu0 0
        %1404 = vmatpush1.bf16.msra.mxu0 0
        %1405 = vmatprep.subr.bf16.mxu0 0
        %1406 = vmatpush1.bf16.msra.mxu0 0
        %1407 = vmatprep.subr.bf16.mxu0 0
        %1408 = vmatpush1.bf16.msra.mxu0 0
        %1409 = vmatprep.subr.bf16.mxu0 0
        %1410 = vmatpush1.bf16.msra.mxu0 0
        %1411 = vmatprep.subr.bf16.mxu0 0
        %1412 = vmatpush1.bf16.msra.mxu0 0
        %1413 = vmatprep.mubr.bf16.mxu0 0
        %1414 = vmatmul.mubr.bf16.gmra.mrb[0].mxu0 %v534
        %v1415 = vpop.f32.mrb[0].mxu0
        %v1416 = vadd.f32 0.0, %v1415
        %v1417 = vpop.f32.mrb[0].mxu0
        %v1418 = vpop.f32.mrb[0].mxu0
        %v1419 = vadd.f32 0.0, %v1418
        %v1420 = vpop.f32.mrb[0].mxu0
        %1421 = vmatprep.mubr.bf16.mxu0 0
        %1422 = vmatmul.mubr.bf16.gmra.mrb[0].mxu0 %v535
        %v1423 = vpop.f32.mrb[0].mxu0
        %v1424 = vadd.f32 0.0, %v1423
        %v1425 = vpop.f32.mrb[0].mxu0
        %v1426 = vpop.f32.mrb[0].mxu0
        %v1427 = vadd.f32 0.0, %v1426
        %v1428 = vpop.f32.mrb[0].mxu0
        %1429 = vmatprep.mubr.bf16.mxu0 0
        %1430 = vmatmul.mubr.bf16.gmra.mrb[0].mxu0 %v536
        %v1431 = vpop.f32.mrb[0].mxu0
        %v1432 = vadd.f32 0.0, %v1431
        %v1433 = vpop.f32.mrb[0].mxu0
        %v1434 = vpop.f32.mrb[0].mxu0
        %v1435 = vadd.f32 0.0, %v1434
        %v1436 = vpop.f32.mrb[0].mxu0
        %1437 = vmatprep.mubr.bf16.mxu0 0
        %1438 = vmatmul.mubr.bf16.gmra.mrb[0].mxu0 %v1331
        %v1439 = vpop.f32.mrb[0].mxu0
        %v1440 = vadd.f32 0.0, %v1439
        %v1441 = vpop.f32.mrb[0].mxu0
        %v1442 = vpop.f32.mrb[0].mxu0
        %v1443 = vadd.f32 0.0, %v1442
        %v1444 = vpop.f32.mrb[0].mxu0
        %1445 = vdwg.mxu0
        %v1446 = vadd.f32 %v1304, %v1416
        %v1447 = vadd.f32 %v1305, %v1419
        %v1448 = vadd.f32 %v1306, %v1424
        %v1449 = vadd.f32 %v1307, %v1427
        %v1450 = vadd.f32 %v1308, %v1432
        %v1451 = vadd.f32 %v1309, %v1435
        %v1452 = vadd.f32 %v1310, %v1440
        %v1453 = vadd.f32 %v1311, %v1443
        %v1455 = vshrl.u32 %v238, 16
        %v1457 = vrot.slane %v1455, 4
        %v1458 = vshll.u32 %v238, 16
        %v1460 = vrot.slane %v1458, 5
        %v1461 = vor.u32 %v1457, %v1460
        %v1462 = vrot.slane %v1461, 4
        %v1464 = vshll.u32 %v239, 16
        %v1466 = vrot.slane %v1464, 5
        %v1467 = vsel %vm258, %v1462, %v1466
        %s1468 = scalar_lea.vmem %s1, 448
        %v1469 = vld [vmem:[%s1468] sm:$0xf]
        %v1470 = vld [vmem:[%s1468 + $0x4] sm:$0xf]
        %v1471 = vld [vmem:[%s1468 + $0x8] sm:$0xf]
        %v1472 = vld [vmem:[%s1468 + $0xc] sm:$0xf]
        %v1473 = vld [vmem:[%s1468 + $0x10] sm:$0xf]
        %v1474 = vld [vmem:[%s1468 + $0x14] sm:$0xf]
        %v1475 = vld [vmem:[%s1468 + $0x18] sm:$0xf]
        %v1476 = vld [vmem:[%s1468 + $0x1c] sm:$0xf]
        %v1477 = vld [vmem:[%s1468 + $0x20] sm:$0xf]
        %v1478 = vld [vmem:[%s1468 + $0x24] sm:$0xf]
        %v1479 = vld [vmem:[%s1468 + $0x28] sm:$0xf]
        %v1480 = vld [vmem:[%s1468 + $0x2c] sm:$0xf]
        %v1481 = vld [vmem:[%s1468 + $0x30] sm:$0xf]
        %v1482 = vld [vmem:[%s1468 + $0x34] sm:$0xf]
        %v1483 = vld [vmem:[%s1468 + $0x38] sm:$0xf]
        %v1484 = vld [vmem:[%s1468 + $0x3c] sm:$0xf]
        %v1485 = vunpack.c.l.b16 %v1467
        %v1486 = vpack.c.b16 %v1485, %v1030
        %v1504 = vunpack.c.l.b16 %v1469
        %v1505 = vunpack.c.l.b16 %v1470
        %v1506 = vunpack.c.l.b16 %v1471
        %v1507 = vunpack.c.l.b16 %v1472
        %v1508 = vunpack.c.l.b16 %v1473
        %v1509 = vunpack.c.l.b16 %v1474
        %v1510 = vunpack.c.l.b16 %v1475
        %v1511 = vunpack.c.l.b16 %v1476
        %v1512 = vunpack.c.l.b16 %v1477
        %v1513 = vunpack.c.l.b16 %v1478
        %v1514 = vunpack.c.l.b16 %v1479
        %v1515 = vunpack.c.l.b16 %v1480
        %v1516 = vunpack.c.l.b16 %v1481
        %v1517 = vunpack.c.l.b16 %v1482
        %v1518 = vunpack.c.l.b16 %v1483
        %v1519 = vunpack.c.l.b16 %v1484
        %v1520 = vpack.c.b16 %v1505, %v1504
        %v1521 = vpack.c.b16 %v1507, %v1506
        %v1522 = vpack.c.b16 %v1509, %v1508
        %v1523 = vpack.c.b16 %v1511, %v1510
        %v1524 = vpack.c.b16 %v1513, %v1512
        %v1525 = vpack.c.b16 %v1515, %v1514
        %v1526 = vpack.c.b16 %v1517, %v1516
        %v1527 = vpack.c.b16 %v1519, %v1518
        %1536 = vmatprep.subr.bf16.mxu0 0
        %1537 = vmatpush1.bf16.msra.mxu0 %v1520
        %1538 = vmatprep.subr.bf16.mxu0 0
        %1539 = vmatpush1.bf16.msra.mxu0 %v1521
        %1540 = vmatprep.subr.bf16.mxu0 0
        %1541 = vmatpush1.bf16.msra.mxu0 %v1522
        %1542 = vmatprep.subr.bf16.mxu0 0
        %1543 = vmatpush1.bf16.msra.mxu0 %v1523
        %1544 = vmatprep.subr.bf16.mxu0 0
        %1545 = vmatpush1.bf16.msra.mxu0 %v1524
        %1546 = vmatprep.subr.bf16.mxu0 0
        %1547 = vmatpush1.bf16.msra.mxu0 %v1525
        %1548 = vmatprep.subr.bf16.mxu0 0
        %1549 = vmatpush1.bf16.msra.mxu0 %v1526
        %1550 = vmatprep.subr.bf16.mxu0 0
        %1551 = vmatpush1.bf16.msra.mxu0 %v1527
        %1552 = vmatprep.subr.bf16.mxu0 0
        %1553 = vmatpush1.bf16.msra.mxu0 0
        %1554 = vmatprep.subr.bf16.mxu0 0
        %1555 = vmatpush1.bf16.msra.mxu0 0
        %1556 = vmatprep.subr.bf16.mxu0 0
        %1557 = vmatpush1.bf16.msra.mxu0 0
        %1558 = vmatprep.subr.bf16.mxu0 0
        %1559 = vmatpush1.bf16.msra.mxu0 0
        %1560 = vmatprep.subr.bf16.mxu0 0
        %1561 = vmatpush1.bf16.msra.mxu0 0
        %1562 = vmatprep.subr.bf16.mxu0 0
        %1563 = vmatpush1.bf16.msra.mxu0 0
        %1564 = vmatprep.subr.bf16.mxu0 0
        %1565 = vmatpush1.bf16.msra.mxu0 0
        %1566 = vmatprep.subr.bf16.mxu0 0
        %1567 = vmatpush1.bf16.msra.mxu0 0
        %1568 = vmatprep.mubr.bf16.mxu0 0
        %1569 = vmatmul.mubr.bf16.gmra.mrb[0].mxu0 %v397
        %v1570 = vpop.f32.mrb[0].mxu0
        %v1571 = vadd.f32 0.0, %v1570
        %v1572 = vpop.f32.mrb[0].mxu0
        %v1573 = vpop.f32.mrb[0].mxu0
        %v1574 = vadd.f32 0.0, %v1573
        %v1575 = vpop.f32.mrb[0].mxu0
        %1576 = vmatprep.mubr.bf16.mxu0 0
        %1577 = vmatmul.mubr.bf16.gmra.mrb[0].mxu0 %v398
        %v1578 = vpop.f32.mrb[0].mxu0
        %v1579 = vadd.f32 0.0, %v1578
        %v1580 = vpop.f32.mrb[0].mxu0
        %v1581 = vpop.f32.mrb[0].mxu0
        %v1582 = vadd.f32 0.0, %v1581
        %v1583 = vpop.f32.mrb[0].mxu0
        %1584 = vmatprep.mubr.bf16.mxu0 0
        %1585 = vmatmul.mubr.bf16.gmra.mrb[0].mxu0 %v399
        %v1586 = vpop.f32.mrb[0].mxu0
        %v1587 = vadd.f32 0.0, %v1586
        %v1588 = vpop.f32.mrb[0].mxu0
        %v1589 = vpop.f32.mrb[0].mxu0
        %v1590 = vadd.f32 0.0, %v1589
        %v1591 = vpop.f32.mrb[0].mxu0
        %1592 = vmatprep.mubr.bf16.mxu0 0
        %1593 = vmatmul.mubr.bf16.gmra.mrb[0].mxu0 %v1486
        %v1594 = vpop.f32.mrb[0].mxu0
        %v1595 = vadd.f32 0.0, %v1594
        %v1596 = vpop.f32.mrb[0].mxu0
        %v1597 = vpop.f32.mrb[0].mxu0
        %v1598 = vadd.f32 0.0, %v1597
        %v1599 = vpop.f32.mrb[0].mxu0
        %1600 = vdwg.mxu0
        %v1601 = vadd.f32 %v1446, %v1571
        %v1602 = vadd.f32 %v1447, %v1574
        %v1603 = vadd.f32 %v1448, %v1579
        %v1604 = vadd.f32 %v1449, %v1582
        %v1605 = vadd.f32 %v1450, %v1587
        %v1606 = vadd.f32 %v1451, %v1590
        %v1607 = vadd.f32 %v1452, %v1595
        %v1608 = vadd.f32 %v1453, %v1598
        %v1610 = vrot.slane %v238, 5
        %v1611 = vrot.slane %v1610, 4
        %v1612 = vrot.slane %v239, 5
        %v1613 = vsel %vm664, %v1611, %v1612
        %s1614 = scalar_lea.vmem %s1, 512
        %v1615 = vld [vmem:[%s1614] sm:$0xf]
        %v1616 = vld [vmem:[%s1614 + $0x4] sm:$0xf]
        %v1617 = vld [vmem:[%s1614 + $0x8] sm:$0xf]
        %v1618 = vld [vmem:[%s1614 + $0xc] sm:$0xf]
        %v1619 = vld [vmem:[%s1614 + $0x10] sm:$0xf]
        %v1620 = vld [vmem:[%s1614 + $0x14] sm:$0xf]
        %v1621 = vld [vmem:[%s1614 + $0x18] sm:$0xf]
        %v1622 = vld [vmem:[%s1614 + $0x1c] sm:$0xf]
        %v1623 = vld [vmem:[%s1614 + $0x20] sm:$0xf]
        %v1624 = vld [vmem:[%s1614 + $0x24] sm:$0xf]
        %v1625 = vld [vmem:[%s1614 + $0x28] sm:$0xf]
        %v1626 = vld [vmem:[%s1614 + $0x2c] sm:$0xf]
        %v1627 = vld [vmem:[%s1614 + $0x30] sm:$0xf]
        %v1628 = vld [vmem:[%s1614 + $0x34] sm:$0xf]
        %v1629 = vld [vmem:[%s1614 + $0x38] sm:$0xf]
        %v1630 = vld [vmem:[%s1614 + $0x3c] sm:$0xf]
        %v1631 = vunpack.c.l.b16 %v1613
        %v1632 = vpack.c.b16 %v1631, %v1182
        %v1650 = vunpack.c.l.b16 %v1615
        %v1651 = vunpack.c.l.b16 %v1616
        %v1652 = vunpack.c.l.b16 %v1617
        %v1653 = vunpack.c.l.b16 %v1618
        %v1654 = vunpack.c.l.b16 %v1619
        %v1655 = vunpack.c.l.b16 %v1620
        %v1656 = vunpack.c.l.b16 %v1621
        %v1657 = vunpack.c.l.b16 %v1622
        %v1658 = vunpack.c.l.b16 %v1623
        %v1659 = vunpack.c.l.b16 %v1624
        %v1660 = vunpack.c.l.b16 %v1625
        %v1661 = vunpack.c.l.b16 %v1626
        %v1662 = vunpack.c.l.b16 %v1627
        %v1663 = vunpack.c.l.b16 %v1628
        %v1664 = vunpack.c.l.b16 %v1629
        %v1665 = vunpack.c.l.b16 %v1630
        %v1666 = vpack.c.b16 %v1651, %v1650
        %v1667 = vpack.c.b16 %v1653, %v1652
        %v1668 = vpack.c.b16 %v1655, %v1654
        %v1669 = vpack.c.b16 %v1657, %v1656
        %v1670 = vpack.c.b16 %v1659, %v1658
        %v1671 = vpack.c.b16 %v1661, %v1660
        %v1672 = vpack.c.b16 %v1663, %v1662
        %v1673 = vpack.c.b16 %v1665, %v1664
        %1682 = vmatprep.subr.bf16.mxu0 0
        %1683 = vmatpush1.bf16.msra.mxu0 %v1666
        %1684 = vmatprep.subr.bf16.mxu0 0
        %1685 = vmatpush1.bf16.msra.mxu0 %v1667
        %1686 = vmatprep.subr.bf16.mxu0 0
        %1687 = vmatpush1.bf16.msra.mxu0 %v1668
        %1688 = vmatprep.subr.bf16.mxu0 0
        %1689 = vmatpush1.bf16.msra.mxu0 %v1669
        %1690 = vmatprep.subr.bf16.mxu0 0
        %1691 = vmatpush1.bf16.msra.mxu0 %v1670
        %1692 = vmatprep.subr.bf16.mxu0 0
        %1693 = vmatpush1.bf16.msra.mxu0 %v1671
        %1694 = vmatprep.subr.bf16.mxu0 0
        %1695 = vmatpush1.bf16.msra.mxu0 %v1672
        %1696 = vmatprep.subr.bf16.mxu0 0
        %1697 = vmatpush1.bf16.msra.mxu0 %v1673
        %1698 = vmatprep.subr.bf16.mxu0 0
        %1699 = vmatpush1.bf16.msra.mxu0 0
        %1700 = vmatprep.subr.bf16.mxu0 0
        %1701 = vmatpush1.bf16.msra.mxu0 0
        %1702 = vmatprep.subr.bf16.mxu0 0
        %1703 = vmatpush1.bf16.msra.mxu0 0
        %1704 = vmatprep.subr.bf16.mxu0 0
        %1705 = vmatpush1.bf16.msra.mxu0 0
        %1706 = vmatprep.subr.bf16.mxu0 0
        %1707 = vmatpush1.bf16.msra.mxu0 0
        %1708 = vmatprep.subr.bf16.mxu0 0
        %1709 = vmatpush1.bf16.msra.mxu0 0
        %1710 = vmatprep.subr.bf16.mxu0 0
        %1711 = vmatpush1.bf16.msra.mxu0 0
        %1712 = vmatprep.subr.bf16.mxu0 0
        %1713 = vmatpush1.bf16.msra.mxu0 0
        %1714 = vmatprep.mubr.bf16.mxu0 0
        %1715 = vmatmul.mubr.bf16.gmra.mrb[0].mxu0 %v723
        %v1716 = vpop.f32.mrb[0].mxu0
        %v1717 = vadd.f32 0.0, %v1716
        %v1718 = vpop.f32.mrb[0].mxu0
        %v1719 = vpop.f32.mrb[0].mxu0
        %v1720 = vadd.f32 0.0, %v1719
        %v1721 = vpop.f32.mrb[0].mxu0
        %1722 = vmatprep.mubr.bf16.mxu0 0
        %1723 = vmatmul.mubr.bf16.gmra.mrb[0].mxu0 %v724
        %v1724 = vpop.f32.mrb[0].mxu0
        %v1725 = vadd.f32 0.0, %v1724
        %v1726 = vpop.f32.mrb[0].mxu0
        %v1727 = vpop.f32.mrb[0].mxu0
        %v1728 = vadd.f32 0.0, %v1727
        %v1729 = vpop.f32.mrb[0].mxu0
        %1730 = vmatprep.mubr.bf16.mxu0 0
        %1731 = vmatmul.mubr.bf16.gmra.mrb[0].mxu0 %v725
        %v1732 = vpop.f32.mrb[0].mxu0
        %v1733 = vadd.f32 0.0, %v1732
        %v1734 = vpop.f32.mrb[0].mxu0
        %v1735 = vpop.f32.mrb[0].mxu0
        %v1736 = vadd.f32 0.0, %v1735
        %v1737 = vpop.f32.mrb[0].mxu0
        %1738 = vmatprep.mubr.bf16.mxu0 0
        %1739 = vmatmul.mubr.bf16.gmra.mrb[0].mxu0 %v1632
        %v1740 = vpop.f32.mrb[0].mxu0
        %v1741 = vadd.f32 0.0, %v1740
        %v1742 = vpop.f32.mrb[0].mxu0
        %v1743 = vpop.f32.mrb[0].mxu0
        %v1744 = vadd.f32 0.0, %v1743
        %v1745 = vpop.f32.mrb[0].mxu0
        %1746 = vdwg.mxu0
        %v1747 = vadd.f32 %v1601, %v1717
        %v1748 = vadd.f32 %v1602, %v1720
        %v1749 = vadd.f32 %v1603, %v1725
        %v1750 = vadd.f32 %v1604, %v1728
        %v1751 = vadd.f32 %v1605, %v1733
        %v1752 = vadd.f32 %v1606, %v1736
        %v1753 = vadd.f32 %v1607, %v1741
        %v1754 = vadd.f32 %v1608, %v1744
        %v1755 = vld [vmem:[%s2] sm:$0x1]
        %v1757 = vlaneseq
        %v1758 = vshrl.u32 %v1757, 7
        %v1759 = vsub.s32 0, %v1758
        %v1760 = vrot.slane %v1755, %v1759
        %v1762 = vadd.f32 %v1747, %v1760
        %v1763 = vadd.f32 %v1748, %v1760
        %v1764 = vadd.f32 %v1749, %v1760
        %v1765 = vadd.f32 %v1750, %v1760
        %v1766 = vadd.f32 %v1751, %v1760
        %v1767 = vadd.f32 %v1752, %v1760
        %v1768 = vadd.f32 %v1753, %v1760
        %v1769 = vadd.f32 %v1754, %v1760
        %v1770 = vmin.f32 %v1762, 20.0
        %v1771 = vmin.f32 %v1763, 20.0
        %v1772 = vmin.f32 %v1764, 20.0
        %v1773 = vmin.f32 %v1765, 20.0
        %v1774 = vmin.f32 %v1766, 20.0
        %v1775 = vmin.f32 %v1767, 20.0
        %v1776 = vmin.f32 %v1768, 20.0
        %v1777 = vmin.f32 %v1769, 20.0
        %v1778 = vmul.f32 %v1770, 1.442695
        %v1779 = vpow.pop %v1778
        %v1780 = vmul.f32 %v1771, 1.442695
        %v1781 = vpow.pop %v1780
        %v1782 = vmul.f32 %v1772, 1.442695
        %v1783 = vpow.pop %v1782
        %v1784 = vmul.f32 %v1773, 1.442695
        %v1785 = vpow.pop %v1784
        %v1786 = vmul.f32 %v1774, 1.442695
        %v1787 = vpow.pop %v1786
        %v1788 = vmul.f32 %v1775, 1.442695
        %v1789 = vpow.pop %v1788
        %v1790 = vmul.f32 %v1776, 1.442695
        %v1791 = vpow.pop %v1790
        %v1792 = vmul.f32 %v1777, 1.442695
        %v1793 = vpow.pop %v1792
        %v1794 = vadd.f32 %v1779, 2.0
        %v1795 = vadd.f32 %v1781, 2.0
        %v1796 = vadd.f32 %v1783, 2.0
        %v1797 = vadd.f32 %v1785, 2.0
        %v1798 = vadd.f32 %v1787, 2.0
        %v1799 = vadd.f32 %v1789, 2.0
        %v1800 = vadd.f32 %v1791, 2.0
        %v1801 = vadd.f32 %v1793, 2.0
        %v1802 = vmul.f32 %v1779, %v1794
        %v1803 = vmul.f32 %v1781, %v1795
        %v1804 = vmul.f32 %v1783, %v1796
        %v1805 = vmul.f32 %v1785, %v1797
        %v1806 = vmul.f32 %v1787, %v1798
        %v1807 = vmul.f32 %v1789, %v1799
        %v1808 = vmul.f32 %v1791, %v1800
        %v1809 = vmul.f32 %v1793, %v1801
        %v1810 = vmul.f32 %v1762, %v1802
        %v1811 = vmul.f32 %v1763, %v1803
        %v1812 = vmul.f32 %v1764, %v1804
        %v1813 = vmul.f32 %v1765, %v1805
        %v1814 = vmul.f32 %v1766, %v1806
        %v1815 = vmul.f32 %v1767, %v1807
        %v1816 = vmul.f32 %v1768, %v1808
        %v1817 = vmul.f32 %v1769, %v1809
        %v1818 = vadd.f32 %v1802, 2.0
        %v1819 = vadd.f32 %v1803, 2.0
        %v1820 = vadd.f32 %v1804, 2.0
        %v1821 = vadd.f32 %v1805, 2.0
        %v1822 = vadd.f32 %v1806, 2.0
        %v1823 = vadd.f32 %v1807, 2.0
        %v1824 = vadd.f32 %v1808, 2.0
        %v1825 = vadd.f32 %v1809, 2.0
        %v1826 = vrcp.pop %v1818
        %v1827 = vrcp.pop %v1819
        %v1828 = vrcp.pop %v1820
        %v1829 = vrcp.pop %v1821
        %v1830 = vrcp.pop %v1822
        %v1831 = vrcp.pop %v1823
        %v1832 = vrcp.pop %v1824
        %v1833 = vrcp.pop %v1825
        %v1834 = vmul.f32 %v1810, %v1826
        %v1835 = vmul.f32 %v1811, %v1827
        %v1836 = vmul.f32 %v1812, %v1828
        %v1837 = vmul.f32 %v1813, %v1829
        %v1838 = vmul.f32 %v1814, %v1830
        %v1839 = vmul.f32 %v1815, %v1831
        %v1840 = vmul.f32 %v1816, %v1832
        %v1841 = vmul.f32 %v1817, %v1833
        %vm1842 = vcmp.gt.f32.partialorder %v1762, 20.0
        %vm1843 = vcmp.gt.f32.partialorder %v1763, 20.0
        %vm1844 = vcmp.gt.f32.partialorder %v1764, 20.0
        %vm1845 = vcmp.gt.f32.partialorder %v1765, 20.0
        %vm1846 = vcmp.gt.f32.partialorder %v1766, 20.0
        %vm1847 = vcmp.gt.f32.partialorder %v1767, 20.0
        %vm1848 = vcmp.gt.f32.partialorder %v1768, 20.0
        %vm1849 = vcmp.gt.f32.partialorder %v1769, 20.0
        %v1850 = vsel %vm1842, %v1762, %v1834
        %v1851 = vsel %vm1843, %v1763, %v1835
        %v1852 = vsel %vm1844, %v1764, %v1836
        %v1853 = vsel %vm1845, %v1765, %v1837
        %v1854 = vsel %vm1846, %v1766, %v1838
        %v1855 = vsel %vm1847, %v1767, %v1839
        %v1856 = vsel %vm1848, %v1768, %v1840
        %v1857 = vsel %vm1849, %v1769, %v1841
        %v1858 = vld [vmem:[%s216] sm:$0xff]
        %v1859 = vld [vmem:[%s216 + $0x8] sm:$0xff]
        %v1860 = vld [vmem:[%s216 + $0x10] sm:$0xff]
        %v1861 = vld [vmem:[%s216 + $0x18] sm:$0xff]
        %v1862 = vld [vmem:[%s216 + $0x20] sm:$0xff]
        %v1863 = vld [vmem:[%s216 + $0x28] sm:$0xff]
        %v1864 = vld [vmem:[%s216 + $0x30] sm:$0xff]
        %v1865 = vld [vmem:[%s216 + $0x38] sm:$0xff]
        %v1866 = vadd.f32 %v1850, %v1858
        %v1867 = vadd.f32 %v1851, %v1859
        %v1868 = vadd.f32 %v1852, %v1860
        %v1869 = vadd.f32 %v1853, %v1861
        %v1870 = vadd.f32 %v1854, %v1862
        %v1871 = vadd.f32 %v1855, %v1863
        %v1872 = vadd.f32 %v1856, %v1864
        %v1873 = vadd.f32 %v1857, %v1865
        %1874 = vst [vmem:[%s206] sm:$0xff] %v1866
        %1875 = vst [vmem:[%s206 + $0x8] sm:$0xff] %v1867
        %1876 = vst [vmem:[%s206 + $0x10] sm:$0xff] %v1868
        %1877 = vst [vmem:[%s206 + $0x18] sm:$0xff] %v1869
        %1878 = vst [vmem:[%s206 + $0x20] sm:$0xff] %v1870
        %1879 = vst [vmem:[%s206 + $0x28] sm:$0xff] %v1871
        %1880 = vst [vmem:[%s206 + $0x30] sm:$0xff] %v1872
        %1881 = vst [vmem:[%s206 + $0x38] sm:$0xff] %v1873
        %s1882 = sand.u32 %s120, 1
        %s1883 = scalar_lea.sflag [#allocation3], %s1882
        %s1884 = sand.u32 %s120, 1
        %s1885 = smul.addr %s1884, 64
        %s1886 = scalar_lea.vmem [#allocation2], %s1885
        // Predicated region
        $region37: #{res_down_conv_block.5} parent=35 // pred_check
          %p1887 = pneg %p130
        $region38: #{res_down_conv_block.5} parent=35 // pred_check_branch
          %1889 = sbr.rel (%p1887) target = $region40
        $region39: #{res_down_conv_block.5} parent=35 // pred_region
          %s1890 = smul.u32 8, %s18
          %s1892 = ssub.s32 1024, 1024
          %1893 = vsyncadd %s1883, %s1892
          %s1894 = smul.addr %s1890, 128
          %s1895 = scalar_lea.hbm %s4, %s1894
          %s1896 = sshll.u32 %s1886, 4
          %s1897 = int_to_ptr.vmem [resolvable:$true] %s1896
          %1902 = dma.vmem_to_hbm [thread:$0]  %s1897, 1024, %s1895, %s1883, 128, 128, 8
        $region40: #{res_down_conv_block.5} parent=35 // pred_fallthru
          _
      $region36: #{res_down_conv_block.5} parent=5 // pred_fallthru
        _
      %p1903 = scmp.le.s32.totalorder 2, %s13
      // Predicated region
      $region41: #{res_down_conv_block.5} parent=5 // pred_check
        %p1904 = pneg %p1903
      $region42: #{res_down_conv_block.5} parent=5 // pred_check_branch
        %1906 = sbr.rel (%p1904) target = $region44
      $region43: #{res_down_conv_block.5} parent=5 // pred_region
        %s1907 = ssub.s32 %s13, 2
        // Predicated region
        $region45: #{res_down_conv_block.5} parent=43 // pred_check
          %p1908 = pneg %p136
        $region46: #{res_down_conv_block.5} parent=43 // pred_check_branch
          %1910 = sbr.rel (%p1908) target = $region48
        $region47: #{res_down_conv_block.5} parent=43 // pred_region
          %s1911 = sand.u32 %s121, 1
          %s1912 = scalar_lea.sflag [#allocation3], %s1911
          %s1913 = sand.u32 %s121, 1
          %s1914 = smul.addr %s1913, 64
          %s1915 = scalar_lea.vmem [#allocation2], %s1914
          %1916 = dma.done %s1912, 1024
        $region48: #{res_down_conv_block.5} parent=43 // pred_fallthru
          _
      $region44: #{res_down_conv_block.5} parent=5 // pred_fallthru
        _
    $region6: #{res_down_conv_block.5} parent=1 // loop_footer
      %s17 = sadd.s32 1, %s13
    $region7: #{res_down_conv_block.5} parent=1 // loop_footer_branch
      %12 = sbr.rel target = $region3
    $region8: #{res_down_conv_block.5} parent=1 // loop_exit
      _
    %1917 = vsyncpa [#allocation3], 1
    %s1918 = scalar_lea.sflag [#allocation3], 1
    %1919 = vsyncpa %s1918, 1

</llo_original>
